<compile_context>
chip_gen: v7x
topology: tpu7x:2x2x1
jax: 0.10.0
libtpu: 0.0.40
codegen_flags: <defaults>
</compile_context>

<pallas_src>
from functools import partial

import numpy as np
import jax
import jax.numpy as jnp
from jax import lax
from jax.experimental import pallas as pl
from jax.experimental.pallas import tpu as pltpu


# ----------------------------- autoregressive masks ----------------------------

def mask_taps(K, mtype):
    """(kh, kw) taps kept by the PixelCNN mask (everything else is exactly zero)."""
    c = K // 2
    taps = []
    for kh in range(K):
        for kw in range(K):
            if kh < c or (kh == c and (kw < c or (mtype == "B" and kw == c))):
                taps.append((kh, kw))
    return taps


def causal_mask(K, mtype):
    """Full autoregressive mask in HWIO layout (Kh, Kw, 1, 1)."""
    m = np.zeros((K, K), np.float32)
    for kh, kw in mask_taps(K, mtype):
        m[kh, kw] = 1.0
    return jnp.asarray(m)[:, :, None, None]


# ------------------------------ parameter init ---------------------------------

def init_conv(key, K, cin, cout, mtype=None):
    """torch.nn.Conv2d-style uniform fan-in init, HWIO weights, mask baked in."""
    kw_, kb_ = jax.random.split(key)
    bound = 1.0 / float(np.sqrt(cin * K * K))
    w = jax.random.uniform(kw_, (K, K, cin, cout), jnp.float32, -bound, bound)
    b = jax.random.uniform(kb_, (cout,), jnp.float32, -bound, bound)
    if mtype is not None:
        w = w * causal_mask(K, mtype)   # equivalent to PyTorch's weight.data *= mask
    return w, b


def init_pixelcnn(key, num_input_c=1, num_inner_c=64, num_output_c=1,
                  num_masked_convs=4):
    keys = jax.random.split(key, 3 + 3 * num_masked_convs)
    it = iter(keys)
    params = {}
    # shallow features: MaskedConv2d(in, inner, 7, pad 3, 'A') + LeakyReLU(0.1)
    params["sf"] = init_conv(next(it), 7, num_input_c, num_inner_c, mtype="A")
    half = num_inner_c // 2
    blocks = []
    for _ in range(num_masked_convs):
        blocks.append({
            "a": init_conv(next(it), 1, num_inner_c, half),        # 1x1 + ReLU
            "b": init_conv(next(it), 3, half, half, mtype="B"),    # masked 3x3 'B' + ReLU
            "c": init_conv(next(it), 1, half, num_inner_c),        # 1x1 + ReLU, then +x
        })
    params["blocks"] = blocks
    # final features: 1x1 'B' (== plain 1x1) + LeakyReLU, 1x1 'B' + Sigmoid
    params["ff1"] = init_conv(next(it), 1, num_inner_c, num_inner_c, mtype="B")
    params["ff2"] = init_conv(next(it), 1, num_inner_c, num_output_c, mtype="B")
    return params


# ------------------------------ fused Pallas kernel -----------------------------

def _pixelcnn_kernel(p7_ref, m3_ref, w7_ref, b7_ref,
                     wa_ref, ba_ref, w3_ref, b3_ref, wc_ref, bc_ref,
                     wf1_ref, bf1_ref, wf2_ref, bf2_ref,
                     o_ref, pad_ref, *, num_blocks, tap_offsets):
    """One image per grid step. All activations are (C, H*W): lanes = spatial axis."""
    f32, bf16 = jnp.float32, jnp.bfloat16
    M = o_ref.shape[-1]                         # H*W (static)
    PAD = pad_ref.shape[-1] - M                 # lane-aligned zero pad on the left
    Ch = pad_ref.shape[0]                       # channels of the 3x3 activations

    leaky = lambda v: jnp.where(v >= 0.0, v, 0.1 * v)     # LeakyReLU(0.1), f32 VPU
    relu = lambda v: jnp.maximum(v, 0.0)

    def conv1x1(w, act, bias):
        # (Cout, Cin) bf16 @ (Cin, M) bf16 on the MXU, f32 accumulation + f32 bias.
        return jnp.dot(w, act.astype(bf16), preferred_element_type=f32) + bias

    # Zero the left padding of the shift scratch once; only [:, PAD:] is ever written.
    pad_ref[:, :PAD] = jnp.zeros((Ch, PAD), f32)

    # Static per-tap boundary masks (loaded once, reused by all residual blocks).
    tap_masks = [m3_ref[j] for j in range(len(tap_offsets))]      # each (1, M) f32

    def im2col_3x3(t):
        # (Ch, M) f32 -> (T*Ch, M) bf16 patch matrix for the masked 3x3 'B' conv,
        # so the conv is ONE deep-K (K = T*Ch = 80) MXU matmul instead of 9 shallow
        # K=16 ones. Shifted taps are read back from the zero-padded scratch at
        # static lane offsets; boundary masks kill spatially invalid entries.
        pad_ref[:, PAD:] = t
        pieces = []
        for d, m in zip(tap_offsets, tap_masks):
            if d == 0:
                pieces.append(t)                                   # center tap
            else:
                pieces.append(pad_ref[:, PAD + d: PAD + d + M] * m)
        return jnp.concatenate(pieces, axis=0).astype(bf16)

    # ---- shallow features: masked 7x7 'A' conv (im2col'd in the wrapper, K=24)
    h = leaky(jnp.dot(w7_ref[...], p7_ref[0], preferred_element_type=f32)
              + b7_ref[...])                                       # (Ci, M) f32

    # ---- residual stack: x = x + relu(1x1 -> relu(masked 3x3 'B') -> relu(1x1))
    y = h
    for i in range(num_blocks):
        t = relu(conv1x1(wa_ref[i], y, ba_ref[i]))                 # (Ch, M)
        t = relu(jnp.dot(w3_ref[i], im2col_3x3(t),
                         preferred_element_type=f32) + b3_ref[i])  # (Ch, M)
        t = relu(conv1x1(wc_ref[i], t, bc_ref[i]))                 # (Ci, M)
        y = y + t                                                  # residual add (f32)

    # ---- outer skip + final 1x1 features
    z = h + y
    f = leaky(conv1x1(wf1_ref[...], z, bf1_ref[...]))              # (Ci, M)
    o = jax.nn.sigmoid(conv1x1(wf2_ref[...], f, bf2_ref[...]))     # (Co, M)
    o_ref[0] = o.astype(o_ref.dtype)


# --------------------------------- wrapper --------------------------------------

def _pack_w(w, taps):
    """HWIO (K, K, Cin, Cout) -> transposed (Cout, T*Cin) bf16 MXU operand,
    keeping only the non-masked taps (rows ordered tap-major / channel-minor)."""
    cols = jnp.stack([w[kh, kw] for kh, kw in taps], axis=0)       # (T, Cin, Cout)
    T, Cin, Cout = cols.shape
    return cols.reshape(T * Cin, Cout).T.astype(jnp.bfloat16)


def _pack_b(b):
    return b.reshape(-1, 1).astype(jnp.float32)                    # (Cout, 1)


def _full_spec(arr):
    zeros = (0,) * arr.ndim
    return pl.BlockSpec(arr.shape, lambda n: zeros)


@jax.jit
def pixelcnn_forward(params, x_nchw):
    """x_nchw: (N, Cin, H, W) f32 -> (N, Cout, H, W) f32, one fused Pallas kernel."""
    N, Cin, H, W = x_nchw.shape
    M = H * W
    nb = len(params["blocks"])
    taps7 = mask_taps(7, "A")      # 24 non-masked taps of the 7x7 'A' kernel
    taps3 = mask_taps(3, "B")      # 5 non-masked taps of the 3x3 'B' kernel
    taps1 = [(0, 0)]

    # ---- wrapper-side layout plumbing (tiny; fused into this jit) ---------------
    # im2col for the 7x7 'A' conv: (N, 24*Cin, H*W), lane axis = spatial.
    xp = jnp.pad(x_nchw, ((0, 0), (0, 0), (3, 3), (3, 3)))
    cols = [xp[:, :, kh:kh + H, kw:kw + W].reshape(N, Cin, M) for kh, kw in taps7]
    p7 = jnp.stack(cols, axis=1).reshape(N, len(taps7) * Cin, M).astype(jnp.bfloat16)

    # transposed bf16 weights / f32 (Cout, 1) biases; zero-masked taps dropped.
    w7 = _pack_w(params["sf"][0], taps7)
    b7 = _pack_b(params["sf"][1])
    WA = jnp.stack([_pack_w(blk["a"][0], taps1) for blk in params["blocks"]])
    BA = jnp.stack([_pack_b(blk["a"][1]) for blk in params["blocks"]])
    W3 = jnp.stack([_pack_w(blk["b"][0], taps3) for blk in params["blocks"]])
    B3 = jnp.stack([_pack_b(blk["b"][1]) for blk in params["blocks"]])
    WC = jnp.stack([_pack_w(blk["c"][0], taps1) for blk in params["blocks"]])
    BC = jnp.stack([_pack_b(blk["c"][1]) for blk in params["blocks"]])
    WF1 = _pack_w(params["ff1"][0], taps1)
    BF1 = _pack_b(params["ff1"][1])
    WF2 = _pack_w(params["ff2"][0], taps1)
    BF2 = _pack_b(params["ff2"][1])

    # Static flattened-spatial offsets + boundary masks for the in-kernel 3x3 im2col.
    hh, ww = np.meshgrid(np.arange(H), np.arange(W), indexing="ij")
    hh, ww = hh.reshape(-1), ww.reshape(-1)
    offsets, masks = [], []
    for kh, kw in taps3:
        dh, dw = kh - 1, kw - 1
        offsets.append(int(dh * W + dw))
        valid = ((hh + dh >= 0) & (hh + dh < H) & (ww + dw >= 0) & (ww + dw < W))
        masks.append(valid.astype(np.float32).reshape(1, M))
    assert all(d <= 0 for d in offsets)         # 'B' mask only looks up/left
    m3 = jnp.asarray(np.stack(masks, axis=0))   # (T3, 1, M) f32

    half = WA.shape[1]
    Co = WF2.shape[0]
    kernel = partial(_pixelcnn_kernel, num_blocks=nb, tap_offsets=tuple(offsets))

    out_flat = pl.pallas_call(
        kernel,
        out_shape=jax.ShapeDtypeStruct((N, Co, M), jnp.float32),
        grid=(N,),
        in_specs=[
            pl.BlockSpec((1, p7.shape[1], M), lambda n: (n, 0, 0)),
            _full_spec(m3), _full_spec(w7), _full_spec(b7),
            _full_spec(WA), _full_spec(BA), _full_spec(W3), _full_spec(B3),
            _full_spec(WC), _full_spec(BC),
            _full_spec(WF1), _full_spec(BF1), _full_spec(WF2), _full_spec(BF2),
        ],
        out_specs=pl.BlockSpec((1, Co, M), lambda n: (n, 0, 0)),
        # 128 lanes of zero padding on the left so 3x3 taps can be read as shifted
        # windows (aligned store, statically-offset loads).
        scratch_shapes=[pltpu.VMEM((half, M + 128), jnp.float32)],
        compiler_params=pltpu.CompilerParams(dimension_semantics=("parallel",)),
    )(p7, m3, w7, b7, WA, BA, W3, B3, WC, BC, WF1, BF1, WF2, BF2)

    return out_flat.reshape(N, Co, H, W)


# -------------------------- pure-JAX reference (checking) -----------------------

def _conv_ref(x, w, b, padding, op_dtype=jnp.float32):
    # op_dtype=bfloat16 mirrors the kernel's MXU operand rounding (f32 accumulation).
    xo = x.astype(op_dtype).astype(jnp.float32)
    wo = w.astype(op_dtype).astype(jnp.float32)
    y = lax.conv_general_dilated(
        xo, wo, (1, 1), [(padding, padding)] * 2,
        dimension_numbers=("NCHW", "HWIO", "NCHW"),
        precision=lax.Precision.HIGHEST)
    return y + b.reshape(1, -1, 1, 1)


def pixelcnn_ref(params, x, op_dtype=jnp.float32):
    lrelu = lambda v: jnp.where(v >= 0.0, v, 0.1 * v)
    relu = lambda v: jnp.maximum(v, 0.0)
    h = lrelu(_conv_ref(x, *params["sf"], 3, op_dtype))
    y = h
    for blk in params["blocks"]:
        t = relu(_conv_ref(y, *blk["a"], 0, op_dtype))
        t = relu(_conv_ref(t, *blk["b"], 1, op_dtype))
        y = y + relu(_conv_ref(t, *blk["c"], 0, op_dtype))
    y = h + y
    y = lrelu(_conv_ref(y, *params["ff1"], 0, op_dtype))
    return jax.nn.sigmoid(_conv_ref(y, *params["ff2"], 0, op_dtype))


# ----------------------------------- main ---------------------------------------

if __name__ == "__main__":
    key = jax.random.PRNGKey(0)
    k_in, k_p = jax.random.split(key)

    # Small shapes implied by the module: batch=2, num_input_c=1, H=W=16,
    # num_inner_c=32, num_output_c=1, 4 residual blocks.
    x = jax.random.normal(k_in, (2, 1, 16, 16), jnp.float32)          # NCHW
    params = init_pixelcnn(k_p, num_input_c=1, num_inner_c=32,
                           num_output_c=1, num_masked_convs=4)

    out = jax.block_until_ready(pixelcnn_forward(params, x))
    assert out.shape == (2, 1, 16, 16), out.shape

    # Tight structural check: reference with the kernel's bf16 operand rounding
    # (only difference from the kernel is f32 summation order).
    ref_bf = pixelcnn_ref(params, x, jnp.bfloat16)
    err_bf = float(jnp.max(jnp.abs(out - ref_bf)))
    assert err_bf < 2e-3, f"mismatch vs bf16-operand reference: {err_bf}"

    # Sanity check vs full-f32 reference (difference = bf16 MXU operand rounding).
    ref_f32 = pixelcnn_ref(params, x, jnp.float32)
    err_f32 = float(jnp.max(jnp.abs(out - ref_f32)))
    assert err_f32 < 2.5e-2, f"mismatch vs f32 reference: {err_f32}"

    print("KERNEL_OK")
</pallas_src>

<mosaic_0001>
module attributes {stable_mosaic.version = 11 : i64} {
  func.func @_pixelcnn_kernel(%arg0: i32, %arg1: memref<1x24x256xbf16, #tpu.memory_space<vmem>>, %arg2: memref<5x1x256xf32, #tpu.memory_space<vmem>>, %arg3: memref<32x24xbf16, #tpu.memory_space<vmem>>, %arg4: memref<32x1xf32, #tpu.memory_space<vmem>>, %arg5: memref<4x16x32xbf16, #tpu.memory_space<vmem>>, %arg6: memref<4x16x1xf32, #tpu.memory_space<vmem>>, %arg7: memref<4x16x80xbf16, #tpu.memory_space<vmem>>, %arg8: memref<4x16x1xf32, #tpu.memory_space<vmem>>, %arg9: memref<4x32x16xbf16, #tpu.memory_space<vmem>>, %arg10: memref<4x32x1xf32, #tpu.memory_space<vmem>>, %arg11: memref<32x32xbf16, #tpu.memory_space<vmem>>, %arg12: memref<32x1xf32, #tpu.memory_space<vmem>>, %arg13: memref<1x32xbf16, #tpu.memory_space<vmem>>, %arg14: memref<1x1xf32, #tpu.memory_space<vmem>>, %arg15: memref<1x1x256xf32, #tpu.memory_space<vmem>>, %arg16: memref<16x384xf32, #tpu.memory_space<vmem>>) attributes {dimension_semantics = [#tpu.dimension_semantics<parallel>], iteration_bounds = array<i64: 2>, scalar_prefetch = 0 : i64, scratch_operands = 1 : i64, tpu.core_type = #tpu.core_type<tc>, window_params = [{transform_indices = @transform_0, window_bounds = array<i64: 1, 24, 256>}, {pipeline_mode = #tpu.pipeline_mode<synchronous>, transform_indices = @transform_1, window_bounds = array<i64: 5, 1, 256>}, {pipeline_mode = #tpu.pipeline_mode<synchronous>, transform_indices = @transform_2, window_bounds = array<i64: 32, 24>}, {pipeline_mode = #tpu.pipeline_mode<synchronous>, transform_indices = @transform_3, window_bounds = array<i64: 32, 1>}, {pipeline_mode = #tpu.pipeline_mode<synchronous>, transform_indices = @transform_4, window_bounds = array<i64: 4, 16, 32>}, {pipeline_mode = #tpu.pipeline_mode<synchronous>, transform_indices = @transform_5, window_bounds = array<i64: 4, 16, 1>}, {pipeline_mode = #tpu.pipeline_mode<synchronous>, transform_indices = @transform_6, window_bounds = array<i64: 4, 16, 80>}, {pipeline_mode = #tpu.pipeline_mode<synchronous>, transform_indices = @transform_7, window_bounds = array<i64: 4, 16, 1>}, {pipeline_mode = #tpu.pipeline_mode<synchronous>, transform_indices = @transform_8, window_bounds = array<i64: 4, 32, 16>}, {pipeline_mode = #tpu.pipeline_mode<synchronous>, transform_indices = @transform_9, window_bounds = array<i64: 4, 32, 1>}, {pipeline_mode = #tpu.pipeline_mode<synchronous>, transform_indices = @transform_10, window_bounds = array<i64: 32, 32>}, {pipeline_mode = #tpu.pipeline_mode<synchronous>, transform_indices = @transform_11, window_bounds = array<i64: 32, 1>}, {pipeline_mode = #tpu.pipeline_mode<synchronous>, transform_indices = @transform_12, window_bounds = array<i64: 1, 32>}, {pipeline_mode = #tpu.pipeline_mode<synchronous>, transform_indices = @transform_13, window_bounds = array<i64: 1, 1>}, {transform_indices = @transform_14, window_bounds = array<i64: 1, 1, 256>}]} {
    %cst = arith.constant 0.000000e+00 : f32
    %0 = vector.broadcast %cst : f32 to vector<16x128xf32>
    %c0 = arith.constant 0 : index
    %c0_0 = arith.constant 0 : index
    %1 = vector.load %arg16[%c0, %c0_0] : memref<16x384xf32, #tpu.memory_space<vmem>>, vector<16x128xf32>
    tpu.vector_store %arg16[%c0, %c0_0], %0 {strides = array<i32>} : memref<16x384xf32, #tpu.memory_space<vmem>>, vector<16x128xf32>,
    %c0_1 = arith.constant 0 : index
    %c0_2 = arith.constant 0 : index
    %c0_3 = arith.constant 0 : index
    %2 = vector.load %arg2[%c0_1, %c0_2, %c0_3] : memref<5x1x256xf32, #tpu.memory_space<vmem>>, vector<1x1x256xf32>
    %3 = vector.shape_cast %2 : vector<1x1x256xf32> to vector<1x256xf32>
    %c1 = arith.constant 1 : index
    %c0_4 = arith.constant 0 : index
    %c0_5 = arith.constant 0 : index
    %4 = vector.load %arg2[%c1, %c0_4, %c0_5] : memref<5x1x256xf32, #tpu.memory_space<vmem>>, vector<1x1x256xf32>
    %5 = vector.shape_cast %4 : vector<1x1x256xf32> to vector<1x256xf32>
    %c2 = arith.constant 2 : index
    %c0_6 = arith.constant 0 : index
    %c0_7 = arith.constant 0 : index
    %6 = vector.load %arg2[%c2, %c0_6, %c0_7] : memref<5x1x256xf32, #tpu.memory_space<vmem>>, vector<1x1x256xf32>
    %7 = vector.shape_cast %6 : vector<1x1x256xf32> to vector<1x256xf32>
    %c3 = arith.constant 3 : index
    %c0_8 = arith.constant 0 : index
    %c0_9 = arith.constant 0 : index
    %8 = vector.load %arg2[%c3, %c0_8, %c0_9] : memref<5x1x256xf32, #tpu.memory_space<vmem>>, vector<1x1x256xf32>
    %9 = vector.shape_cast %8 : vector<1x1x256xf32> to vector<1x256xf32>
    %c0_10 = arith.constant 0 : index
    %c0_11 = arith.constant 0 : index
    %10 = vector.load %arg3[%c0_10, %c0_11] : memref<32x24xbf16, #tpu.memory_space<vmem>>, vector<32x24xbf16>
    %c0_12 = arith.constant 0 : index
    %c0_13 = arith.constant 0 : index
    %c0_14 = arith.constant 0 : index
    %11 = vector.load %arg1[%c0_12, %c0_13, %c0_14] : memref<1x24x256xbf16, #tpu.memory_space<vmem>>, vector<1x24x256xbf16>
    %12 = vector.shape_cast %11 : vector<1x24x256xbf16> to vector<24x256xbf16>
    %cst_15 = arith.constant dense<0.000000e+00> : vector<32x256xf32>
    %13 = tpu.matmul %10, %12, %cst_15 {dimension_numbers = #tpu.dot_dimension_numbers<[1], [0], [0], [1], [0, 0, 1, 1], [], []>} : vector<32x24xbf16>, vector<24x256xbf16>, vector<32x256xf32> -> vector<32x256xf32>
    %c0_16 = arith.constant 0 : index
    %c0_17 = arith.constant 0 : index
    %14 = vector.load %arg4[%c0_16, %c0_17] : memref<32x1xf32, #tpu.memory_space<vmem>>, vector<32x1xf32>
    %15 = vector.broadcast %14 : vector<32x1xf32> to vector<32x256xf32>
    %16 = arith.addf %13, %15 : vector<32x256xf32>
    %cst_18 = arith.constant 0.000000e+00 : f32
    %17 = vector.broadcast %cst_18 : f32 to vector<32x256xf32>
    %18 = arith.cmpf oge, %16, %17 : vector<32x256xf32>
    %cst_19 = arith.constant 1.000000e-01 : f32
    %19 = vector.broadcast %cst_19 : f32 to vector<32x256xf32>
    %20 = arith.mulf %19, %16 : vector<32x256xf32>
    %21 = arith.select %18, %16, %20 : vector<32x256xi1>, vector<32x256xf32>
    %c0_20 = arith.constant 0 : index
    %c0_21 = arith.constant 0 : index
    %c0_22 = arith.constant 0 : index
    %22 = vector.load %arg5[%c0_20, %c0_21, %c0_22] : memref<4x16x32xbf16, #tpu.memory_space<vmem>>, vector<1x16x32xbf16>
    %23 = vector.shape_cast %22 : vector<1x16x32xbf16> to vector<16x32xbf16>
    %c0_23 = arith.constant 0 : index
    %c0_24 = arith.constant 0 : index
    %c0_25 = arith.constant 0 : index
    %24 = vector.load %arg6[%c0_23, %c0_24, %c0_25] : memref<4x16x1xf32, #tpu.memory_space<vmem>>, vector<1x16x1xf32>
    %25 = vector.shape_cast %24 : vector<1x16x1xf32> to vector<16x1xf32>
    %26 = arith.truncf %21 : vector<32x256xf32> to vector<32x256xbf16>
    %cst_26 = arith.constant dense<0.000000e+00> : vector<16x256xf32>
    %27 = tpu.matmul %23, %26, %cst_26 {dimension_numbers = #tpu.dot_dimension_numbers<[1], [0], [0], [1], [0, 0, 1, 1], [], []>} : vector<16x32xbf16>, vector<32x256xbf16>, vector<16x256xf32> -> vector<16x256xf32>
    %28 = vector.broadcast %25 : vector<16x1xf32> to vector<16x256xf32>
    %29 = arith.addf %27, %28 : vector<16x256xf32>
    %cst_27 = arith.constant 0.000000e+00 : f32
    %30 = vector.broadcast %cst_27 : f32 to vector<16x256xf32>
    %31 = arith.maximumf %29, %30 : vector<16x256xf32>
    %c0_28 = arith.constant 0 : index
    %c0_29 = arith.constant 0 : index
    %c0_30 = arith.constant 0 : index
    %32 = vector.load %arg7[%c0_28, %c0_29, %c0_30] : memref<4x16x80xbf16, #tpu.memory_space<vmem>>, vector<1x16x80xbf16>
    %33 = vector.shape_cast %32 : vector<1x16x80xbf16> to vector<16x80xbf16>
    %c0_31 = arith.constant 0 : index
    %c128 = arith.constant 128 : index
    %34 = vector.load %arg16[%c0_31, %c128] : memref<16x384xf32, #tpu.memory_space<vmem>>, vector<16x256xf32>
    tpu.vector_store %arg16[%c0_31, %c128], %31 {strides = array<i32>} : memref<16x384xf32, #tpu.memory_space<vmem>>, vector<16x256xf32>,
    %c0_32 = arith.constant 0 : index
    %c111 = arith.constant 111 : index
    %35 = vector.load %arg16[%c0_32, %c111] : memref<16x384xf32, #tpu.memory_space<vmem>>, vector<16x256xf32>
    %36 = vector.broadcast %3 : vector<1x256xf32> to vector<16x256xf32>
    %37 = arith.mulf %35, %36 : vector<16x256xf32>
    %c0_33 = arith.constant 0 : index
    %c112 = arith.constant 112 : index
    %38 = vector.load %arg16[%c0_33, %c112] : memref<16x384xf32, #tpu.memory_space<vmem>>, vector<16x256xf32>
    %39 = vector.broadcast %5 : vector<1x256xf32> to vector<16x256xf32>
    %40 = arith.mulf %38, %39 : vector<16x256xf32>
    %c0_34 = arith.constant 0 : index
    %c113 = arith.constant 113 : index
    %41 = vector.load %arg16[%c0_34, %c113] : memref<16x384xf32, #tpu.memory_space<vmem>>, vector<16x256xf32>
    %42 = vector.broadcast %7 : vector<1x256xf32> to vector<16x256xf32>
    %43 = arith.mulf %41, %42 : vector<16x256xf32>
    %c0_35 = arith.constant 0 : index
    %c127 = arith.constant 127 : index
    %44 = vector.load %arg16[%c0_35, %c127] : memref<16x384xf32, #tpu.memory_space<vmem>>, vector<16x256xf32>
    %45 = vector.broadcast %9 : vector<1x256xf32> to vector<16x256xf32>
    %46 = arith.mulf %44, %45 : vector<16x256xf32>
    %47 = tpu.concatenate %37, %40, %43, %46, %31 in 0 : vector<16x256xf32>, vector<16x256xf32>, vector<16x256xf32>, vector<16x256xf32>, vector<16x256xf32> -> vector<80x256xf32>
    %48 = arith.truncf %47 : vector<80x256xf32> to vector<80x256xbf16>
    %cst_36 = arith.constant dense<0.000000e+00> : vector<16x256xf32>
    %49 = tpu.matmul %33, %48, %cst_36 {dimension_numbers = #tpu.dot_dimension_numbers<[1], [0], [0], [1], [0, 0, 1, 1], [], []>} : vector<16x80xbf16>, vector<80x256xbf16>, vector<16x256xf32> -> vector<16x256xf32>
    %c0_37 = arith.constant 0 : index
    %c0_38 = arith.constant 0 : index
    %c0_39 = arith.constant 0 : index
    %50 = vector.load %arg8[%c0_37, %c0_38, %c0_39] : memref<4x16x1xf32, #tpu.memory_space<vmem>>, vector<1x16x1xf32>
    %51 = vector.shape_cast %50 : vector<1x16x1xf32> to vector<16x1xf32>
    %52 = vector.broadcast %51 : vector<16x1xf32> to vector<16x256xf32>
    %53 = arith.addf %49, %52 : vector<16x256xf32>
    %cst_40 = arith.constant 0.000000e+00 : f32
    %54 = vector.broadcast %cst_40 : f32 to vector<16x256xf32>
    %55 = arith.maximumf %53, %54 : vector<16x256xf32>
    %c0_41 = arith.constant 0 : index
    %c0_42 = arith.constant 0 : index
    %c0_43 = arith.constant 0 : index
    %56 = vector.load %arg9[%c0_41, %c0_42, %c0_43] : memref<4x32x16xbf16, #tpu.memory_space<vmem>>, vector<1x32x16xbf16>
    %57 = vector.shape_cast %56 : vector<1x32x16xbf16> to vector<32x16xbf16>
    %c0_44 = arith.constant 0 : index
    %c0_45 = arith.constant 0 : index
    %c0_46 = arith.constant 0 : index
    %58 = vector.load %arg10[%c0_44, %c0_45, %c0_46] : memref<4x32x1xf32, #tpu.memory_space<vmem>>, vector<1x32x1xf32>
    %59 = vector.shape_cast %58 : vector<1x32x1xf32> to vector<32x1xf32>
    %60 = arith.truncf %55 : vector<16x256xf32> to vector<16x256xbf16>
    %cst_47 = arith.constant dense<0.000000e+00> : vector<32x256xf32>
    %61 = tpu.matmul %57, %60, %cst_47 {dimension_numbers = #tpu.dot_dimension_numbers<[1], [0], [0], [1], [0, 0, 1, 1], [], []>} : vector<32x16xbf16>, vector<16x256xbf16>, vector<32x256xf32> -> vector<32x256xf32>
    %62 = vector.broadcast %59 : vector<32x1xf32> to vector<32x256xf32>
    %63 = arith.addf %61, %62 : vector<32x256xf32>
    %cst_48 = arith.constant 0.000000e+00 : f32
    %64 = vector.broadcast %cst_48 : f32 to vector<32x256xf32>
    %65 = arith.maximumf %63, %64 : vector<32x256xf32>
    %66 = arith.addf %21, %65 : vector<32x256xf32>
    %c1_49 = arith.constant 1 : index
    %c0_50 = arith.constant 0 : index
    %c0_51 = arith.constant 0 : index
    %67 = vector.load %arg5[%c1_49, %c0_50, %c0_51] : memref<4x16x32xbf16, #tpu.memory_space<vmem>>, vector<1x16x32xbf16>
    %68 = vector.shape_cast %67 : vector<1x16x32xbf16> to vector<16x32xbf16>
    %c1_52 = arith.constant 1 : index
    %c0_53 = arith.constant 0 : index
    %c0_54 = arith.constant 0 : index
    %69 = vector.load %arg6[%c1_52, %c0_53, %c0_54] : memref<4x16x1xf32, #tpu.memory_space<vmem>>, vector<1x16x1xf32>
    %70 = vector.shape_cast %69 : vector<1x16x1xf32> to vector<16x1xf32>
    %71 = arith.truncf %66 : vector<32x256xf32> to vector<32x256xbf16>
    %cst_55 = arith.constant dense<0.000000e+00> : vector<16x256xf32>
    %72 = tpu.matmul %68, %71, %cst_55 {dimension_numbers = #tpu.dot_dimension_numbers<[1], [0], [0], [1], [0, 0, 1, 1], [], []>} : vector<16x32xbf16>, vector<32x256xbf16>, vector<16x256xf32> -> vector<16x256xf32>
    %73 = vector.broadcast %70 : vector<16x1xf32> to vector<16x256xf32>
    %74 = arith.addf %72, %73 : vector<16x256xf32>
    %cst_56 = arith.constant 0.000000e+00 : f32
    %75 = vector.broadcast %cst_56 : f32 to vector<16x256xf32>
    %76 = arith.maximumf %74, %75 : vector<16x256xf32>
    %c1_57 = arith.constant 1 : index
    %c0_58 = arith.constant 0 : index
    %c0_59 = arith.constant 0 : index
    %77 = vector.load %arg7[%c1_57, %c0_58, %c0_59] : memref<4x16x80xbf16, #tpu.memory_space<vmem>>, vector<1x16x80xbf16>
    %78 = vector.shape_cast %77 : vector<1x16x80xbf16> to vector<16x80xbf16>
    %c0_60 = arith.constant 0 : index
    %c128_61 = arith.constant 128 : index
    %79 = vector.load %arg16[%c0_60, %c128_61] : memref<16x384xf32, #tpu.memory_space<vmem>>, vector<16x256xf32>
    tpu.vector_store %arg16[%c0_60, %c128_61], %76 {strides = array<i32>} : memref<16x384xf32, #tpu.memory_space<vmem>>, vector<16x256xf32>,
    %c0_62 = arith.constant 0 : index
    %c111_63 = arith.constant 111 : index
    %80 = vector.load %arg16[%c0_62, %c111_63] : memref<16x384xf32, #tpu.memory_space<vmem>>, vector<16x256xf32>
    %81 = vector.broadcast %3 : vector<1x256xf32> to vector<16x256xf32>
    %82 = arith.mulf %80, %81 : vector<16x256xf32>
    %c0_64 = arith.constant 0 : index
    %c112_65 = arith.constant 112 : index
    %83 = vector.load %arg16[%c0_64, %c112_65] : memref<16x384xf32, #tpu.memory_space<vmem>>, vector<16x256xf32>
    %84 = vector.broadcast %5 : vector<1x256xf32> to vector<16x256xf32>
    %85 = arith.mulf %83, %84 : vector<16x256xf32>
    %c0_66 = arith.constant 0 : index
    %c113_67 = arith.constant 113 : index
    %86 = vector.load %arg16[%c0_66, %c113_67] : memref<16x384xf32, #tpu.memory_space<vmem>>, vector<16x256xf32>
    %87 = vector.broadcast %7 : vector<1x256xf32> to vector<16x256xf32>
    %88 = arith.mulf %86, %87 : vector<16x256xf32>
    %c0_68 = arith.constant 0 : index
    %c127_69 = arith.constant 127 : index
    %89 = vector.load %arg16[%c0_68, %c127_69] : memref<16x384xf32, #tpu.memory_space<vmem>>, vector<16x256xf32>
    %90 = vector.broadcast %9 : vector<1x256xf32> to vector<16x256xf32>
    %91 = arith.mulf %89, %90 : vector<16x256xf32>
    %92 = tpu.concatenate %82, %85, %88, %91, %76 in 0 : vector<16x256xf32>, vector<16x256xf32>, vector<16x256xf32>, vector<16x256xf32>, vector<16x256xf32> -> vector<80x256xf32>
    %93 = arith.truncf %92 : vector<80x256xf32> to vector<80x256xbf16>
    %cst_70 = arith.constant dense<0.000000e+00> : vector<16x256xf32>
    %94 = tpu.matmul %78, %93, %cst_70 {dimension_numbers = #tpu.dot_dimension_numbers<[1], [0], [0], [1], [0, 0, 1, 1], [], []>} : vector<16x80xbf16>, vector<80x256xbf16>, vector<16x256xf32> -> vector<16x256xf32>
    %c1_71 = arith.constant 1 : index
    %c0_72 = arith.constant 0 : index
    %c0_73 = arith.constant 0 : index
    %95 = vector.load %arg8[%c1_71, %c0_72, %c0_73] : memref<4x16x1xf32, #tpu.memory_space<vmem>>, vector<1x16x1xf32>
    %96 = vector.shape_cast %95 : vector<1x16x1xf32> to vector<16x1xf32>
    %97 = vector.broadcast %96 : vector<16x1xf32> to vector<16x256xf32>
    %98 = arith.addf %94, %97 : vector<16x256xf32>
    %cst_74 = arith.constant 0.000000e+00 : f32
    %99 = vector.broadcast %cst_74 : f32 to vector<16x256xf32>
    %100 = arith.maximumf %98, %99 : vector<16x256xf32>
    %c1_75 = arith.constant 1 : index
    %c0_76 = arith.constant 0 : index
    %c0_77 = arith.constant 0 : index
    %101 = vector.load %arg9[%c1_75, %c0_76, %c0_77] : memref<4x32x16xbf16, #tpu.memory_space<vmem>>, vector<1x32x16xbf16>
    %102 = vector.shape_cast %101 : vector<1x32x16xbf16> to vector<32x16xbf16>
    %c1_78 = arith.constant 1 : index
    %c0_79 = arith.constant 0 : index
    %c0_80 = arith.constant 0 : index
    %103 = vector.load %arg10[%c1_78, %c0_79, %c0_80] : memref<4x32x1xf32, #tpu.memory_space<vmem>>, vector<1x32x1xf32>
    %104 = vector.shape_cast %103 : vector<1x32x1xf32> to vector<32x1xf32>
    %105 = arith.truncf %100 : vector<16x256xf32> to vector<16x256xbf16>
    %cst_81 = arith.constant dense<0.000000e+00> : vector<32x256xf32>
    %106 = tpu.matmul %102, %105, %cst_81 {dimension_numbers = #tpu.dot_dimension_numbers<[1], [0], [0], [1], [0, 0, 1, 1], [], []>} : vector<32x16xbf16>, vector<16x256xbf16>, vector<32x256xf32> -> vector<32x256xf32>
    %107 = vector.broadcast %104 : vector<32x1xf32> to vector<32x256xf32>
    %108 = arith.addf %106, %107 : vector<32x256xf32>
    %cst_82 = arith.constant 0.000000e+00 : f32
    %109 = vector.broadcast %cst_82 : f32 to vector<32x256xf32>
    %110 = arith.maximumf %108, %109 : vector<32x256xf32>
    %111 = arith.addf %66, %110 : vector<32x256xf32>
    %c2_83 = arith.constant 2 : index
    %c0_84 = arith.constant 0 : index
    %c0_85 = arith.constant 0 : index
    %112 = vector.load %arg5[%c2_83, %c0_84, %c0_85] : memref<4x16x32xbf16, #tpu.memory_space<vmem>>, vector<1x16x32xbf16>
    %113 = vector.shape_cast %112 : vector<1x16x32xbf16> to vector<16x32xbf16>
    %c2_86 = arith.constant 2 : index
    %c0_87 = arith.constant 0 : index
    %c0_88 = arith.constant 0 : index
    %114 = vector.load %arg6[%c2_86, %c0_87, %c0_88] : memref<4x16x1xf32, #tpu.memory_space<vmem>>, vector<1x16x1xf32>
    %115 = vector.shape_cast %114 : vector<1x16x1xf32> to vector<16x1xf32>
    %116 = arith.truncf %111 : vector<32x256xf32> to vector<32x256xbf16>
    %cst_89 = arith.constant dense<0.000000e+00> : vector<16x256xf32>
    %117 = tpu.matmul %113, %116, %cst_89 {dimension_numbers = #tpu.dot_dimension_numbers<[1], [0], [0], [1], [0, 0, 1, 1], [], []>} : vector<16x32xbf16>, vector<32x256xbf16>, vector<16x256xf32> -> vector<16x256xf32>
    %118 = vector.broadcast %115 : vector<16x1xf32> to vector<16x256xf32>
    %119 = arith.addf %117, %118 : vector<16x256xf32>
    %cst_90 = arith.constant 0.000000e+00 : f32
    %120 = vector.broadcast %cst_90 : f32 to vector<16x256xf32>
    %121 = arith.maximumf %119, %120 : vector<16x256xf32>
    %c2_91 = arith.constant 2 : index
    %c0_92 = arith.constant 0 : index
    %c0_93 = arith.constant 0 : index
    %122 = vector.load %arg7[%c2_91, %c0_92, %c0_93] : memref<4x16x80xbf16, #tpu.memory_space<vmem>>, vector<1x16x80xbf16>
    %123 = vector.shape_cast %122 : vector<1x16x80xbf16> to vector<16x80xbf16>
    %c0_94 = arith.constant 0 : index
    %c128_95 = arith.constant 128 : index
    %124 = vector.load %arg16[%c0_94, %c128_95] : memref<16x384xf32, #tpu.memory_space<vmem>>, vector<16x256xf32>
    tpu.vector_store %arg16[%c0_94, %c128_95], %121 {strides = array<i32>} : memref<16x384xf32, #tpu.memory_space<vmem>>, vector<16x256xf32>,
    %c0_96 = arith.constant 0 : index
    %c111_97 = arith.constant 111 : index
    %125 = vector.load %arg16[%c0_96, %c111_97] : memref<16x384xf32, #tpu.memory_space<vmem>>, vector<16x256xf32>
    %126 = vector.broadcast %3 : vector<1x256xf32> to vector<16x256xf32>
    %127 = arith.mulf %125, %126 : vector<16x256xf32>
    %c0_98 = arith.constant 0 : index
    %c112_99 = arith.constant 112 : index
    %128 = vector.load %arg16[%c0_98, %c112_99] : memref<16x384xf32, #tpu.memory_space<vmem>>, vector<16x256xf32>
    %129 = vector.broadcast %5 : vector<1x256xf32> to vector<16x256xf32>
    %130 = arith.mulf %128, %129 : vector<16x256xf32>
    %c0_100 = arith.constant 0 : index
    %c113_101 = arith.constant 113 : index
    %131 = vector.load %arg16[%c0_100, %c113_101] : memref<16x384xf32, #tpu.memory_space<vmem>>, vector<16x256xf32>
    %132 = vector.broadcast %7 : vector<1x256xf32> to vector<16x256xf32>
    %133 = arith.mulf %131, %132 : vector<16x256xf32>
    %c0_102 = arith.constant 0 : index
    %c127_103 = arith.constant 127 : index
    %134 = vector.load %arg16[%c0_102, %c127_103] : memref<16x384xf32, #tpu.memory_space<vmem>>, vector<16x256xf32>
    %135 = vector.broadcast %9 : vector<1x256xf32> to vector<16x256xf32>
    %136 = arith.mulf %134, %135 : vector<16x256xf32>
    %137 = tpu.concatenate %127, %130, %133, %136, %121 in 0 : vector<16x256xf32>, vector<16x256xf32>, vector<16x256xf32>, vector<16x256xf32>, vector<16x256xf32> -> vector<80x256xf32>
    %138 = arith.truncf %137 : vector<80x256xf32> to vector<80x256xbf16>
    %cst_104 = arith.constant dense<0.000000e+00> : vector<16x256xf32>
    %139 = tpu.matmul %123, %138, %cst_104 {dimension_numbers = #tpu.dot_dimension_numbers<[1], [0], [0], [1], [0, 0, 1, 1], [], []>} : vector<16x80xbf16>, vector<80x256xbf16>, vector<16x256xf32> -> vector<16x256xf32>
    %c2_105 = arith.constant 2 : index
    %c0_106 = arith.constant 0 : index
    %c0_107 = arith.constant 0 : index
    %140 = vector.load %arg8[%c2_105, %c0_106, %c0_107] : memref<4x16x1xf32, #tpu.memory_space<vmem>>, vector<1x16x1xf32>
    %141 = vector.shape_cast %140 : vector<1x16x1xf32> to vector<16x1xf32>
    %142 = vector.broadcast %141 : vector<16x1xf32> to vector<16x256xf32>
    %143 = arith.addf %139, %142 : vector<16x256xf32>
    %cst_108 = arith.constant 0.000000e+00 : f32
    %144 = vector.broadcast %cst_108 : f32 to vector<16x256xf32>
    %145 = arith.maximumf %143, %144 : vector<16x256xf32>
    %c2_109 = arith.constant 2 : index
    %c0_110 = arith.constant 0 : index
    %c0_111 = arith.constant 0 : index
    %146 = vector.load %arg9[%c2_109, %c0_110, %c0_111] : memref<4x32x16xbf16, #tpu.memory_space<vmem>>, vector<1x32x16xbf16>
    %147 = vector.shape_cast %146 : vector<1x32x16xbf16> to vector<32x16xbf16>
    %c2_112 = arith.constant 2 : index
    %c0_113 = arith.constant 0 : index
    %c0_114 = arith.constant 0 : index
    %148 = vector.load %arg10[%c2_112, %c0_113, %c0_114] : memref<4x32x1xf32, #tpu.memory_space<vmem>>, vector<1x32x1xf32>
    %149 = vector.shape_cast %148 : vector<1x32x1xf32> to vector<32x1xf32>
    %150 = arith.truncf %145 : vector<16x256xf32> to vector<16x256xbf16>
    %cst_115 = arith.constant dense<0.000000e+00> : vector<32x256xf32>
    %151 = tpu.matmul %147, %150, %cst_115 {dimension_numbers = #tpu.dot_dimension_numbers<[1], [0], [0], [1], [0, 0, 1, 1], [], []>} : vector<32x16xbf16>, vector<16x256xbf16>, vector<32x256xf32> -> vector<32x256xf32>
    %152 = vector.broadcast %149 : vector<32x1xf32> to vector<32x256xf32>
    %153 = arith.addf %151, %152 : vector<32x256xf32>
    %cst_116 = arith.constant 0.000000e+00 : f32
    %154 = vector.broadcast %cst_116 : f32 to vector<32x256xf32>
    %155 = arith.maximumf %153, %154 : vector<32x256xf32>
    %156 = arith.addf %111, %155 : vector<32x256xf32>
    %c3_117 = arith.constant 3 : index
    %c0_118 = arith.constant 0 : index
    %c0_119 = arith.constant 0 : index
    %157 = vector.load %arg5[%c3_117, %c0_118, %c0_119] : memref<4x16x32xbf16, #tpu.memory_space<vmem>>, vector<1x16x32xbf16>
    %158 = vector.shape_cast %157 : vector<1x16x32xbf16> to vector<16x32xbf16>
    %c3_120 = arith.constant 3 : index
    %c0_121 = arith.constant 0 : index
    %c0_122 = arith.constant 0 : index
    %159 = vector.load %arg6[%c3_120, %c0_121, %c0_122] : memref<4x16x1xf32, #tpu.memory_space<vmem>>, vector<1x16x1xf32>
    %160 = vector.shape_cast %159 : vector<1x16x1xf32> to vector<16x1xf32>
    %161 = arith.truncf %156 : vector<32x256xf32> to vector<32x256xbf16>
    %cst_123 = arith.constant dense<0.000000e+00> : vector<16x256xf32>
    %162 = tpu.matmul %158, %161, %cst_123 {dimension_numbers = #tpu.dot_dimension_numbers<[1], [0], [0], [1], [0, 0, 1, 1], [], []>} : vector<16x32xbf16>, vector<32x256xbf16>, vector<16x256xf32> -> vector<16x256xf32>
    %163 = vector.broadcast %160 : vector<16x1xf32> to vector<16x256xf32>
    %164 = arith.addf %162, %163 : vector<16x256xf32>
    %cst_124 = arith.constant 0.000000e+00 : f32
    %165 = vector.broadcast %cst_124 : f32 to vector<16x256xf32>
    %166 = arith.maximumf %164, %165 : vector<16x256xf32>
    %c3_125 = arith.constant 3 : index
    %c0_126 = arith.constant 0 : index
    %c0_127 = arith.constant 0 : index
    %167 = vector.load %arg7[%c3_125, %c0_126, %c0_127] : memref<4x16x80xbf16, #tpu.memory_space<vmem>>, vector<1x16x80xbf16>
    %168 = vector.shape_cast %167 : vector<1x16x80xbf16> to vector<16x80xbf16>
    %c0_128 = arith.constant 0 : index
    %c128_129 = arith.constant 128 : index
    %169 = vector.load %arg16[%c0_128, %c128_129] : memref<16x384xf32, #tpu.memory_space<vmem>>, vector<16x256xf32>
    tpu.vector_store %arg16[%c0_128, %c128_129], %166 {strides = array<i32>} : memref<16x384xf32, #tpu.memory_space<vmem>>, vector<16x256xf32>,
    %c0_130 = arith.constant 0 : index
    %c111_131 = arith.constant 111 : index
    %170 = vector.load %arg16[%c0_130, %c111_131] : memref<16x384xf32, #tpu.memory_space<vmem>>, vector<16x256xf32>
    %171 = vector.broadcast %3 : vector<1x256xf32> to vector<16x256xf32>
    %172 = arith.mulf %170, %171 : vector<16x256xf32>
    %c0_132 = arith.constant 0 : index
    %c112_133 = arith.constant 112 : index
    %173 = vector.load %arg16[%c0_132, %c112_133] : memref<16x384xf32, #tpu.memory_space<vmem>>, vector<16x256xf32>
    %174 = vector.broadcast %5 : vector<1x256xf32> to vector<16x256xf32>
    %175 = arith.mulf %173, %174 : vector<16x256xf32>
    %c0_134 = arith.constant 0 : index
    %c113_135 = arith.constant 113 : index
    %176 = vector.load %arg16[%c0_134, %c113_135] : memref<16x384xf32, #tpu.memory_space<vmem>>, vector<16x256xf32>
    %177 = vector.broadcast %7 : vector<1x256xf32> to vector<16x256xf32>
    %178 = arith.mulf %176, %177 : vector<16x256xf32>
    %c0_136 = arith.constant 0 : index
    %c127_137 = arith.constant 127 : index
    %179 = vector.load %arg16[%c0_136, %c127_137] : memref<16x384xf32, #tpu.memory_space<vmem>>, vector<16x256xf32>
    %180 = vector.broadcast %9 : vector<1x256xf32> to vector<16x256xf32>
    %181 = arith.mulf %179, %180 : vector<16x256xf32>
    %182 = tpu.concatenate %172, %175, %178, %181, %166 in 0 : vector<16x256xf32>, vector<16x256xf32>, vector<16x256xf32>, vector<16x256xf32>, vector<16x256xf32> -> vector<80x256xf32>
    %183 = arith.truncf %182 : vector<80x256xf32> to vector<80x256xbf16>
    %cst_138 = arith.constant dense<0.000000e+00> : vector<16x256xf32>
    %184 = tpu.matmul %168, %183, %cst_138 {dimension_numbers = #tpu.dot_dimension_numbers<[1], [0], [0], [1], [0, 0, 1, 1], [], []>} : vector<16x80xbf16>, vector<80x256xbf16>, vector<16x256xf32> -> vector<16x256xf32>
    %c3_139 = arith.constant 3 : index
    %c0_140 = arith.constant 0 : index
    %c0_141 = arith.constant 0 : index
    %185 = vector.load %arg8[%c3_139, %c0_140, %c0_141] : memref<4x16x1xf32, #tpu.memory_space<vmem>>, vector<1x16x1xf32>
    %186 = vector.shape_cast %185 : vector<1x16x1xf32> to vector<16x1xf32>
    %187 = vector.broadcast %186 : vector<16x1xf32> to vector<16x256xf32>
    %188 = arith.addf %184, %187 : vector<16x256xf32>
    %cst_142 = arith.constant 0.000000e+00 : f32
    %189 = vector.broadcast %cst_142 : f32 to vector<16x256xf32>
    %190 = arith.maximumf %188, %189 : vector<16x256xf32>
    %c3_143 = arith.constant 3 : index
    %c0_144 = arith.constant 0 : index
    %c0_145 = arith.constant 0 : index
    %191 = vector.load %arg9[%c3_143, %c0_144, %c0_145] : memref<4x32x16xbf16, #tpu.memory_space<vmem>>, vector<1x32x16xbf16>
    %192 = vector.shape_cast %191 : vector<1x32x16xbf16> to vector<32x16xbf16>
    %c3_146 = arith.constant 3 : index
    %c0_147 = arith.constant 0 : index
    %c0_148 = arith.constant 0 : index
    %193 = vector.load %arg10[%c3_146, %c0_147, %c0_148] : memref<4x32x1xf32, #tpu.memory_space<vmem>>, vector<1x32x1xf32>
    %194 = vector.shape_cast %193 : vector<1x32x1xf32> to vector<32x1xf32>
    %195 = arith.truncf %190 : vector<16x256xf32> to vector<16x256xbf16>
    %cst_149 = arith.constant dense<0.000000e+00> : vector<32x256xf32>
    %196 = tpu.matmul %192, %195, %cst_149 {dimension_numbers = #tpu.dot_dimension_numbers<[1], [0], [0], [1], [0, 0, 1, 1], [], []>} : vector<32x16xbf16>, vector<16x256xbf16>, vector<32x256xf32> -> vector<32x256xf32>
    %197 = vector.broadcast %194 : vector<32x1xf32> to vector<32x256xf32>
    %198 = arith.addf %196, %197 : vector<32x256xf32>
    %cst_150 = arith.constant 0.000000e+00 : f32
    %199 = vector.broadcast %cst_150 : f32 to vector<32x256xf32>
    %200 = arith.maximumf %198, %199 : vector<32x256xf32>
    %201 = arith.addf %156, %200 : vector<32x256xf32>
    %202 = arith.addf %21, %201 : vector<32x256xf32>
    %c0_151 = arith.constant 0 : index
    %c0_152 = arith.constant 0 : index
    %203 = vector.load %arg11[%c0_151, %c0_152] : memref<32x32xbf16, #tpu.memory_space<vmem>>, vector<32x32xbf16>
    %c0_153 = arith.constant 0 : index
    %c0_154 = arith.constant 0 : index
    %204 = vector.load %arg12[%c0_153, %c0_154] : memref<32x1xf32, #tpu.memory_space<vmem>>, vector<32x1xf32>
    %205 = arith.truncf %202 : vector<32x256xf32> to vector<32x256xbf16>
    %cst_155 = arith.constant dense<0.000000e+00> : vector<32x256xf32>
    %206 = tpu.matmul %203, %205, %cst_155 {dimension_numbers = #tpu.dot_dimension_numbers<[1], [0], [0], [1], [0, 0, 1, 1], [], []>} : vector<32x32xbf16>, vector<32x256xbf16>, vector<32x256xf32> -> vector<32x256xf32>
    %207 = vector.broadcast %204 : vector<32x1xf32> to vector<32x256xf32>
    %208 = arith.addf %206, %207 : vector<32x256xf32>
    %cst_156 = arith.constant 0.000000e+00 : f32
    %209 = vector.broadcast %cst_156 : f32 to vector<32x256xf32>
    %210 = arith.cmpf oge, %208, %209 : vector<32x256xf32>
    %cst_157 = arith.constant 1.000000e-01 : f32
    %211 = vector.broadcast %cst_157 : f32 to vector<32x256xf32>
    %212 = arith.mulf %211, %208 : vector<32x256xf32>
    %213 = arith.select %210, %208, %212 : vector<32x256xi1>, vector<32x256xf32>
    %c0_158 = arith.constant 0 : index
    %c0_159 = arith.constant 0 : index
    %214 = vector.load %arg13[%c0_158, %c0_159] : memref<1x32xbf16, #tpu.memory_space<vmem>>, vector<1x32xbf16>
    %c0_160 = arith.constant 0 : index
    %c0_161 = arith.constant 0 : index
    %215 = vector.load %arg14[%c0_160, %c0_161] : memref<1x1xf32, #tpu.memory_space<vmem>>, vector<1x1xf32>
    %216 = arith.truncf %213 : vector<32x256xf32> to vector<32x256xbf16>
    %cst_162 = arith.constant dense<0.000000e+00> : vector<1x256xf32>
    %217 = tpu.matmul %214, %216, %cst_162 {dimension_numbers = #tpu.dot_dimension_numbers<[1], [0], [0], [1], [0, 0, 1, 1], [], []>} : vector<1x32xbf16>, vector<32x256xbf16>, vector<1x256xf32> -> vector<1x256xf32>
    %218 = vector.broadcast %215 : vector<1x1xf32> to vector<1x256xf32>
    %219 = arith.addf %217, %218 : vector<1x256xf32>
    %220 = arith.negf %219 : vector<1x256xf32>
    %221 = math.exp %220 : vector<1x256xf32>
    %cst_163 = arith.constant 1.000000e+00 : f32
    %222 = vector.broadcast %cst_163 : f32 to vector<1x256xf32>
    %223 = arith.addf %222, %221 : vector<1x256xf32>
    %224 = arith.divf %222, %223 : vector<1x256xf32>
    %c0_164 = arith.constant 0 : index
    %c0_165 = arith.constant 0 : index
    %c0_166 = arith.constant 0 : index
    %225 = vector.load %arg15[%c0_164, %c0_165, %c0_166] : memref<1x1x256xf32, #tpu.memory_space<vmem>>, vector<1x1x256xf32>
    %226 = vector.shape_cast %225 : vector<1x1x256xf32> to vector<1x256xf32>
    %227 = vector.shape_cast %224 : vector<1x256xf32> to vector<1x1x256xf32>
    tpu.vector_store %arg15[%c0_164, %c0_165, %c0_166], %227 {strides = array<i32>} : memref<1x1x256xf32, #tpu.memory_space<vmem>>, vector<1x1x256xf32>,
    return
  }
  func.func @transform_0(%arg0: i32) -> (i32, i32, i32) {
    %c0_i32 = arith.constant 0 : i32
    %c0_i32_0 = arith.constant 0 : i32
    %c0_i32_1 = arith.constant 0 : i32
    return %arg0, %c0_i32, %c0_i32_0 : i32, i32, i32
  }
  func.func @transform_1(%arg0: i32) -> (i32, i32, i32) {
    %c0_i32 = arith.constant 0 : i32
    %c0_i32_0 = arith.constant 0 : i32
    %c0_i32_1 = arith.constant 0 : i32
    %c0_i32_2 = arith.constant 0 : i32
    return %c0_i32, %c0_i32_0, %c0_i32_1 : i32, i32, i32
  }
  func.func @transform_2(%arg0: i32) -> (i32, i32) {
    %c0_i32 = arith.constant 0 : i32
    %c0_i32_0 = arith.constant 0 : i32
    %c0_i32_1 = arith.constant 0 : i32
    return %c0_i32, %c0_i32_0 : i32, i32
  }
  func.func @transform_3(%arg0: i32) -> (i32, i32) {
    %c0_i32 = arith.constant 0 : i32
    %c0_i32_0 = arith.constant 0 : i32
    %c0_i32_1 = arith.constant 0 : i32
    return %c0_i32, %c0_i32_0 : i32, i32
  }
  func.func @transform_4(%arg0: i32) -> (i32, i32, i32) {
    %c0_i32 = arith.constant 0 : i32
    %c0_i32_0 = arith.constant 0 : i32
    %c0_i32_1 = arith.constant 0 : i32
    %c0_i32_2 = arith.constant 0 : i32
    return %c0_i32, %c0_i32_0, %c0_i32_1 : i32, i32, i32
  }
  func.func @transform_5(%arg0: i32) -> (i32, i32, i32) {
    %c0_i32 = arith.constant 0 : i32
    %c0_i32_0 = arith.constant 0 : i32
    %c0_i32_1 = arith.constant 0 : i32
    %c0_i32_2 = arith.constant 0 : i32
    return %c0_i32, %c0_i32_0, %c0_i32_1 : i32, i32, i32
  }
  func.func @transform_6(%arg0: i32) -> (i32, i32, i32) {
    %c0_i32 = arith.constant 0 : i32
    %c0_i32_0 = arith.constant 0 : i32
    %c0_i32_1 = arith.constant 0 : i32
    %c0_i32_2 = arith.constant 0 : i32
    return %c0_i32, %c0_i32_0, %c0_i32_1 : i32, i32, i32
  }
  func.func @transform_7(%arg0: i32) -> (i32, i32, i32) {
    %c0_i32 = arith.constant 0 : i32
    %c0_i32_0 = arith.constant 0 : i32
    %c0_i32_1 = arith.constant 0 : i32
    %c0_i32_2 = arith.constant 0 : i32
    return %c0_i32, %c0_i32_0, %c0_i32_1 : i32, i32, i32
  }
  func.func @transform_8(%arg0: i32) -> (i32, i32, i32) {
    %c0_i32 = arith.constant 0 : i32
    %c0_i32_0 = arith.constant 0 : i32
    %c0_i32_1 = arith.constant 0 : i32
    %c0_i32_2 = arith.constant 0 : i32
    return %c0_i32, %c0_i32_0, %c0_i32_1 : i32, i32, i32
  }
  func.func @transform_9(%arg0: i32) -> (i32, i32, i32) {
    %c0_i32 = arith.constant 0 : i32
    %c0_i32_0 = arith.constant 0 : i32
    %c0_i32_1 = arith.constant 0 : i32
    %c0_i32_2 = arith.constant 0 : i32
    return %c0_i32, %c0_i32_0, %c0_i32_1 : i32, i32, i32
  }
  func.func @transform_10(%arg0: i32) -> (i32, i32) {
    %c0_i32 = arith.constant 0 : i32
    %c0_i32_0 = arith.constant 0 : i32
    %c0_i32_1 = arith.constant 0 : i32
    return %c0_i32, %c0_i32_0 : i32, i32
  }
  func.func @transform_11(%arg0: i32) -> (i32, i32) {
    %c0_i32 = arith.constant 0 : i32
    %c0_i32_0 = arith.constant 0 : i32
    %c0_i32_1 = arith.constant 0 : i32
    return %c0_i32, %c0_i32_0 : i32, i32
  }
  func.func @transform_12(%arg0: i32) -> (i32, i32) {
    %c0_i32 = arith.constant 0 : i32
    %c0_i32_0 = arith.constant 0 : i32
    %c0_i32_1 = arith.constant 0 : i32
    return %c0_i32, %c0_i32_0 : i32, i32
  }
  func.func @transform_13(%arg0: i32) -> (i32, i32) {
    %c0_i32 = arith.constant 0 : i32
    %c0_i32_0 = arith.constant 0 : i32
    %c0_i32_1 = arith.constant 0 : i32
    return %c0_i32, %c0_i32_0 : i32, i32
  }
  func.func @transform_14(%arg0: i32) -> (i32, i32, i32) {
    %c0_i32 = arith.constant 0 : i32
    %c0_i32_0 = arith.constant 0 : i32
    %c0_i32_1 = arith.constant 0 : i32
    return %arg0, %c0_i32, %c0_i32_0 : i32, i32, i32
  }
}

</mosaic_0001>

<llo_original>
// kernel: pixelcnn_forward.1
$region0: #{pixelcnn_forward.1}
  #allocation0 [shape = 'u32[]', space=smem, size = 0x4, offset = 0x4, fixed_abs, tag = 'smem constant byte address 0x4 - core index']
  #allocation1 [shape = 'u32[144,128]{1,0:T(1,128)}', space=vmem, size = 0x12000, scoped, tag = 'internal scratch']
  #allocation2 [shape = 'f32[16,384]{1,0:T(8,128)}', space=vmem, size = 0x6000, scoped, tag = 'scratch operand']
  #allocation3 [shape = 'f32[1,1]{1,0:T(1,128)S(1)}', space=vmem, size = 0x200, scoped, tag = 'scoped memory for pixelcnn_forward.1']
  %s0 = inlined_call_operand.vmem [shape: bf16[2,24,256], index: 0, kind: input, shape index: {}]
  %s1 = inlined_call_operand.vmem [shape: f32[5,1,256], index: 1, kind: input, shape index: {}]
  %s2 = inlined_call_operand.vmem [shape: bf16[32,24], index: 2, kind: input, shape index: {}]
  %s3 = inlined_call_operand.vmem [shape: f32[32,1], index: 3, kind: input, shape index: {}]
  %s4 = inlined_call_operand.vmem [shape: bf16[4,16,32], index: 4, kind: input, shape index: {}]
  %s5 = inlined_call_operand.vmem [shape: f32[4,16,1], index: 5, kind: input, shape index: {}]
  %s6 = inlined_call_operand.vmem [shape: bf16[4,16,80], index: 6, kind: input, shape index: {}]
  %s7 = inlined_call_operand.vmem [shape: f32[4,16,1], index: 7, kind: input, shape index: {}]
  %s8 = inlined_call_operand.vmem [shape: bf16[4,32,16], index: 8, kind: input, shape index: {}]
  %s9 = inlined_call_operand.vmem [shape: f32[4,32,1], index: 9, kind: input, shape index: {}]
  %s10 = inlined_call_operand.vmem [shape: bf16[32,32], index: 10, kind: input, shape index: {}]
  %s11 = inlined_call_operand.vmem [shape: f32[32,1], index: 11, kind: input, shape index: {}]
  %s12 = inlined_call_operand.vmem [shape: bf16[1,32], index: 12, kind: input, shape index: {}]
  %s13 = inlined_call_operand.<no memory space> [shape: f32[1,1], index: 13, kind: input, shape index: {}]
  %s14 = inlined_call_operand.vmem [shape: f32[2,1,256], index: 14, kind: output, shape index: {}]
  %s15 = sld [smem:[#allocation0]]
  $region89: #{pixelcnn_forward.1} parent=0
    _
  %s17 = ssub.s32 1, %s15
  %s18 = scalar_select 0, %s17, %s15
  %v19 = vstv %s13
  %20 = vst [vmem:[#allocation3] sm:$0x1] %v19
  loop: start=0, step=1, limit=4
  $region2: #{pixelcnn_forward.1} parent=0 // loop_pre_header
    _
  $region3: #{pixelcnn_forward.1} parent=0 // loop_header
    %s22 = sphi 0, %s26
    %p23 = scmp.ge.s32.totalorder %s22, 4
    %s32 = sphi 0, %s34
    %s35 = sphi 0, %s32
    %s36 = sphi 0, %s35
    %s52 = sphi 0, %s36
    %s56 = sphi 0, %s56
    %s58 = sphi 0, %s56
    %s59 = sphi 0, %s58
    %s73 = sphi 0, %s59
    %s77 = sphi 0, %s77
    %s79 = sphi 0, %s77
    %s80 = sphi 0, %s79
    %s94 = sphi 0, %s80
    %s98 = sphi 0, %s98
    %s100 = sphi 0, %s98
    %s101 = sphi 0, %s100
    %s115 = sphi 0, %s101
    %s119 = sphi 0, %s119
    %s121 = sphi 0, %s119
    %s122 = sphi 0, %s121
    %s136 = sphi 0, %s122
    %s140 = sphi 0, %s140
    %s142 = sphi 0, %s140
    %s143 = sphi 0, %s142
    %s157 = sphi 0, %s143
    %s161 = sphi 0, %s161
    %s163 = sphi 0, %s161
    %s164 = sphi 0, %s163
    %s178 = sphi 0, %s164
    %s182 = sphi 0, %s182
    %s184 = sphi 0, %s182
    %s185 = sphi 0, %s184
    %s199 = sphi 0, %s185
    %s203 = sphi 0, %s203
    %s205 = sphi 0, %s203
    %s206 = sphi 0, %s205
    %s220 = sphi 0, %s206
    %s224 = sphi 0, %s224
    %s226 = sphi 0, %s224
    %s227 = sphi 0, %s226
    %s241 = sphi 0, %s227
    %s245 = sphi 0, %s245
    %s247 = sphi 0, %s245
    %s248 = sphi 0, %s247
    %s262 = sphi 0, %s248
    %s266 = sphi 0, %s266
    %s268 = sphi 0, %s266
    %s269 = sphi 0, %s268
    %s283 = sphi 0, %s269
    %s287 = sphi 0, %s287
    %s289 = sphi 0, %s287
    %s290 = sphi 0, %s289
    %s304 = sphi 0, %s290
    %s308 = sphi 0, %s308
    %s310 = sphi 0, %s308
    %s311 = sphi 0, %s310
    %s325 = sphi 0, %s311
    %s331 = sphi 0, %s333
    %s334 = sphi 0, %s331
    %s335 = sphi 0, %s334
    %s351 = sphi 0, %s335
  $region4: #{pixelcnn_forward.1} parent=0 // loop_header_branch
    %25 = sbr.rel (%p23) target = $region8
  $region5: #{pixelcnn_forward.1} parent=0 // loop_body
    %s27 = ssub.s32 %s22, 1
    %s28 = ssub.s32 %s22, 2
    %s29 = sadd.s32 %s22, 1
    %s30 = ssub.s32 %s22, %s29
    %p31 = scmp.eq.s32.totalorder %s30, 0
    %s33 = sadd.s32 %s32, 1
    %s34 = scalar_select %p31, %s32, %s33
    %p37 = pneg %p31
    %p38 = scmp.eq.s32.totalorder %s22, 1
    %p39 = por %p37, %p38
    %p40 = scmp.ne.s32.totalorder %s32, %s35
    %p41 = scmp.eq.s32.totalorder %s22, 0
    %p42 = por %p40, %p41
    %p43 = scmp.ne.s32.totalorder %s32, %s35
    %p44 = scmp.eq.s32.totalorder %s27, 1
    %p45 = por %p43, %p44
    %p46 = scmp.ne.s32.totalorder %s35, %s36
    %p47 = scmp.eq.s32.totalorder %s27, 0
    %p48 = por %p46, %p47
    %p49 = scmp.ne.s32.totalorder %s35, %s36
    %p50 = scmp.eq.s32.totalorder %s28, 1
    %p51 = por %p49, %p50
    %p53 = scmp.ne.s32.totalorder %s36, %s52
    %p54 = scmp.eq.s32.totalorder %s28, 0
    %p55 = por %p53, %p54
    %s57 = sadd.s32 %s56, 1
    %p60 = scmp.eq.s32.totalorder %s22, 1
    %p61 = scmp.ne.s32.totalorder %s56, %s58
    %p62 = scmp.eq.s32.totalorder %s22, 0
    %p63 = por %p61, %p62
    %p64 = scmp.ne.s32.totalorder %s56, %s58
    %p65 = scmp.eq.s32.totalorder %s27, 1
    %p66 = por %p64, %p65
    %p67 = scmp.ne.s32.totalorder %s58, %s59
    %p68 = scmp.eq.s32.totalorder %s27, 0
    %p69 = por %p67, %p68
    %p70 = scmp.ne.s32.totalorder %s58, %s59
    %p71 = scmp.eq.s32.totalorder %s28, 1
    %p72 = por %p70, %p71
    %p74 = scmp.ne.s32.totalorder %s59, %s73
    %p75 = scmp.eq.s32.totalorder %s28, 0
    %p76 = por %p74, %p75
    %s78 = sadd.s32 %s77, 1
    %p81 = scmp.eq.s32.totalorder %s22, 1
    %p82 = scmp.ne.s32.totalorder %s77, %s79
    %p83 = scmp.eq.s32.totalorder %s22, 0
    %p84 = por %p82, %p83
    %p85 = scmp.ne.s32.totalorder %s77, %s79
    %p86 = scmp.eq.s32.totalorder %s27, 1
    %p87 = por %p85, %p86
    %p88 = scmp.ne.s32.totalorder %s79, %s80
    %p89 = scmp.eq.s32.totalorder %s27, 0
    %p90 = por %p88, %p89
    %p91 = scmp.ne.s32.totalorder %s79, %s80
    %p92 = scmp.eq.s32.totalorder %s28, 1
    %p93 = por %p91, %p92
    %p95 = scmp.ne.s32.totalorder %s80, %s94
    %p96 = scmp.eq.s32.totalorder %s28, 0
    %p97 = por %p95, %p96
    %s99 = sadd.s32 %s98, 1
    %p102 = scmp.eq.s32.totalorder %s22, 1
    %p103 = scmp.ne.s32.totalorder %s98, %s100
    %p104 = scmp.eq.s32.totalorder %s22, 0
    %p105 = por %p103, %p104
    %p106 = scmp.ne.s32.totalorder %s98, %s100
    %p107 = scmp.eq.s32.totalorder %s27, 1
    %p108 = por %p106, %p107
    %p109 = scmp.ne.s32.totalorder %s100, %s101
    %p110 = scmp.eq.s32.totalorder %s27, 0
    %p111 = por %p109, %p110
    %p112 = scmp.ne.s32.totalorder %s100, %s101
    %p113 = scmp.eq.s32.totalorder %s28, 1
    %p114 = por %p112, %p113
    %p116 = scmp.ne.s32.totalorder %s101, %s115
    %p117 = scmp.eq.s32.totalorder %s28, 0
    %p118 = por %p116, %p117
    %s120 = sadd.s32 %s119, 1
    %p123 = scmp.eq.s32.totalorder %s22, 1
    %p124 = scmp.ne.s32.totalorder %s119, %s121
    %p125 = scmp.eq.s32.totalorder %s22, 0
    %p126 = por %p124, %p125
    %p127 = scmp.ne.s32.totalorder %s119, %s121
    %p128 = scmp.eq.s32.totalorder %s27, 1
    %p129 = por %p127, %p128
    %p130 = scmp.ne.s32.totalorder %s121, %s122
    %p131 = scmp.eq.s32.totalorder %s27, 0
    %p132 = por %p130, %p131
    %p133 = scmp.ne.s32.totalorder %s121, %s122
    %p134 = scmp.eq.s32.totalorder %s28, 1
    %p135 = por %p133, %p134
    %p137 = scmp.ne.s32.totalorder %s122, %s136
    %p138 = scmp.eq.s32.totalorder %s28, 0
    %p139 = por %p137, %p138
    %s141 = sadd.s32 %s140, 1
    %p144 = scmp.eq.s32.totalorder %s22, 1
    %p145 = scmp.ne.s32.totalorder %s140, %s142
    %p146 = scmp.eq.s32.totalorder %s22, 0
    %p147 = por %p145, %p146
    %p148 = scmp.ne.s32.totalorder %s140, %s142
    %p149 = scmp.eq.s32.totalorder %s27, 1
    %p150 = por %p148, %p149
    %p151 = scmp.ne.s32.totalorder %s142, %s143
    %p152 = scmp.eq.s32.totalorder %s27, 0
    %p153 = por %p151, %p152
    %p154 = scmp.ne.s32.totalorder %s142, %s143
    %p155 = scmp.eq.s32.totalorder %s28, 1
    %p156 = por %p154, %p155
    %p158 = scmp.ne.s32.totalorder %s143, %s157
    %p159 = scmp.eq.s32.totalorder %s28, 0
    %p160 = por %p158, %p159
    %s162 = sadd.s32 %s161, 1
    %p165 = scmp.eq.s32.totalorder %s22, 1
    %p166 = scmp.ne.s32.totalorder %s161, %s163
    %p167 = scmp.eq.s32.totalorder %s22, 0
    %p168 = por %p166, %p167
    %p169 = scmp.ne.s32.totalorder %s161, %s163
    %p170 = scmp.eq.s32.totalorder %s27, 1
    %p171 = por %p169, %p170
    %p172 = scmp.ne.s32.totalorder %s163, %s164
    %p173 = scmp.eq.s32.totalorder %s27, 0
    %p174 = por %p172, %p173
    %p175 = scmp.ne.s32.totalorder %s163, %s164
    %p176 = scmp.eq.s32.totalorder %s28, 1
    %p177 = por %p175, %p176
    %p179 = scmp.ne.s32.totalorder %s164, %s178
    %p180 = scmp.eq.s32.totalorder %s28, 0
    %p181 = por %p179, %p180
    %s183 = sadd.s32 %s182, 1
    %p186 = scmp.eq.s32.totalorder %s22, 1
    %p187 = scmp.ne.s32.totalorder %s182, %s184
    %p188 = scmp.eq.s32.totalorder %s22, 0
    %p189 = por %p187, %p188
    %p190 = scmp.ne.s32.totalorder %s182, %s184
    %p191 = scmp.eq.s32.totalorder %s27, 1
    %p192 = por %p190, %p191
    %p193 = scmp.ne.s32.totalorder %s184, %s185
    %p194 = scmp.eq.s32.totalorder %s27, 0
    %p195 = por %p193, %p194
    %p196 = scmp.ne.s32.totalorder %s184, %s185
    %p197 = scmp.eq.s32.totalorder %s28, 1
    %p198 = por %p196, %p197
    %p200 = scmp.ne.s32.totalorder %s185, %s199
    %p201 = scmp.eq.s32.totalorder %s28, 0
    %p202 = por %p200, %p201
    %s204 = sadd.s32 %s203, 1
    %p207 = scmp.eq.s32.totalorder %s22, 1
    %p208 = scmp.ne.s32.totalorder %s203, %s205
    %p209 = scmp.eq.s32.totalorder %s22, 0
    %p210 = por %p208, %p209
    %p211 = scmp.ne.s32.totalorder %s203, %s205
    %p212 = scmp.eq.s32.totalorder %s27, 1
    %p213 = por %p211, %p212
    %p214 = scmp.ne.s32.totalorder %s205, %s206
    %p215 = scmp.eq.s32.totalorder %s27, 0
    %p216 = por %p214, %p215
    %p217 = scmp.ne.s32.totalorder %s205, %s206
    %p218 = scmp.eq.s32.totalorder %s28, 1
    %p219 = por %p217, %p218
    %p221 = scmp.ne.s32.totalorder %s206, %s220
    %p222 = scmp.eq.s32.totalorder %s28, 0
    %p223 = por %p221, %p222
    %s225 = sadd.s32 %s224, 1
    %p228 = scmp.eq.s32.totalorder %s22, 1
    %p229 = scmp.ne.s32.totalorder %s224, %s226
    %p230 = scmp.eq.s32.totalorder %s22, 0
    %p231 = por %p229, %p230
    %p232 = scmp.ne.s32.totalorder %s224, %s226
    %p233 = scmp.eq.s32.totalorder %s27, 1
    %p234 = por %p232, %p233
    %p235 = scmp.ne.s32.totalorder %s226, %s227
    %p236 = scmp.eq.s32.totalorder %s27, 0
    %p237 = por %p235, %p236
    %p238 = scmp.ne.s32.totalorder %s226, %s227
    %p239 = scmp.eq.s32.totalorder %s28, 1
    %p240 = por %p238, %p239
    %p242 = scmp.ne.s32.totalorder %s227, %s241
    %p243 = scmp.eq.s32.totalorder %s28, 0
    %p244 = por %p242, %p243
    %s246 = sadd.s32 %s245, 1
    %p249 = scmp.eq.s32.totalorder %s22, 1
    %p250 = scmp.ne.s32.totalorder %s245, %s247
    %p251 = scmp.eq.s32.totalorder %s22, 0
    %p252 = por %p250, %p251
    %p253 = scmp.ne.s32.totalorder %s245, %s247
    %p254 = scmp.eq.s32.totalorder %s27, 1
    %p255 = por %p253, %p254
    %p256 = scmp.ne.s32.totalorder %s247, %s248
    %p257 = scmp.eq.s32.totalorder %s27, 0
    %p258 = por %p256, %p257
    %p259 = scmp.ne.s32.totalorder %s247, %s248
    %p260 = scmp.eq.s32.totalorder %s28, 1
    %p261 = por %p259, %p260
    %p263 = scmp.ne.s32.totalorder %s248, %s262
    %p264 = scmp.eq.s32.totalorder %s28, 0
    %p265 = por %p263, %p264
    %s267 = sadd.s32 %s266, 1
    %p270 = scmp.eq.s32.totalorder %s22, 1
    %p271 = scmp.ne.s32.totalorder %s266, %s268
    %p272 = scmp.eq.s32.totalorder %s22, 0
    %p273 = por %p271, %p272
    %p274 = scmp.ne.s32.totalorder %s266, %s268
    %p275 = scmp.eq.s32.totalorder %s27, 1
    %p276 = por %p274, %p275
    %p277 = scmp.ne.s32.totalorder %s268, %s269
    %p278 = scmp.eq.s32.totalorder %s27, 0
    %p279 = por %p277, %p278
    %p280 = scmp.ne.s32.totalorder %s268, %s269
    %p281 = scmp.eq.s32.totalorder %s28, 1
    %p282 = por %p280, %p281
    %p284 = scmp.ne.s32.totalorder %s269, %s283
    %p285 = scmp.eq.s32.totalorder %s28, 0
    %p286 = por %p284, %p285
    %s288 = sadd.s32 %s287, 1
    %p291 = scmp.eq.s32.totalorder %s22, 1
    %p292 = scmp.ne.s32.totalorder %s287, %s289
    %p293 = scmp.eq.s32.totalorder %s22, 0
    %p294 = por %p292, %p293
    %p295 = scmp.ne.s32.totalorder %s287, %s289
    %p296 = scmp.eq.s32.totalorder %s27, 1
    %p297 = por %p295, %p296
    %p298 = scmp.ne.s32.totalorder %s289, %s290
    %p299 = scmp.eq.s32.totalorder %s27, 0
    %p300 = por %p298, %p299
    %p301 = scmp.ne.s32.totalorder %s289, %s290
    %p302 = scmp.eq.s32.totalorder %s28, 1
    %p303 = por %p301, %p302
    %p305 = scmp.ne.s32.totalorder %s290, %s304
    %p306 = scmp.eq.s32.totalorder %s28, 0
    %p307 = por %p305, %p306
    %s309 = sadd.s32 %s308, 1
    %p312 = scmp.eq.s32.totalorder %s22, 1
    %p313 = scmp.ne.s32.totalorder %s308, %s310
    %p314 = scmp.eq.s32.totalorder %s22, 0
    %p315 = por %p313, %p314
    %p316 = scmp.ne.s32.totalorder %s308, %s310
    %p317 = scmp.eq.s32.totalorder %s27, 1
    %p318 = por %p316, %p317
    %p319 = scmp.ne.s32.totalorder %s310, %s311
    %p320 = scmp.eq.s32.totalorder %s27, 0
    %p321 = por %p319, %p320
    %p322 = scmp.ne.s32.totalorder %s310, %s311
    %p323 = scmp.eq.s32.totalorder %s28, 1
    %p324 = por %p322, %p323
    %p326 = scmp.ne.s32.totalorder %s311, %s325
    %p327 = scmp.eq.s32.totalorder %s28, 0
    %p328 = por %p326, %p327
    %s329 = ssub.s32 %s22, %s29
    %p330 = scmp.eq.s32.totalorder %s329, 0
    %s332 = sadd.s32 %s331, 1
    %s333 = scalar_select %p330, %s331, %s332
    %p336 = pneg %p330
    %p337 = scmp.eq.s32.totalorder %s22, 1
    %p338 = por %p336, %p337
    %p339 = scmp.ne.s32.totalorder %s331, %s334
    %p340 = scmp.eq.s32.totalorder %s22, 0
    %p341 = por %p339, %p340
    %p342 = scmp.ne.s32.totalorder %s331, %s334
    %p343 = scmp.eq.s32.totalorder %s27, 1
    %p344 = por %p342, %p343
    %p345 = scmp.ne.s32.totalorder %s334, %s335
    %p346 = scmp.eq.s32.totalorder %s27, 0
    %p347 = por %p345, %p346
    %p348 = scmp.ne.s32.totalorder %s334, %s335
    %p349 = scmp.eq.s32.totalorder %s28, 1
    %p350 = por %p348, %p349
    %p352 = scmp.ne.s32.totalorder %s335, %s351
    %p353 = scmp.eq.s32.totalorder %s28, 0
    %p354 = por %p352, %p353
    %p355 = scmp.le.s32.totalorder 1, %s22
    %p356 = scmp.lt.s32.totalorder %s22, 3
    %p357 = pnand %p355, %p356
    %p358 = pneg %p357
    // Predicated region
    $region9: #{pixelcnn_forward.1} parent=5 // pred_check
      _
    $region10: #{pixelcnn_forward.1} parent=5 // pred_check_branch
      %360 = sbr.rel (%p357) target = $region12
    $region11: #{pixelcnn_forward.1} parent=5 // pred_region
      %s361 = ssub.s32 %s22, 1
      // Predicated region
      $region13: #{pixelcnn_forward.1} parent=11 // pred_check
        %p362 = pneg %p69
      $region14: #{pixelcnn_forward.1} parent=11 // pred_check_branch
        %364 = sbr.rel (%p362) target = $region16
      $region15: #{pixelcnn_forward.1} parent=11 // pred_region
        _
      $region16: #{pixelcnn_forward.1} parent=11 // pred_fallthru
        _
      // Predicated region
      $region17: #{pixelcnn_forward.1} parent=11 // pred_check
        %p365 = pneg %p90
      $region18: #{pixelcnn_forward.1} parent=11 // pred_check_branch
        %367 = sbr.rel (%p365) target = $region20
      $region19: #{pixelcnn_forward.1} parent=11 // pred_region
        _
      $region20: #{pixelcnn_forward.1} parent=11 // pred_fallthru
        _
      // Predicated region
      $region21: #{pixelcnn_forward.1} parent=11 // pred_check
        %p368 = pneg %p111
      $region22: #{pixelcnn_forward.1} parent=11 // pred_check_branch
        %370 = sbr.rel (%p368) target = $region24
      $region23: #{pixelcnn_forward.1} parent=11 // pred_region
        _
      $region24: #{pixelcnn_forward.1} parent=11 // pred_fallthru
        _
      // Predicated region
      $region25: #{pixelcnn_forward.1} parent=11 // pred_check
        %p371 = pneg %p132
      $region26: #{pixelcnn_forward.1} parent=11 // pred_check_branch
        %373 = sbr.rel (%p371) target = $region28
      $region27: #{pixelcnn_forward.1} parent=11 // pred_region
        _
      $region28: #{pixelcnn_forward.1} parent=11 // pred_fallthru
        _
      // Predicated region
      $region29: #{pixelcnn_forward.1} parent=11 // pred_check
        %p374 = pneg %p153
      $region30: #{pixelcnn_forward.1} parent=11 // pred_check_branch
        %376 = sbr.rel (%p374) target = $region32
      $region31: #{pixelcnn_forward.1} parent=11 // pred_region
        _
      $region32: #{pixelcnn_forward.1} parent=11 // pred_fallthru
        _
      // Predicated region
      $region33: #{pixelcnn_forward.1} parent=11 // pred_check
        %p377 = pneg %p174
      $region34: #{pixelcnn_forward.1} parent=11 // pred_check_branch
        %379 = sbr.rel (%p377) target = $region36
      $region35: #{pixelcnn_forward.1} parent=11 // pred_region
        _
      $region36: #{pixelcnn_forward.1} parent=11 // pred_fallthru
        _
      // Predicated region
      $region37: #{pixelcnn_forward.1} parent=11 // pred_check
        %p380 = pneg %p195
      $region38: #{pixelcnn_forward.1} parent=11 // pred_check_branch
        %382 = sbr.rel (%p380) target = $region40
      $region39: #{pixelcnn_forward.1} parent=11 // pred_region
        _
      $region40: #{pixelcnn_forward.1} parent=11 // pred_fallthru
        _
      // Predicated region
      $region41: #{pixelcnn_forward.1} parent=11 // pred_check
        %p383 = pneg %p216
      $region42: #{pixelcnn_forward.1} parent=11 // pred_check_branch
        %385 = sbr.rel (%p383) target = $region44
      $region43: #{pixelcnn_forward.1} parent=11 // pred_region
        _
      $region44: #{pixelcnn_forward.1} parent=11 // pred_fallthru
        _
      // Predicated region
      $region45: #{pixelcnn_forward.1} parent=11 // pred_check
        %p386 = pneg %p237
      $region46: #{pixelcnn_forward.1} parent=11 // pred_check_branch
        %388 = sbr.rel (%p386) target = $region48
      $region47: #{pixelcnn_forward.1} parent=11 // pred_region
        _
      $region48: #{pixelcnn_forward.1} parent=11 // pred_fallthru
        _
      // Predicated region
      $region49: #{pixelcnn_forward.1} parent=11 // pred_check
        %p389 = pneg %p258
      $region50: #{pixelcnn_forward.1} parent=11 // pred_check_branch
        %391 = sbr.rel (%p389) target = $region52
      $region51: #{pixelcnn_forward.1} parent=11 // pred_region
        _
      $region52: #{pixelcnn_forward.1} parent=11 // pred_fallthru
        _
      // Predicated region
      $region53: #{pixelcnn_forward.1} parent=11 // pred_check
        %p392 = pneg %p279
      $region54: #{pixelcnn_forward.1} parent=11 // pred_check_branch
        %394 = sbr.rel (%p392) target = $region56
      $region55: #{pixelcnn_forward.1} parent=11 // pred_region
        _
      $region56: #{pixelcnn_forward.1} parent=11 // pred_fallthru
        _
      // Predicated region
      $region57: #{pixelcnn_forward.1} parent=11 // pred_check
        %p395 = pneg %p300
      $region58: #{pixelcnn_forward.1} parent=11 // pred_check_branch
        %397 = sbr.rel (%p395) target = $region60
      $region59: #{pixelcnn_forward.1} parent=11 // pred_region
        _
      $region60: #{pixelcnn_forward.1} parent=11 // pred_fallthru
        _
      // Predicated region
      $region61: #{pixelcnn_forward.1} parent=11 // pred_check
        %p398 = pneg %p321
      $region62: #{pixelcnn_forward.1} parent=11 // pred_check_branch
        %400 = sbr.rel (%p398) target = $region64
      $region63: #{pixelcnn_forward.1} parent=11 // pred_region
        _
      $region64: #{pixelcnn_forward.1} parent=11 // pred_fallthru
        _
    $region12: #{pixelcnn_forward.1} parent=5 // pred_fallthru
      _
    %p401 = scmp.lt.s32.totalorder %s22, 2
    // Predicated region
    $region65: #{pixelcnn_forward.1} parent=5 // pred_check
      %p402 = pneg %p401
    $region66: #{pixelcnn_forward.1} parent=5 // pred_check_branch
      %404 = sbr.rel (%p402) target = $region68
    $region67: #{pixelcnn_forward.1} parent=5 // pred_region
      // Predicated region
      $region69: #{pixelcnn_forward.1} parent=67 // pred_check
        %p405 = pneg %p42
      $region70: #{pixelcnn_forward.1} parent=67 // pred_check_branch
        %407 = sbr.rel (%p405) target = $region72
      $region71: #{pixelcnn_forward.1} parent=67 // pred_region
        %p408 = scmp.lt.s32.totalorder %s22, 1
        %s409 = scalar_select %p408, %s22, 1
        %s410 = smul.addr %s409, 6
        %s411 = smul.addr %s410, 4
        %s412 = scalar_lea.vmem %s0, %s411
      $region72: #{pixelcnn_forward.1} parent=67 // pred_fallthru
        _
    $region68: #{pixelcnn_forward.1} parent=5 // pred_fallthru
      _
    %p413 = scmp.le.s32.totalorder 1, %s22
    %p414 = scmp.lt.s32.totalorder %s22, 3
    %p415 = pnand %p413, %p414
    %p416 = pneg %p415
    // Predicated region
    $region73: #{pixelcnn_forward.1} parent=5 // pred_check
      _
    $region74: #{pixelcnn_forward.1} parent=5 // pred_check_branch
      %418 = sbr.rel (%p415) target = $region76
    $region75: #{pixelcnn_forward.1} parent=5 // pred_region
      %s419 = ssub.s32 %s22, 1
      %p420 = scmp.lt.s32.totalorder %s27, 1
      %s421 = scalar_select %p420, %s27, 1
      %s422 = smul.addr %s421, 6
      %s423 = smul.addr %s422, 4
      %s424 = scalar_lea.vmem %s0, %s423
      %p425 = pneg %p48
      %p426 = pneg %p45
      %p427 = pneg %p69
      %p428 = pneg %p66
      %p429 = pneg %p90
      %p430 = pneg %p87
      %p431 = pneg %p111
      %p432 = pneg %p108
      %p433 = pneg %p132
      %p434 = pneg %p129
      %p435 = pneg %p153
      %p436 = pneg %p150
      %p437 = pneg %p174
      %p438 = pneg %p171
      %p439 = pneg %p195
      %p440 = pneg %p192
      %p441 = pneg %p216
      %p442 = pneg %p213
      %p443 = pneg %p237
      %p444 = pneg %p234
      %p445 = pneg %p258
      %p446 = pneg %p255
      %p447 = pneg %p279
      %p448 = pneg %p276
      %p449 = pneg %p300
      %p450 = pneg %p297
      %p451 = pneg %p321
      %p452 = pneg %p318
      %p453 = pneg %p347
      %p454 = pneg %p344
      %p455 = scmp.lt.s32.totalorder %s27, 1
      %s456 = scalar_select %p455, %s27, 1
      %s457 = smul.addr %s456, 2
      %s458 = scalar_lea.vmem %s14, %s457
      %p459 = scmp.lt.s32.totalorder %s27, 1
      %s460 = scalar_select %p459, %s27, 1
      %s461 = smul.addr %s460, 6
      %s462 = smul.addr %s461, 4
      %s463 = scalar_lea.vmem %s0, %s462
      %p464 = scmp.lt.s32.totalorder %s27, 1
      %s465 = scalar_select %p464, %s27, 1
      %s466 = smul.addr %s465, 2
      %s467 = scalar_lea.vmem %s14, %s466
      %469 = vst [vmem:[#allocation2] sm:$0xff] 0.0
      %470 = vst [vmem:[#allocation2 + $0x18] sm:$0xff] 0.0
      %v471 = vld [vmem:[%s1] sm:$0x3]
      %s472 = scalar_lea.vmem %s1, 2
      %v473 = vld [vmem:[%s472] sm:$0x3]
      %s474 = scalar_lea.vmem %s1, 4
      %v475 = vld [vmem:[%s474] sm:$0x3]
      %s476 = scalar_lea.vmem %s1, 6
      %v477 = vld [vmem:[%s476] sm:$0x3]
      %v478 = vld [vmem:[%s2] sm:$0xf]
      %v479 = vld [vmem:[%s2 + $0x4] sm:$0xf]
      %v480 = vld [vmem:[%s2 + $0x8] sm:$0xf]
      %v481 = vld [vmem:[%s2 + $0xc] sm:$0xf]
      %v482 = vld [vmem:[%s463] sm:$0xff]
      %v483 = vld [vmem:[%s463 + $0x8] sm:$0xff]
      %v484 = vld [vmem:[%s463 + $0x10] sm:$0xff]
      %v485 = vld [vmem:[%s3] sm:$0xff]
      %v486 = vld [vmem:[%s3 + $0x8] sm:$0xff]
      %v487 = vld [vmem:[%s3 + $0x10] sm:$0xff]
      %v488 = vld [vmem:[%s3 + $0x18] sm:$0xff]
      %490 = vset.pattern.permute.xlu0 0
      %491 = vperm.xlu0 %490, %v485
      %v492 = vpop.permute.xlu0 %491
      %495 = vset.pattern.permute.xlu0 0
      %496 = vperm.xlu0 %495, %v486
      %v497 = vpop.permute.xlu0 %496
      %500 = vset.pattern.permute.xlu0 0
      %501 = vperm.xlu0 %500, %v487
      %v502 = vpop.permute.xlu0 %501
      %505 = vset.pattern.permute.xlu0 0
      %506 = vperm.xlu0 %505, %v488
      %v507 = vpop.permute.xlu0 %506
      %v513 = vunpack.c.l.b16 %v478
      %v514 = vunpack.c.l.b16 %v479
      %v515 = vunpack.c.l.b16 %v480
      %v516 = vunpack.c.l.b16 %v481
      %v517 = vpack.c.b16 %v514, %v513
      %v518 = vpack.c.b16 %v516, %v515
      %v522 = vunpack.c.l.b16 %v482
      %v523 = vunpack.c.h.b16 %v482
      %v524 = vunpack.c.l.b16 %v483
      %v525 = vunpack.c.h.b16 %v483
      %v526 = vunpack.c.l.b16 %v484
      %v527 = vunpack.c.h.b16 %v484
      %v528 = vpack.c.b16 %v524, %v522
      %v529 = vpack.c.b16 %v525, %v523
      %v530 = vpack.c.b16 %v526, %v526
      %v531 = vpack.c.b16 %v527, %v527
      %vm534 = vcmask 195584
      %v536 = vsel %vm534, %v517, 0
      %v539 = vsel %vm534, %v518, 0
      %vm541 = vcmask 1043456
      %v543 = vsel %vm541, %v530, 0
      %v546 = vsel %vm541, %v531, 0
      %548 = vmatprep.subr.bf16.mxu0 %v529
      %549 = vmatpush1.bf16.msra.mxu0 %v528
      %550 = vmatprep.subr.bf16.mxu0 %v546
      %551 = vmatpush1.bf16.msra.mxu0 %v543
      %552 = vmatprep.subr.bf16.mxu0 0
      %553 = vmatpush1.bf16.msra.mxu0 0
      %554 = vmatprep.subr.bf16.mxu0 0
      %555 = vmatpush1.bf16.msra.mxu0 0
      %556 = vmatprep.subr.bf16.mxu0 0
      %557 = vmatpush1.bf16.msra.mxu0 0
      %558 = vmatprep.subr.bf16.mxu0 0
      %559 = vmatpush1.bf16.msra.mxu0 0
      %560 = vmatprep.subr.bf16.mxu0 0
      %561 = vmatpush1.bf16.msra.mxu0 0
      %562 = vmatprep.subr.bf16.mxu0 0
      %563 = vmatpush1.bf16.msra.mxu0 0
      %564 = vmatprep.subr.bf16.mxu0 0
      %565 = vmatpush1.bf16.msra.mxu0 0
      %566 = vmatprep.subr.bf16.mxu0 0
      %567 = vmatpush1.bf16.msra.mxu0 0
      %568 = vmatprep.subr.bf16.mxu0 0
      %569 = vmatpush1.bf16.msra.mxu0 0
      %570 = vmatprep.subr.bf16.mxu0 0
      %571 = vmatpush1.bf16.msra.mxu0 0
      %572 = vmatprep.subr.bf16.mxu0 0
      %573 = vmatpush1.bf16.msra.mxu0 0
      %574 = vmatprep.subr.bf16.mxu0 0
      %575 = vmatpush1.bf16.msra.mxu0 0
      %576 = vmatprep.subr.bf16.mxu0 0
      %577 = vmatpush1.bf16.msra.mxu0 0
      %578 = vmatprep.subr.bf16.mxu0 0
      %579 = vmatpush1.bf16.msra.mxu0 0
      %580 = vmatprep.mubr.bf16.mxu0 0
      %581 = vmatmul.mubr.bf16.gmra.mrb[0].mxu0 %v536
      %v582 = vpop.f32.mrb[0].mxu0
      %v583 = vadd.f32 %v492, %v582
      %v584 = vpop.f32.mrb[0].mxu0
      %v585 = vadd.f32 %v492, %v584
      %v586 = vpop.f32.mrb[0].mxu0
      %v587 = vadd.f32 %v497, %v586
      %v588 = vpop.f32.mrb[0].mxu0
      %v589 = vadd.f32 %v497, %v588
      %590 = vmatprep.mubr.bf16.mxu0 0
      %591 = vmatmul.mubr.bf16.gmra.mrb[0].mxu0 %v539
      %v592 = vpop.f32.mrb[0].mxu0
      %v593 = vadd.f32 %v502, %v592
      %v594 = vpop.f32.mrb[0].mxu0
      %v595 = vadd.f32 %v502, %v594
      %v596 = vpop.f32.mrb[0].mxu0
      %v597 = vadd.f32 %v507, %v596
      %v598 = vpop.f32.mrb[0].mxu0
      %v599 = vadd.f32 %v507, %v598
      %600 = vdwg.mxu0
      %vm601 = vcmp.ge.f32.partialorder %v583, 0.0
      %vm602 = vcmp.ge.f32.partialorder %v585, 0.0
      %vm603 = vcmp.ge.f32.partialorder %v587, 0.0
      %vm604 = vcmp.ge.f32.partialorder %v589, 0.0
      %vm605 = vcmp.ge.f32.partialorder %v593, 0.0
      %vm606 = vcmp.ge.f32.partialorder %v595, 0.0
      %vm607 = vcmp.ge.f32.partialorder %v597, 0.0
      %vm608 = vcmp.ge.f32.partialorder %v599, 0.0
      %v609 = vmul.f32 %v583, 0.1
      %v610 = vmul.f32 %v585, 0.1
      %v611 = vmul.f32 %v587, 0.1
      %v612 = vmul.f32 %v589, 0.1
      %v613 = vmul.f32 %v593, 0.1
      %v614 = vmul.f32 %v595, 0.1
      %v615 = vmul.f32 %v597, 0.1
      %v616 = vmul.f32 %v599, 0.1
      %v617 = vsel %vm601, %v583, %v609
      %v618 = vsel %vm602, %v585, %v610
      %v619 = vsel %vm603, %v587, %v611
      %v620 = vsel %vm604, %v589, %v612
      %v621 = vsel %vm605, %v593, %v613
      %v622 = vsel %vm606, %v595, %v614
      %v623 = vsel %vm607, %v597, %v615
      %v624 = vsel %vm608, %v599, %v616
      %v625 = vld [vmem:[%s4] sm:$0xf]
      %v626 = vld [vmem:[%s4 + $0x4] sm:$0xf]
      %v627 = vld [vmem:[%s5] sm:$0xff]
      %v628 = vld [vmem:[%s5 + $0x8] sm:$0xff]
      %v629 = vpack.c.bf16 %v619, %v617
      %v630 = vpack.c.bf16 %v620, %v618
      %v631 = vpack.c.bf16 %v623, %v621
      %v632 = vpack.c.bf16 %v624, %v622
      %634 = vset.pattern.permute.xlu0 0
      %635 = vperm.xlu0 %634, %v627
      %v636 = vpop.permute.xlu0 %635
      %639 = vset.pattern.permute.xlu0 0
      %640 = vperm.xlu0 %639, %v628
      %v641 = vpop.permute.xlu0 %640
      %v645 = vunpack.c.l.b16 %v625
      %v646 = vunpack.c.l.b16 %v626
      %v647 = vpack.c.b16 %v646, %v645
      %vm648 = vcmask 261120
      %v650 = vsel %vm648, %v647, 0
      %652 = vmatprep.subr.bf16.mxu0 %v630
      %653 = vmatpush1.bf16.msra.mxu0 %v629
      %654 = vmatprep.subr.bf16.mxu0 %v632
      %655 = vmatpush1.bf16.msra.mxu0 %v631
      %656 = vmatprep.subr.bf16.mxu0 0
      %657 = vmatpush1.bf16.msra.mxu0 0
      %658 = vmatprep.subr.bf16.mxu0 0
      %659 = vmatpush1.bf16.msra.mxu0 0
      %660 = vmatprep.subr.bf16.mxu0 0
      %661 = vmatpush1.bf16.msra.mxu0 0
      %662 = vmatprep.subr.bf16.mxu0 0
      %663 = vmatpush1.bf16.msra.mxu0 0
      %664 = vmatprep.subr.bf16.mxu0 0
      %665 = vmatpush1.bf16.msra.mxu0 0
      %666 = vmatprep.subr.bf16.mxu0 0
      %667 = vmatpush1.bf16.msra.mxu0 0
      %668 = vmatprep.subr.bf16.mxu0 0
      %669 = vmatpush1.bf16.msra.mxu0 0
      %670 = vmatprep.subr.bf16.mxu0 0
      %671 = vmatpush1.bf16.msra.mxu0 0
      %672 = vmatprep.subr.bf16.mxu0 0
      %673 = vmatpush1.bf16.msra.mxu0 0
      %674 = vmatprep.subr.bf16.mxu0 0
      %675 = vmatpush1.bf16.msra.mxu0 0
      %676 = vmatprep.subr.bf16.mxu0 0
      %677 = vmatpush1.bf16.msra.mxu0 0
      %678 = vmatprep.subr.bf16.mxu0 0
      %679 = vmatpush1.bf16.msra.mxu0 0
      %680 = vmatprep.subr.bf16.mxu0 0
      %681 = vmatpush1.bf16.msra.mxu0 0
      %682 = vmatprep.subr.bf16.mxu0 0
      %683 = vmatpush1.bf16.msra.mxu0 0
      %684 = vmatprep.mubr.bf16.mxu0 0
      %685 = vmatmul.mubr.bf16.gmra.mrb[0].mxu0 %v650
      %v686 = vpop.f32.mrb[0].mxu0
      %v687 = vadd.f32 %v636, %v686
      %v688 = vpop.f32.mrb[0].mxu0
      %v689 = vadd.f32 %v636, %v688
      %v690 = vpop.f32.mrb[0].mxu0
      %v691 = vadd.f32 %v641, %v690
      %v692 = vpop.f32.mrb[0].mxu0
      %v693 = vadd.f32 %v641, %v692
      %694 = vdwg.mxu0
      %v695 = vmax.f32 %v687, 0.0
      %v696 = vmax.f32 %v689, 0.0
      %v697 = vmax.f32 %v691, 0.0
      %v698 = vmax.f32 %v693, 0.0
      %v699 = vld [vmem:[%s6] sm:$0xf]
      %v700 = vld [vmem:[%s6 + $0x4] sm:$0xf]
      %701 = vst [vmem:[#allocation2 + $0x8] sm:$0xff] %v695
      %702 = vst [vmem:[#allocation2 + $0x10] sm:$0xff] %v696
      %703 = vst [vmem:[#allocation2 + $0x20] sm:$0xff] %v697
      %704 = vst [vmem:[#allocation2 + $0x28] sm:$0xff] %v698
      %v705 = vld [vmem:[#allocation2] sm:$0xff]
      %v706 = vld [vmem:[#allocation2 + $0x8] sm:$0xff]
      %v707 = vld [vmem:[#allocation2 + $0x10] sm:$0xff]
      %v708 = vld [vmem:[#allocation2 + $0x18] sm:$0xff]
      %v709 = vld [vmem:[#allocation2 + $0x20] sm:$0xff]
      %v710 = vld [vmem:[#allocation2 + $0x28] sm:$0xff]
      %v712 = vlaneseq
      %v713 = vshrl.u32 %v712, 7
      %v714 = vsub.s32 0, %v713
      %v715 = vrot.slane %v471, %v714
      %v716 = vlaneseq
      %v717 = vshrl.u32 %v716, 7
      %v718 = vsub.s32 1, %v717
      %v719 = vrot.slane %v471, %v718
      %720 = vrot.lane.b32.xlu0 %v715, 111
      %v721 = vpop.permute.xlu0 %720
      %722 = vrot.lane.b32.xlu0 %v719, 111
      %v723 = vpop.permute.xlu0 %722
      %vm724 = vcmask 908288
      %v725 = vsel %vm724, %v721, %v723
      %v729 = vmul.f32 %v705, %v721
      %v730 = vmul.f32 %v706, %v725
      %v731 = vmul.f32 %v707, %v723
      %v732 = vmul.f32 %v708, %v721
      %v733 = vmul.f32 %v709, %v725
      %v734 = vmul.f32 %v710, %v723
      %v736 = vlaneseq
      %v737 = vshrl.u32 %v736, 7
      %v738 = vsub.s32 0, %v737
      %v739 = vrot.slane %v473, %v738
      %v740 = vlaneseq
      %v741 = vshrl.u32 %v740, 7
      %v742 = vsub.s32 1, %v741
      %v743 = vrot.slane %v473, %v742
      %744 = vrot.lane.b32.xlu0 %v739, 112
      %v745 = vpop.permute.xlu0 %744
      %746 = vrot.lane.b32.xlu0 %v743, 112
      %v747 = vpop.permute.xlu0 %746
      %vm748 = vcmask 916480
      %v749 = vsel %vm748, %v745, %v747
      %v753 = vmul.f32 %v705, %v745
      %v754 = vmul.f32 %v706, %v749
      %v755 = vmul.f32 %v707, %v747
      %v756 = vmul.f32 %v708, %v745
      %v757 = vmul.f32 %v709, %v749
      %v758 = vmul.f32 %v710, %v747
      %v760 = vlaneseq
      %v761 = vshrl.u32 %v760, 7
      %v762 = vsub.s32 0, %v761
      %v763 = vrot.slane %v475, %v762
      %v764 = vlaneseq
      %v765 = vshrl.u32 %v764, 7
      %v766 = vsub.s32 1, %v765
      %v767 = vrot.slane %v475, %v766
      %768 = vrot.lane.b32.xlu0 %v763, 113
      %v769 = vpop.permute.xlu0 %768
      %770 = vrot.lane.b32.xlu0 %v767, 113
      %v771 = vpop.permute.xlu0 %770
      %vm772 = vcmask 924672
      %v773 = vsel %vm772, %v769, %v771
      %v777 = vmul.f32 %v705, %v769
      %v778 = vmul.f32 %v706, %v773
      %v779 = vmul.f32 %v707, %v771
      %v780 = vmul.f32 %v708, %v769
      %v781 = vmul.f32 %v709, %v773
      %v782 = vmul.f32 %v710, %v771
      %v784 = vlaneseq
      %v785 = vshrl.u32 %v784, 7
      %v786 = vsub.s32 0, %v785
      %v787 = vrot.slane %v477, %v786
      %v788 = vlaneseq
      %v789 = vshrl.u32 %v788, 7
      %v790 = vsub.s32 1, %v789
      %v791 = vrot.slane %v477, %v790
      %792 = vrot.lane.b32.xlu0 %v787, 127
      %v793 = vpop.permute.xlu0 %792
      %794 = vrot.lane.b32.xlu0 %v791, 127
      %v795 = vpop.permute.xlu0 %794
      %vm796 = vcmask 1039360
      %v797 = vsel %vm796, %v793, %v795
      %v801 = vmul.f32 %v705, %v793
      %v802 = vmul.f32 %v706, %v797
      %v803 = vmul.f32 %v707, %v795
      %v804 = vmul.f32 %v708, %v793
      %v805 = vmul.f32 %v709, %v797
      %v806 = vmul.f32 %v710, %v795
      %813 = vrot.lane.b32.xlu0 %v753, 127
      %v814 = vpop.permute.xlu0 %813
      %815 = vrot.lane.b32.xlu0 %v754, 127
      %v816 = vpop.permute.xlu0 %815
      %817 = vrot.lane.b32.xlu0 %v755, 127
      %v818 = vpop.permute.xlu0 %817
      %819 = vrot.lane.b32.xlu0 %v756, 127
      %v820 = vpop.permute.xlu0 %819
      %821 = vrot.lane.b32.xlu0 %v757, 127
      %v822 = vpop.permute.xlu0 %821
      %823 = vrot.lane.b32.xlu0 %v758, 127
      %v824 = vpop.permute.xlu0 %823
      %v825 = vsel %vm796, %v814, %v816
      %v826 = vsel %vm796, %v816, %v818
      %v827 = vsel %vm796, %v820, %v822
      %v828 = vsel %vm796, %v822, %v824
      %841 = vrot.lane.b32.xlu0 %v777, 126
      %v842 = vpop.permute.xlu0 %841
      %843 = vrot.lane.b32.xlu0 %v778, 126
      %v844 = vpop.permute.xlu0 %843
      %845 = vrot.lane.b32.xlu0 %v779, 126
      %v846 = vpop.permute.xlu0 %845
      %847 = vrot.lane.b32.xlu0 %v780, 126
      %v848 = vpop.permute.xlu0 %847
      %849 = vrot.lane.b32.xlu0 %v781, 126
      %v850 = vpop.permute.xlu0 %849
      %851 = vrot.lane.b32.xlu0 %v782, 126
      %v852 = vpop.permute.xlu0 %851
      %vm853 = vcmask 1031168
      %v854 = vsel %vm853, %v842, %v844
      %v855 = vsel %vm853, %v844, %v846
      %v856 = vsel %vm853, %v848, %v850
      %v857 = vsel %vm853, %v850, %v852
      %870 = vrot.lane.b32.xlu0 %v801, 112
      %v871 = vpop.permute.xlu0 %870
      %872 = vrot.lane.b32.xlu0 %v802, 112
      %v873 = vpop.permute.xlu0 %872
      %874 = vrot.lane.b32.xlu0 %v803, 112
      %v875 = vpop.permute.xlu0 %874
      %876 = vrot.lane.b32.xlu0 %v804, 112
      %v877 = vpop.permute.xlu0 %876
      %878 = vrot.lane.b32.xlu0 %v805, 112
      %v879 = vpop.permute.xlu0 %878
      %880 = vrot.lane.b32.xlu0 %v806, 112
      %v881 = vpop.permute.xlu0 %880
      %v882 = vsel %vm748, %v871, %v873
      %v883 = vsel %vm748, %v873, %v875
      %v884 = vsel %vm748, %v877, %v879
      %v885 = vsel %vm748, %v879, %v881
      %896 = vrot.lane.b32.xlu0 %v695, 111
      %v897 = vpop.permute.xlu0 %896
      %898 = vrot.lane.b32.xlu0 %v696, 111
      %v899 = vpop.permute.xlu0 %898
      %900 = vrot.lane.b32.xlu0 %v697, 111
      %v901 = vpop.permute.xlu0 %900
      %902 = vrot.lane.b32.xlu0 %v698, 111
      %v903 = vpop.permute.xlu0 %902
      %v904 = vsel %vm724, %v897, %v899
      %v905 = vsel %vm724, %v901, %v903
      %v912 = vpack.c.bf16 %v732, %v729
      %v913 = vpack.c.bf16 %v733, %v730
      %v914 = vpack.c.bf16 %v734, %v731
      %v915 = vpack.c.bf16 %v827, %v825
      %v916 = vpack.c.bf16 %v828, %v826
      %v917 = vpack.c.bf16 %v824, %v818
      %v918 = vpack.c.bf16 %v856, %v854
      %v919 = vpack.c.bf16 %v857, %v855
      %v920 = vpack.c.bf16 %v852, %v846
      %v921 = vpack.c.bf16 %v884, %v882
      %v922 = vpack.c.bf16 %v885, %v883
      %v923 = vpack.c.bf16 %v881, %v875
      %v924 = vpack.c.bf16 %v901, %v897
      %v925 = vpack.c.bf16 %v905, %v904
      %v926 = vpack.c.bf16 %v903, %v899
      %v927 = vld [vmem:[%s7] sm:$0xff]
      %v928 = vld [vmem:[%s7 + $0x8] sm:$0xff]
      %930 = vset.pattern.permute.xlu0 0
      %931 = vperm.xlu0 %930, %v927
      %v932 = vpop.permute.xlu0 %931
      %935 = vset.pattern.permute.xlu0 0
      %936 = vperm.xlu0 %935, %v928
      %v937 = vpop.permute.xlu0 %936
      %v941 = vunpack.c.l.b16 %v699
      %v942 = vunpack.c.l.b16 %v700
      %v943 = vpack.c.b16 %v942, %v941
      %959 = vrot.lane.b32.xlu0 %v912, 17
      %v960 = vpop.permute.xlu0 %959
      %961 = vrot.lane.b32.xlu0 %v913, 17
      %v962 = vpop.permute.xlu0 %961
      %963 = vrot.lane.b32.xlu0 %v914, 17
      %v964 = vpop.permute.xlu0 %963
      %965 = vrot.lane.b32.xlu0 %v915, 17
      %v966 = vpop.permute.xlu0 %965
      %967 = vrot.lane.b32.xlu0 %v916, 17
      %v968 = vpop.permute.xlu0 %967
      %969 = vrot.lane.b32.xlu0 %v917, 17
      %v970 = vpop.permute.xlu0 %969
      %971 = vrot.lane.b32.xlu0 %v918, 17
      %v972 = vpop.permute.xlu0 %971
      %973 = vrot.lane.b32.xlu0 %v919, 17
      %v974 = vpop.permute.xlu0 %973
      %975 = vrot.lane.b32.xlu0 %v920, 17
      %v976 = vpop.permute.xlu0 %975
      %977 = vrot.lane.b32.xlu0 %v921, 17
      %v978 = vpop.permute.xlu0 %977
      %979 = vrot.lane.b32.xlu0 %v922, 17
      %v980 = vpop.permute.xlu0 %979
      %981 = vrot.lane.b32.xlu0 %v923, 17
      %v982 = vpop.permute.xlu0 %981
      %983 = vrot.lane.b32.xlu0 %v924, 17
      %v984 = vpop.permute.xlu0 %983
      %985 = vrot.lane.b32.xlu0 %v925, 17
      %v986 = vpop.permute.xlu0 %985
      %987 = vrot.lane.b32.xlu0 %v926, 17
      %v988 = vpop.permute.xlu0 %987
      %vm989 = vcmask 138240
      %v990 = vsel %vm989, %v960, %v962
      %v991 = vsel %vm989, %v962, %v964
      %v992 = vsel %vm989, %v966, %v968
      %v993 = vsel %vm989, %v968, %v970
      %v994 = vsel %vm989, %v972, %v974
      %v995 = vsel %vm989, %v974, %v976
      %v996 = vsel %vm989, %v978, %v980
      %v997 = vsel %vm989, %v980, %v982
      %v998 = vsel %vm989, %v984, %v986
      %v999 = vsel %vm989, %v986, %v988
      %vm1010 = vcmask 654336
      %v1012 = vsel %vm1010, %v943, 0
      %1014 = vmatprep.subr.bf16.mxu0 %v991
      %1015 = vmatpush1.bf16.msra.mxu0 %v990
      %1016 = vmatprep.subr.bf16.mxu0 %v993
      %1017 = vmatpush1.bf16.msra.mxu0 %v992
      %1018 = vmatprep.subr.bf16.mxu0 %v995
      %1019 = vmatpush1.bf16.msra.mxu0 %v994
      %1020 = vmatprep.subr.bf16.mxu0 %v997
      %1021 = vmatpush1.bf16.msra.mxu0 %v996
      %1022 = vmatprep.subr.bf16.mxu0 %v999
      %1023 = vmatpush1.bf16.msra.mxu0 %v998
      %1024 = vmatprep.subr.bf16.mxu0 0
      %1025 = vmatpush1.bf16.msra.mxu0 0
      %1026 = vmatprep.subr.bf16.mxu0 0
      %1027 = vmatpush1.bf16.msra.mxu0 0
      %1028 = vmatprep.subr.bf16.mxu0 0
      %1029 = vmatpush1.bf16.msra.mxu0 0
      %1030 = vmatprep.subr.bf16.mxu0 0
      %1031 = vmatpush1.bf16.msra.mxu0 0
      %1032 = vmatprep.subr.bf16.mxu0 0
      %1033 = vmatpush1.bf16.msra.mxu0 0
      %1034 = vmatprep.subr.bf16.mxu0 0
      %1035 = vmatpush1.bf16.msra.mxu0 0
      %1036 = vmatprep.subr.bf16.mxu0 0
      %1037 = vmatpush1.bf16.msra.mxu0 0
      %1038 = vmatprep.subr.bf16.mxu0 0
      %1039 = vmatpush1.bf16.msra.mxu0 0
      %1040 = vmatprep.subr.bf16.mxu0 0
      %1041 = vmatpush1.bf16.msra.mxu0 0
      %1042 = vmatprep.subr.bf16.mxu0 0
      %1043 = vmatpush1.bf16.msra.mxu0 0
      %1044 = vmatprep.subr.bf16.mxu0 0
      %1045 = vmatpush1.bf16.msra.mxu0 0
      %1046 = vmatprep.mubr.bf16.mxu0 0
      %1047 = vmatmul.mubr.bf16.gmra.mrb[0].mxu0 %v1012
      %v1048 = vpop.f32.mrb[0].mxu0
      %v1049 = vadd.f32 %v932, %v1048
      %v1050 = vpop.f32.mrb[0].mxu0
      %v1051 = vadd.f32 %v932, %v1050
      %v1052 = vpop.f32.mrb[0].mxu0
      %v1053 = vadd.f32 %v937, %v1052
      %v1054 = vpop.f32.mrb[0].mxu0
      %v1055 = vadd.f32 %v937, %v1054
      %1056 = vdwg.mxu0
      %v1057 = vmax.f32 %v1049, 0.0
      %v1058 = vmax.f32 %v1051, 0.0
      %v1059 = vmax.f32 %v1053, 0.0
      %v1060 = vmax.f32 %v1055, 0.0
      %v1061 = vld [vmem:[%s8] sm:$0xf]
      %v1062 = vld [vmem:[%s8 + $0x4] sm:$0xf]
      %v1063 = vld [vmem:[%s8 + $0x8] sm:$0xf]
      %v1064 = vld [vmem:[%s8 + $0xc] sm:$0xf]
      %v1065 = vld [vmem:[%s9] sm:$0xff]
      %v1066 = vld [vmem:[%s9 + $0x8] sm:$0xff]
      %v1067 = vld [vmem:[%s9 + $0x10] sm:$0xff]
      %v1068 = vld [vmem:[%s9 + $0x18] sm:$0xff]
      %v1069 = vpack.c.bf16 %v1059, %v1057
      %v1070 = vpack.c.bf16 %v1060, %v1058
      %1072 = vset.pattern.permute.xlu0 0
      %1073 = vperm.xlu0 %1072, %v1065
      %v1074 = vpop.permute.xlu0 %1073
      %1077 = vset.pattern.permute.xlu0 0
      %1078 = vperm.xlu0 %1077, %v1066
      %v1079 = vpop.permute.xlu0 %1078
      %1082 = vset.pattern.permute.xlu0 0
      %1083 = vperm.xlu0 %1082, %v1067
      %v1084 = vpop.permute.xlu0 %1083
      %1087 = vset.pattern.permute.xlu0 0
      %1088 = vperm.xlu0 %1087, %v1068
      %v1089 = vpop.permute.xlu0 %1088
      %v1095 = vunpack.c.l.b16 %v1061
      %v1096 = vunpack.c.l.b16 %v1062
      %v1097 = vunpack.c.l.b16 %v1063
      %v1098 = vunpack.c.l.b16 %v1064
      %v1099 = vpack.c.b16 %v1096, %v1095
      %v1100 = vpack.c.b16 %v1098, %v1097
      %vm1101 = vcmask 130048
      %v1103 = vsel %vm1101, %v1099, 0
      %v1106 = vsel %vm1101, %v1100, 0
      %1108 = vmatprep.subr.bf16.mxu0 %v1070
      %1109 = vmatpush1.bf16.msra.mxu0 %v1069
      %1110 = vmatprep.subr.bf16.mxu0 0
      %1111 = vmatpush1.bf16.msra.mxu0 0
      %1112 = vmatprep.subr.bf16.mxu0 0
      %1113 = vmatpush1.bf16.msra.mxu0 0
      %1114 = vmatprep.subr.bf16.mxu0 0
      %1115 = vmatpush1.bf16.msra.mxu0 0
      %1116 = vmatprep.subr.bf16.mxu0 0
      %1117 = vmatpush1.bf16.msra.mxu0 0
      %1118 = vmatprep.subr.bf16.mxu0 0
      %1119 = vmatpush1.bf16.msra.mxu0 0
      %1120 = vmatprep.subr.bf16.mxu0 0
      %1121 = vmatpush1.bf16.msra.mxu0 0
      %1122 = vmatprep.subr.bf16.mxu0 0
      %1123 = vmatpush1.bf16.msra.mxu0 0
      %1124 = vmatprep.subr.bf16.mxu0 0
      %1125 = vmatpush1.bf16.msra.mxu0 0
      %1126 = vmatprep.subr.bf16.mxu0 0
      %1127 = vmatpush1.bf16.msra.mxu0 0
      %1128 = vmatprep.subr.bf16.mxu0 0
      %1129 = vmatpush1.bf16.msra.mxu0 0
      %1130 = vmatprep.subr.bf16.mxu0 0
      %1131 = vmatpush1.bf16.msra.mxu0 0
      %1132 = vmatprep.subr.bf16.mxu0 0
      %1133 = vmatpush1.bf16.msra.mxu0 0
      %1134 = vmatprep.subr.bf16.mxu0 0
      %1135 = vmatpush1.bf16.msra.mxu0 0
      %1136 = vmatprep.subr.bf16.mxu0 0
      %1137 = vmatpush1.bf16.msra.mxu0 0
      %1138 = vmatprep.subr.bf16.mxu0 0
      %1139 = vmatpush1.bf16.msra.mxu0 0
      %1140 = vmatprep.mubr.bf16.mxu0 0
      %1141 = vmatmul.mubr.bf16.gmra.mrb[0].mxu0 %v1103
      %v1142 = vpop.f32.mrb[0].mxu0
      %v1143 = vadd.f32 %v1074, %v1142
      %v1144 = vpop.f32.mrb[0].mxu0
      %v1145 = vadd.f32 %v1074, %v1144
      %v1146 = vpop.f32.mrb[0].mxu0
      %v1147 = vadd.f32 %v1079, %v1146
      %v1148 = vpop.f32.mrb[0].mxu0
      %v1149 = vadd.f32 %v1079, %v1148
      %1150 = vmatprep.mubr.bf16.mxu0 0
      %1151 = vmatmul.mubr.bf16.gmra.mrb[0].mxu0 %v1106
      %v1152 = vpop.f32.mrb[0].mxu0
      %v1153 = vadd.f32 %v1084, %v1152
      %v1154 = vpop.f32.mrb[0].mxu0
      %v1155 = vadd.f32 %v1084, %v1154
      %v1156 = vpop.f32.mrb[0].mxu0
      %v1157 = vadd.f32 %v1089, %v1156
      %v1158 = vpop.f32.mrb[0].mxu0
      %v1159 = vadd.f32 %v1089, %v1158
      %1160 = vdwg.mxu0
      %v1161 = vmax.f32 %v1143, 0.0
      %v1162 = vmax.f32 %v1145, 0.0
      %v1163 = vmax.f32 %v1147, 0.0
      %v1164 = vmax.f32 %v1149, 0.0
      %v1165 = vmax.f32 %v1153, 0.0
      %v1166 = vmax.f32 %v1155, 0.0
      %v1167 = vmax.f32 %v1157, 0.0
      %v1168 = vmax.f32 %v1159, 0.0
      %v1169 = vadd.f32 %v617, %v1161
      %v1170 = vadd.f32 %v618, %v1162
      %v1171 = vadd.f32 %v619, %v1163
      %v1172 = vadd.f32 %v620, %v1164
      %v1173 = vadd.f32 %v621, %v1165
      %v1174 = vadd.f32 %v622, %v1166
      %v1175 = vadd.f32 %v623, %v1167
      %v1176 = vadd.f32 %v624, %v1168
      %s1177 = scalar_lea.vmem %s4, 8
      %v1178 = vld [vmem:[%s1177] sm:$0xf]
      %v1179 = vld [vmem:[%s1177 + $0x4] sm:$0xf]
      %s1180 = scalar_lea.vmem %s5, 16
      %v1181 = vld [vmem:[%s1180] sm:$0xff]
      %v1182 = vld [vmem:[%s1180 + $0x8] sm:$0xff]
      %v1183 = vpack.c.bf16 %v1171, %v1169
      %v1184 = vpack.c.bf16 %v1172, %v1170
      %v1185 = vpack.c.bf16 %v1175, %v1173
      %v1186 = vpack.c.bf16 %v1176, %v1174
      %1188 = vset.pattern.permute.xlu0 0
      %1189 = vperm.xlu0 %1188, %v1181
      %v1190 = vpop.permute.xlu0 %1189
      %1193 = vset.pattern.permute.xlu0 0
      %1194 = vperm.xlu0 %1193, %v1182
      %v1195 = vpop.permute.xlu0 %1194
      %v1199 = vunpack.c.l.b16 %v1178
      %v1200 = vunpack.c.l.b16 %v1179
      %v1201 = vpack.c.b16 %v1200, %v1199
      %v1203 = vsel %vm648, %v1201, 0
      %1205 = vmatprep.subr.bf16.mxu0 %v1184
      %1206 = vmatpush1.bf16.msra.mxu0 %v1183
      %1207 = vmatprep.subr.bf16.mxu0 %v1186
      %1208 = vmatpush1.bf16.msra.mxu0 %v1185
      %1209 = vmatprep.subr.bf16.mxu0 0
      %1210 = vmatpush1.bf16.msra.mxu0 0
      %1211 = vmatprep.subr.bf16.mxu0 0
      %1212 = vmatpush1.bf16.msra.mxu0 0
      %1213 = vmatprep.subr.bf16.mxu0 0
      %1214 = vmatpush1.bf16.msra.mxu0 0
      %1215 = vmatprep.subr.bf16.mxu0 0
      %1216 = vmatpush1.bf16.msra.mxu0 0
      %1217 = vmatprep.subr.bf16.mxu0 0
      %1218 = vmatpush1.bf16.msra.mxu0 0
      %1219 = vmatprep.subr.bf16.mxu0 0
      %1220 = vmatpush1.bf16.msra.mxu0 0
      %1221 = vmatprep.subr.bf16.mxu0 0
      %1222 = vmatpush1.bf16.msra.mxu0 0
      %1223 = vmatprep.subr.bf16.mxu0 0
      %1224 = vmatpush1.bf16.msra.mxu0 0
      %1225 = vmatprep.subr.bf16.mxu0 0
      %1226 = vmatpush1.bf16.msra.mxu0 0
      %1227 = vmatprep.subr.bf16.mxu0 0
      %1228 = vmatpush1.bf16.msra.mxu0 0
      %1229 = vmatprep.subr.bf16.mxu0 0
      %1230 = vmatpush1.bf16.msra.mxu0 0
      %1231 = vmatprep.subr.bf16.mxu0 0
      %1232 = vmatpush1.bf16.msra.mxu0 0
      %1233 = vmatprep.subr.bf16.mxu0 0
      %1234 = vmatpush1.bf16.msra.mxu0 0
      %1235 = vmatprep.subr.bf16.mxu0 0
      %1236 = vmatpush1.bf16.msra.mxu0 0
      %1237 = vmatprep.mubr.bf16.mxu0 0
      %1238 = vmatmul.mubr.bf16.gmra.mrb[0].mxu0 %v1203
      %v1239 = vpop.f32.mrb[0].mxu0
      %v1240 = vadd.f32 %v1190, %v1239
      %v1241 = vpop.f32.mrb[0].mxu0
      %v1242 = vadd.f32 %v1190, %v1241
      %v1243 = vpop.f32.mrb[0].mxu0
      %v1244 = vadd.f32 %v1195, %v1243
      %v1245 = vpop.f32.mrb[0].mxu0
      %v1246 = vadd.f32 %v1195, %v1245
      %1247 = vdwg.mxu0
      %v1248 = vmax.f32 %v1240, 0.0
      %v1249 = vmax.f32 %v1242, 0.0
      %v1250 = vmax.f32 %v1244, 0.0
      %v1251 = vmax.f32 %v1246, 0.0
      %s1252 = scalar_lea.vmem %s6, 8
      %v1253 = vld [vmem:[%s1252] sm:$0xf]
      %v1254 = vld [vmem:[%s1252 + $0x4] sm:$0xf]
      %1255 = vst [vmem:[#allocation2 + $0x8] sm:$0xff] %v1248
      %1256 = vst [vmem:[#allocation2 + $0x10] sm:$0xff] %v1249
      %1257 = vst [vmem:[#allocation2 + $0x20] sm:$0xff] %v1250
      %1258 = vst [vmem:[#allocation2 + $0x28] sm:$0xff] %v1251
      %v1259 = vld [vmem:[#allocation2] sm:$0xff]
      %v1260 = vld [vmem:[#allocation2 + $0x8] sm:$0xff]
      %v1261 = vld [vmem:[#allocation2 + $0x10] sm:$0xff]
      %v1262 = vld [vmem:[#allocation2 + $0x18] sm:$0xff]
      %v1263 = vld [vmem:[#allocation2 + $0x20] sm:$0xff]
      %v1264 = vld [vmem:[#allocation2 + $0x28] sm:$0xff]
      %v1265 = vmul.f32 %v1259, %v721
      %v1266 = vmul.f32 %v1260, %v725
      %v1267 = vmul.f32 %v1261, %v723
      %v1268 = vmul.f32 %v1262, %v721
      %v1269 = vmul.f32 %v1263, %v725
      %v1270 = vmul.f32 %v1264, %v723
      %v1271 = vmul.f32 %v1259, %v745
      %v1272 = vmul.f32 %v1260, %v749
      %v1273 = vmul.f32 %v1261, %v747
      %v1274 = vmul.f32 %v1262, %v745
      %v1275 = vmul.f32 %v1263, %v749
      %v1276 = vmul.f32 %v1264, %v747
      %v1277 = vmul.f32 %v1259, %v769
      %v1278 = vmul.f32 %v1260, %v773
      %v1279 = vmul.f32 %v1261, %v771
      %v1280 = vmul.f32 %v1262, %v769
      %v1281 = vmul.f32 %v1263, %v773
      %v1282 = vmul.f32 %v1264, %v771
      %v1283 = vmul.f32 %v1259, %v793
      %v1284 = vmul.f32 %v1260, %v797
      %v1285 = vmul.f32 %v1261, %v795
      %v1286 = vmul.f32 %v1262, %v793
      %v1287 = vmul.f32 %v1263, %v797
      %v1288 = vmul.f32 %v1264, %v795
      %1295 = vrot.lane.b32.xlu0 %v1271, 127
      %v1296 = vpop.permute.xlu0 %1295
      %1297 = vrot.lane.b32.xlu0 %v1272, 127
      %v1298 = vpop.permute.xlu0 %1297
      %1299 = vrot.lane.b32.xlu0 %v1273, 127
      %v1300 = vpop.permute.xlu0 %1299
      %1301 = vrot.lane.b32.xlu0 %v1274, 127
      %v1302 = vpop.permute.xlu0 %1301
      %1303 = vrot.lane.b32.xlu0 %v1275, 127
      %v1304 = vpop.permute.xlu0 %1303
      %1305 = vrot.lane.b32.xlu0 %v1276, 127
      %v1306 = vpop.permute.xlu0 %1305
      %v1307 = vsel %vm796, %v1296, %v1298
      %v1308 = vsel %vm796, %v1298, %v1300
      %v1309 = vsel %vm796, %v1302, %v1304
      %v1310 = vsel %vm796, %v1304, %v1306
      %1323 = vrot.lane.b32.xlu0 %v1277, 126
      %v1324 = vpop.permute.xlu0 %1323
      %1325 = vrot.lane.b32.xlu0 %v1278, 126
      %v1326 = vpop.permute.xlu0 %1325
      %1327 = vrot.lane.b32.xlu0 %v1279, 126
      %v1328 = vpop.permute.xlu0 %1327
      %1329 = vrot.lane.b32.xlu0 %v1280, 126
      %v1330 = vpop.permute.xlu0 %1329
      %1331 = vrot.lane.b32.xlu0 %v1281, 126
      %v1332 = vpop.permute.xlu0 %1331
      %1333 = vrot.lane.b32.xlu0 %v1282, 126
      %v1334 = vpop.permute.xlu0 %1333
      %v1335 = vsel %vm853, %v1324, %v1326
      %v1336 = vsel %vm853, %v1326, %v1328
      %v1337 = vsel %vm853, %v1330, %v1332
      %v1338 = vsel %vm853, %v1332, %v1334
      %1351 = vrot.lane.b32.xlu0 %v1283, 112
      %v1352 = vpop.permute.xlu0 %1351
      %1353 = vrot.lane.b32.xlu0 %v1284, 112
      %v1354 = vpop.permute.xlu0 %1353
      %1355 = vrot.lane.b32.xlu0 %v1285, 112
      %v1356 = vpop.permute.xlu0 %1355
      %1357 = vrot.lane.b32.xlu0 %v1286, 112
      %v1358 = vpop.permute.xlu0 %1357
      %1359 = vrot.lane.b32.xlu0 %v1287, 112
      %v1360 = vpop.permute.xlu0 %1359
      %1361 = vrot.lane.b32.xlu0 %v1288, 112
      %v1362 = vpop.permute.xlu0 %1361
      %v1363 = vsel %vm748, %v1352, %v1354
      %v1364 = vsel %vm748, %v1354, %v1356
      %v1365 = vsel %vm748, %v1358, %v1360
      %v1366 = vsel %vm748, %v1360, %v1362
      %1377 = vrot.lane.b32.xlu0 %v1248, 111
      %v1378 = vpop.permute.xlu0 %1377
      %1379 = vrot.lane.b32.xlu0 %v1249, 111
      %v1380 = vpop.permute.xlu0 %1379
      %1381 = vrot.lane.b32.xlu0 %v1250, 111
      %v1382 = vpop.permute.xlu0 %1381
      %1383 = vrot.lane.b32.xlu0 %v1251, 111
      %v1384 = vpop.permute.xlu0 %1383
      %v1385 = vsel %vm724, %v1378, %v1380
      %v1386 = vsel %vm724, %v1382, %v1384
      %v1393 = vpack.c.bf16 %v1268, %v1265
      %v1394 = vpack.c.bf16 %v1269, %v1266
      %v1395 = vpack.c.bf16 %v1270, %v1267
      %v1396 = vpack.c.bf16 %v1309, %v1307
      %v1397 = vpack.c.bf16 %v1310, %v1308
      %v1398 = vpack.c.bf16 %v1306, %v1300
      %v1399 = vpack.c.bf16 %v1337, %v1335
      %v1400 = vpack.c.bf16 %v1338, %v1336
      %v1401 = vpack.c.bf16 %v1334, %v1328
      %v1402 = vpack.c.bf16 %v1365, %v1363
      %v1403 = vpack.c.bf16 %v1366, %v1364
      %v1404 = vpack.c.bf16 %v1362, %v1356
      %v1405 = vpack.c.bf16 %v1382, %v1378
      %v1406 = vpack.c.bf16 %v1386, %v1385
      %v1407 = vpack.c.bf16 %v1384, %v1380
      %s1408 = scalar_lea.vmem %s7, 16
      %v1409 = vld [vmem:[%s1408] sm:$0xff]
      %v1410 = vld [vmem:[%s1408 + $0x8] sm:$0xff]
      %1412 = vset.pattern.permute.xlu0 0
      %1413 = vperm.xlu0 %1412, %v1409
      %v1414 = vpop.permute.xlu0 %1413
      %1417 = vset.pattern.permute.xlu0 0
      %1418 = vperm.xlu0 %1417, %v1410
      %v1419 = vpop.permute.xlu0 %1418
      %v1423 = vunpack.c.l.b16 %v1253
      %v1424 = vunpack.c.l.b16 %v1254
      %v1425 = vpack.c.b16 %v1424, %v1423
      %1441 = vrot.lane.b32.xlu0 %v1393, 17
      %v1442 = vpop.permute.xlu0 %1441
      %1443 = vrot.lane.b32.xlu0 %v1394, 17
      %v1444 = vpop.permute.xlu0 %1443
      %1445 = vrot.lane.b32.xlu0 %v1395, 17
      %v1446 = vpop.permute.xlu0 %1445
      %1447 = vrot.lane.b32.xlu0 %v1396, 17
      %v1448 = vpop.permute.xlu0 %1447
      %1449 = vrot.lane.b32.xlu0 %v1397, 17
      %v1450 = vpop.permute.xlu0 %1449
      %1451 = vrot.lane.b32.xlu0 %v1398, 17
      %v1452 = vpop.permute.xlu0 %1451
      %1453 = vrot.lane.b32.xlu0 %v1399, 17
      %v1454 = vpop.permute.xlu0 %1453
      %1455 = vrot.lane.b32.xlu0 %v1400, 17
      %v1456 = vpop.permute.xlu0 %1455
      %1457 = vrot.lane.b32.xlu0 %v1401, 17
      %v1458 = vpop.permute.xlu0 %1457
      %1459 = vrot.lane.b32.xlu0 %v1402, 17
      %v1460 = vpop.permute.xlu0 %1459
      %1461 = vrot.lane.b32.xlu0 %v1403, 17
      %v1462 = vpop.permute.xlu0 %1461
      %1463 = vrot.lane.b32.xlu0 %v1404, 17
      %v1464 = vpop.permute.xlu0 %1463
      %1465 = vrot.lane.b32.xlu0 %v1405, 17
      %v1466 = vpop.permute.xlu0 %1465
      %1467 = vrot.lane.b32.xlu0 %v1406, 17
      %v1468 = vpop.permute.xlu0 %1467
      %1469 = vrot.lane.b32.xlu0 %v1407, 17
      %v1470 = vpop.permute.xlu0 %1469
      %v1471 = vsel %vm989, %v1442, %v1444
      %v1472 = vsel %vm989, %v1444, %v1446
      %v1473 = vsel %vm989, %v1448, %v1450
      %v1474 = vsel %vm989, %v1450, %v1452
      %v1475 = vsel %vm989, %v1454, %v1456
      %v1476 = vsel %vm989, %v1456, %v1458
      %v1477 = vsel %vm989, %v1460, %v1462
      %v1478 = vsel %vm989, %v1462, %v1464
      %v1479 = vsel %vm989, %v1466, %v1468
      %v1480 = vsel %vm989, %v1468, %v1470
      %v1492 = vsel %vm1010, %v1425, 0
      %1494 = vmatprep.subr.bf16.mxu0 %v1472
      %1495 = vmatpush1.bf16.msra.mxu0 %v1471
      %1496 = vmatprep.subr.bf16.mxu0 %v1474
      %1497 = vmatpush1.bf16.msra.mxu0 %v1473
      %1498 = vmatprep.subr.bf16.mxu0 %v1476
      %1499 = vmatpush1.bf16.msra.mxu0 %v1475
      %1500 = vmatprep.subr.bf16.mxu0 %v1478
      %1501 = vmatpush1.bf16.msra.mxu0 %v1477
      %1502 = vmatprep.subr.bf16.mxu0 %v1480
      %1503 = vmatpush1.bf16.msra.mxu0 %v1479
      %1504 = vmatprep.subr.bf16.mxu0 0
      %1505 = vmatpush1.bf16.msra.mxu0 0
      %1506 = vmatprep.subr.bf16.mxu0 0
      %1507 = vmatpush1.bf16.msra.mxu0 0
      %1508 = vmatprep.subr.bf16.mxu0 0
      %1509 = vmatpush1.bf16.msra.mxu0 0
      %1510 = vmatprep.subr.bf16.mxu0 0
      %1511 = vmatpush1.bf16.msra.mxu0 0
      %1512 = vmatprep.subr.bf16.mxu0 0
      %1513 = vmatpush1.bf16.msra.mxu0 0
      %1514 = vmatprep.subr.bf16.mxu0 0
      %1515 = vmatpush1.bf16.msra.mxu0 0
      %1516 = vmatprep.subr.bf16.mxu0 0
      %1517 = vmatpush1.bf16.msra.mxu0 0
      %1518 = vmatprep.subr.bf16.mxu0 0
      %1519 = vmatpush1.bf16.msra.mxu0 0
      %1520 = vmatprep.subr.bf16.mxu0 0
      %1521 = vmatpush1.bf16.msra.mxu0 0
      %1522 = vmatprep.subr.bf16.mxu0 0
      %1523 = vmatpush1.bf16.msra.mxu0 0
      %1524 = vmatprep.subr.bf16.mxu0 0
      %1525 = vmatpush1.bf16.msra.mxu0 0
      %1526 = vmatprep.mubr.bf16.mxu0 0
      %1527 = vmatmul.mubr.bf16.gmra.mrb[0].mxu0 %v1492
      %v1528 = vpop.f32.mrb[0].mxu0
      %v1529 = vadd.f32 %v1414, %v1528
      %v1530 = vpop.f32.mrb[0].mxu0
      %v1531 = vadd.f32 %v1414, %v1530
      %v1532 = vpop.f32.mrb[0].mxu0
      %v1533 = vadd.f32 %v1419, %v1532
      %v1534 = vpop.f32.mrb[0].mxu0
      %v1535 = vadd.f32 %v1419, %v1534
      %1536 = vdwg.mxu0
      %v1537 = vmax.f32 %v1529, 0.0
      %v1538 = vmax.f32 %v1531, 0.0
      %v1539 = vmax.f32 %v1533, 0.0
      %v1540 = vmax.f32 %v1535, 0.0
      %s1541 = scalar_lea.vmem %s8, 16
      %v1542 = vld [vmem:[%s1541] sm:$0xf]
      %v1543 = vld [vmem:[%s1541 + $0x4] sm:$0xf]
      %v1544 = vld [vmem:[%s1541 + $0x8] sm:$0xf]
      %v1545 = vld [vmem:[%s1541 + $0xc] sm:$0xf]
      %s1546 = scalar_lea.vmem %s9, 32
      %v1547 = vld [vmem:[%s1546] sm:$0xff]
      %v1548 = vld [vmem:[%s1546 + $0x8] sm:$0xff]
      %v1549 = vld [vmem:[%s1546 + $0x10] sm:$0xff]
      %v1550 = vld [vmem:[%s1546 + $0x18] sm:$0xff]
      %v1551 = vpack.c.bf16 %v1539, %v1537
      %v1552 = vpack.c.bf16 %v1540, %v1538
      %1554 = vset.pattern.permute.xlu0 0
      %1555 = vperm.xlu0 %1554, %v1547
      %v1556 = vpop.permute.xlu0 %1555
      %1559 = vset.pattern.permute.xlu0 0
      %1560 = vperm.xlu0 %1559, %v1548
      %v1561 = vpop.permute.xlu0 %1560
      %1564 = vset.pattern.permute.xlu0 0
      %1565 = vperm.xlu0 %1564, %v1549
      %v1566 = vpop.permute.xlu0 %1565
      %1569 = vset.pattern.permute.xlu0 0
      %1570 = vperm.xlu0 %1569, %v1550
      %v1571 = vpop.permute.xlu0 %1570
      %v1577 = vunpack.c.l.b16 %v1542
      %v1578 = vunpack.c.l.b16 %v1543
      %v1579 = vunpack.c.l.b16 %v1544
      %v1580 = vunpack.c.l.b16 %v1545
      %v1581 = vpack.c.b16 %v1578, %v1577
      %v1582 = vpack.c.b16 %v1580, %v1579
      %v1584 = vsel %vm1101, %v1581, 0
      %v1587 = vsel %vm1101, %v1582, 0
      %1589 = vmatprep.subr.bf16.mxu0 %v1552
      %1590 = vmatpush1.bf16.msra.mxu0 %v1551
      %1591 = vmatprep.subr.bf16.mxu0 0
      %1592 = vmatpush1.bf16.msra.mxu0 0
      %1593 = vmatprep.subr.bf16.mxu0 0
      %1594 = vmatpush1.bf16.msra.mxu0 0
      %1595 = vmatprep.subr.bf16.mxu0 0
      %1596 = vmatpush1.bf16.msra.mxu0 0
      %1597 = vmatprep.subr.bf16.mxu0 0
      %1598 = vmatpush1.bf16.msra.mxu0 0
      %1599 = vmatprep.subr.bf16.mxu0 0
      %1600 = vmatpush1.bf16.msra.mxu0 0
      %1601 = vmatprep.subr.bf16.mxu0 0
      %1602 = vmatpush1.bf16.msra.mxu0 0
      %1603 = vmatprep.subr.bf16.mxu0 0
      %1604 = vmatpush1.bf16.msra.mxu0 0
      %1605 = vmatprep.subr.bf16.mxu0 0
      %1606 = vmatpush1.bf16.msra.mxu0 0
      %1607 = vmatprep.subr.bf16.mxu0 0
      %1608 = vmatpush1.bf16.msra.mxu0 0
      %1609 = vmatprep.subr.bf16.mxu0 0
      %1610 = vmatpush1.bf16.msra.mxu0 0
      %1611 = vmatprep.subr.bf16.mxu0 0
      %1612 = vmatpush1.bf16.msra.mxu0 0
      %1613 = vmatprep.subr.bf16.mxu0 0
      %1614 = vmatpush1.bf16.msra.mxu0 0
      %1615 = vmatprep.subr.bf16.mxu0 0
      %1616 = vmatpush1.bf16.msra.mxu0 0
      %1617 = vmatprep.subr.bf16.mxu0 0
      %1618 = vmatpush1.bf16.msra.mxu0 0
      %1619 = vmatprep.subr.bf16.mxu0 0
      %1620 = vmatpush1.bf16.msra.mxu0 0
      %1621 = vmatprep.mubr.bf16.mxu0 0
      %1622 = vmatmul.mubr.bf16.gmra.mrb[0].mxu0 %v1584
      %v1623 = vpop.f32.mrb[0].mxu0
      %v1624 = vadd.f32 %v1556, %v1623
      %v1625 = vpop.f32.mrb[0].mxu0
      %v1626 = vadd.f32 %v1556, %v1625
      %v1627 = vpop.f32.mrb[0].mxu0
      %v1628 = vadd.f32 %v1561, %v1627
      %v1629 = vpop.f32.mrb[0].mxu0
      %v1630 = vadd.f32 %v1561, %v1629
      %1631 = vmatprep.mubr.bf16.mxu0 0
      %1632 = vmatmul.mubr.bf16.gmra.mrb[0].mxu0 %v1587
      %v1633 = vpop.f32.mrb[0].mxu0
      %v1634 = vadd.f32 %v1566, %v1633
      %v1635 = vpop.f32.mrb[0].mxu0
      %v1636 = vadd.f32 %v1566, %v1635
      %v1637 = vpop.f32.mrb[0].mxu0
      %v1638 = vadd.f32 %v1571, %v1637
      %v1639 = vpop.f32.mrb[0].mxu0
      %v1640 = vadd.f32 %v1571, %v1639
      %1641 = vdwg.mxu0
      %v1642 = vmax.f32 %v1624, 0.0
      %v1643 = vmax.f32 %v1626, 0.0
      %v1644 = vmax.f32 %v1628, 0.0
      %v1645 = vmax.f32 %v1630, 0.0
      %v1646 = vmax.f32 %v1634, 0.0
      %v1647 = vmax.f32 %v1636, 0.0
      %v1648 = vmax.f32 %v1638, 0.0
      %v1649 = vmax.f32 %v1640, 0.0
      %v1650 = vadd.f32 %v1169, %v1642
      %v1651 = vadd.f32 %v1170, %v1643
      %v1652 = vadd.f32 %v1171, %v1644
      %v1653 = vadd.f32 %v1172, %v1645
      %v1654 = vadd.f32 %v1173, %v1646
      %v1655 = vadd.f32 %v1174, %v1647
      %v1656 = vadd.f32 %v1175, %v1648
      %v1657 = vadd.f32 %v1176, %v1649
      %s1658 = scalar_lea.vmem %s4, 16
      %v1659 = vld [vmem:[%s1658] sm:$0xf]
      %v1660 = vld [vmem:[%s1658 + $0x4] sm:$0xf]
      %s1661 = scalar_lea.vmem %s5, 32
      %v1662 = vld [vmem:[%s1661] sm:$0xff]
      %v1663 = vld [vmem:[%s1661 + $0x8] sm:$0xff]
      %v1664 = vpack.c.bf16 %v1652, %v1650
      %v1665 = vpack.c.bf16 %v1653, %v1651
      %v1666 = vpack.c.bf16 %v1656, %v1654
      %v1667 = vpack.c.bf16 %v1657, %v1655
      %1669 = vset.pattern.permute.xlu0 0
      %1670 = vperm.xlu0 %1669, %v1662
      %v1671 = vpop.permute.xlu0 %1670
      %1674 = vset.pattern.permute.xlu0 0
      %1675 = vperm.xlu0 %1674, %v1663
      %v1676 = vpop.permute.xlu0 %1675
      %v1680 = vunpack.c.l.b16 %v1659
      %v1681 = vunpack.c.l.b16 %v1660
      %v1682 = vpack.c.b16 %v1681, %v1680
      %v1684 = vsel %vm648, %v1682, 0
      %1686 = vmatprep.subr.bf16.mxu0 %v1665
      %1687 = vmatpush1.bf16.msra.mxu0 %v1664
      %1688 = vmatprep.subr.bf16.mxu0 %v1667
      %1689 = vmatpush1.bf16.msra.mxu0 %v1666
      %1690 = vmatprep.subr.bf16.mxu0 0
      %1691 = vmatpush1.bf16.msra.mxu0 0
      %1692 = vmatprep.subr.bf16.mxu0 0
      %1693 = vmatpush1.bf16.msra.mxu0 0
      %1694 = vmatprep.subr.bf16.mxu0 0
      %1695 = vmatpush1.bf16.msra.mxu0 0
      %1696 = vmatprep.subr.bf16.mxu0 0
      %1697 = vmatpush1.bf16.msra.mxu0 0
      %1698 = vmatprep.subr.bf16.mxu0 0
      %1699 = vmatpush1.bf16.msra.mxu0 0
      %1700 = vmatprep.subr.bf16.mxu0 0
      %1701 = vmatpush1.bf16.msra.mxu0 0
      %1702 = vmatprep.subr.bf16.mxu0 0
      %1703 = vmatpush1.bf16.msra.mxu0 0
      %1704 = vmatprep.subr.bf16.mxu0 0
      %1705 = vmatpush1.bf16.msra.mxu0 0
      %1706 = vmatprep.subr.bf16.mxu0 0
      %1707 = vmatpush1.bf16.msra.mxu0 0
      %1708 = vmatprep.subr.bf16.mxu0 0
      %1709 = vmatpush1.bf16.msra.mxu0 0
      %1710 = vmatprep.subr.bf16.mxu0 0
      %1711 = vmatpush1.bf16.msra.mxu0 0
      %1712 = vmatprep.subr.bf16.mxu0 0
      %1713 = vmatpush1.bf16.msra.mxu0 0
      %1714 = vmatprep.subr.bf16.mxu0 0
      %1715 = vmatpush1.bf16.msra.mxu0 0
      %1716 = vmatprep.subr.bf16.mxu0 0
      %1717 = vmatpush1.bf16.msra.mxu0 0
      %1718 = vmatprep.mubr.bf16.mxu0 0
      %1719 = vmatmul.mubr.bf16.gmra.mrb[0].mxu0 %v1684
      %v1720 = vpop.f32.mrb[0].mxu0
      %v1721 = vadd.f32 %v1671, %v1720
      %v1722 = vpop.f32.mrb[0].mxu0
      %v1723 = vadd.f32 %v1671, %v1722
      %v1724 = vpop.f32.mrb[0].mxu0
      %v1725 = vadd.f32 %v1676, %v1724
      %v1726 = vpop.f32.mrb[0].mxu0
      %v1727 = vadd.f32 %v1676, %v1726
      %1728 = vdwg.mxu0
      %v1729 = vmax.f32 %v1721, 0.0
      %v1730 = vmax.f32 %v1723, 0.0
      %v1731 = vmax.f32 %v1725, 0.0
      %v1732 = vmax.f32 %v1727, 0.0
      %s1733 = scalar_lea.vmem %s6, 16
      %v1734 = vld [vmem:[%s1733] sm:$0xf]
      %v1735 = vld [vmem:[%s1733 + $0x4] sm:$0xf]
      %1736 = vst [vmem:[#allocation2 + $0x8] sm:$0xff] %v1729
      %1737 = vst [vmem:[#allocation2 + $0x10] sm:$0xff] %v1730
      %1738 = vst [vmem:[#allocation2 + $0x20] sm:$0xff] %v1731
      %1739 = vst [vmem:[#allocation2 + $0x28] sm:$0xff] %v1732
      %v1740 = vld [vmem:[#allocation2] sm:$0xff]
      %v1741 = vld [vmem:[#allocation2 + $0x8] sm:$0xff]
      %v1742 = vld [vmem:[#allocation2 + $0x10] sm:$0xff]
      %v1743 = vld [vmem:[#allocation2 + $0x18] sm:$0xff]
      %v1744 = vld [vmem:[#allocation2 + $0x20] sm:$0xff]
      %v1745 = vld [vmem:[#allocation2 + $0x28] sm:$0xff]
      %v1746 = vmul.f32 %v1740, %v721
      %v1747 = vmul.f32 %v1741, %v725
      %v1748 = vmul.f32 %v1742, %v723
      %v1749 = vmul.f32 %v1743, %v721
      %v1750 = vmul.f32 %v1744, %v725
      %v1751 = vmul.f32 %v1745, %v723
      %v1752 = vmul.f32 %v1740, %v745
      %v1753 = vmul.f32 %v1741, %v749
      %v1754 = vmul.f32 %v1742, %v747
      %v1755 = vmul.f32 %v1743, %v745
      %v1756 = vmul.f32 %v1744, %v749
      %v1757 = vmul.f32 %v1745, %v747
      %v1758 = vmul.f32 %v1740, %v769
      %v1759 = vmul.f32 %v1741, %v773
      %v1760 = vmul.f32 %v1742, %v771
      %v1761 = vmul.f32 %v1743, %v769
      %v1762 = vmul.f32 %v1744, %v773
      %v1763 = vmul.f32 %v1745, %v771
      %v1764 = vmul.f32 %v1740, %v793
      %v1765 = vmul.f32 %v1741, %v797
      %v1766 = vmul.f32 %v1742, %v795
      %v1767 = vmul.f32 %v1743, %v793
      %v1768 = vmul.f32 %v1744, %v797
      %v1769 = vmul.f32 %v1745, %v795
      %1776 = vrot.lane.b32.xlu0 %v1752, 127
      %v1777 = vpop.permute.xlu0 %1776
      %1778 = vrot.lane.b32.xlu0 %v1753, 127
      %v1779 = vpop.permute.xlu0 %1778
      %1780 = vrot.lane.b32.xlu0 %v1754, 127
      %v1781 = vpop.permute.xlu0 %1780
      %1782 = vrot.lane.b32.xlu0 %v1755, 127
      %v1783 = vpop.permute.xlu0 %1782
      %1784 = vrot.lane.b32.xlu0 %v1756, 127
      %v1785 = vpop.permute.xlu0 %1784
      %1786 = vrot.lane.b32.xlu0 %v1757, 127
      %v1787 = vpop.permute.xlu0 %1786
      %v1788 = vsel %vm796, %v1777, %v1779
      %v1789 = vsel %vm796, %v1779, %v1781
      %v1790 = vsel %vm796, %v1783, %v1785
      %v1791 = vsel %vm796, %v1785, %v1787
      %1804 = vrot.lane.b32.xlu0 %v1758, 126
      %v1805 = vpop.permute.xlu0 %1804
      %1806 = vrot.lane.b32.xlu0 %v1759, 126
      %v1807 = vpop.permute.xlu0 %1806
      %1808 = vrot.lane.b32.xlu0 %v1760, 126
      %v1809 = vpop.permute.xlu0 %1808
      %1810 = vrot.lane.b32.xlu0 %v1761, 126
      %v1811 = vpop.permute.xlu0 %1810
      %1812 = vrot.lane.b32.xlu0 %v1762, 126
      %v1813 = vpop.permute.xlu0 %1812
      %1814 = vrot.lane.b32.xlu0 %v1763, 126
      %v1815 = vpop.permute.xlu0 %1814
      %v1816 = vsel %vm853, %v1805, %v1807
      %v1817 = vsel %vm853, %v1807, %v1809
      %v1818 = vsel %vm853, %v1811, %v1813
      %v1819 = vsel %vm853, %v1813, %v1815
      %1832 = vrot.lane.b32.xlu0 %v1764, 112
      %v1833 = vpop.permute.xlu0 %1832
      %1834 = vrot.lane.b32.xlu0 %v1765, 112
      %v1835 = vpop.permute.xlu0 %1834
      %1836 = vrot.lane.b32.xlu0 %v1766, 112
      %v1837 = vpop.permute.xlu0 %1836
      %1838 = vrot.lane.b32.xlu0 %v1767, 112
      %v1839 = vpop.permute.xlu0 %1838
      %1840 = vrot.lane.b32.xlu0 %v1768, 112
      %v1841 = vpop.permute.xlu0 %1840
      %1842 = vrot.lane.b32.xlu0 %v1769, 112
      %v1843 = vpop.permute.xlu0 %1842
      %v1844 = vsel %vm748, %v1833, %v1835
      %v1845 = vsel %vm748, %v1835, %v1837
      %v1846 = vsel %vm748, %v1839, %v1841
      %v1847 = vsel %vm748, %v1841, %v1843
      %1858 = vrot.lane.b32.xlu0 %v1729, 111
      %v1859 = vpop.permute.xlu0 %1858
      %1860 = vrot.lane.b32.xlu0 %v1730, 111
      %v1861 = vpop.permute.xlu0 %1860
      %1862 = vrot.lane.b32.xlu0 %v1731, 111
      %v1863 = vpop.permute.xlu0 %1862
      %1864 = vrot.lane.b32.xlu0 %v1732, 111
      %v1865 = vpop.permute.xlu0 %1864
      %v1866 = vsel %vm724, %v1859, %v1861
      %v1867 = vsel %vm724, %v1863, %v1865
      %v1874 = vpack.c.bf16 %v1749, %v1746
      %v1875 = vpack.c.bf16 %v1750, %v1747
      %v1876 = vpack.c.bf16 %v1751, %v1748
      %v1877 = vpack.c.bf16 %v1790, %v1788
      %v1878 = vpack.c.bf16 %v1791, %v1789
      %v1879 = vpack.c.bf16 %v1787, %v1781
      %v1880 = vpack.c.bf16 %v1818, %v1816
      %v1881 = vpack.c.bf16 %v1819, %v1817
      %v1882 = vpack.c.bf16 %v1815, %v1809
      %v1883 = vpack.c.bf16 %v1846, %v1844
      %v1884 = vpack.c.bf16 %v1847, %v1845
      %v1885 = vpack.c.bf16 %v1843, %v1837
      %v1886 = vpack.c.bf16 %v1863, %v1859
      %v1887 = vpack.c.bf16 %v1867, %v1866
      %v1888 = vpack.c.bf16 %v1865, %v1861
      %s1889 = scalar_lea.vmem %s7, 32
      %v1890 = vld [vmem:[%s1889] sm:$0xff]
      %v1891 = vld [vmem:[%s1889 + $0x8] sm:$0xff]
      %1893 = vset.pattern.permute.xlu0 0
      %1894 = vperm.xlu0 %1893, %v1890
      %v1895 = vpop.permute.xlu0 %1894
      %1898 = vset.pattern.permute.xlu0 0
      %1899 = vperm.xlu0 %1898, %v1891
      %v1900 = vpop.permute.xlu0 %1899
      %v1904 = vunpack.c.l.b16 %v1734
      %v1905 = vunpack.c.l.b16 %v1735
      %v1906 = vpack.c.b16 %v1905, %v1904
      %1922 = vrot.lane.b32.xlu0 %v1874, 17
      %v1923 = vpop.permute.xlu0 %1922
      %1924 = vrot.lane.b32.xlu0 %v1875, 17
      %v1925 = vpop.permute.xlu0 %1924
      %1926 = vrot.lane.b32.xlu0 %v1876, 17
      %v1927 = vpop.permute.xlu0 %1926
      %1928 = vrot.lane.b32.xlu0 %v1877, 17
      %v1929 = vpop.permute.xlu0 %1928
      %1930 = vrot.lane.b32.xlu0 %v1878, 17
      %v1931 = vpop.permute.xlu0 %1930
      %1932 = vrot.lane.b32.xlu0 %v1879, 17
      %v1933 = vpop.permute.xlu0 %1932
      %1934 = vrot.lane.b32.xlu0 %v1880, 17
      %v1935 = vpop.permute.xlu0 %1934
      %1936 = vrot.lane.b32.xlu0 %v1881, 17
      %v1937 = vpop.permute.xlu0 %1936
      %1938 = vrot.lane.b32.xlu0 %v1882, 17
      %v1939 = vpop.permute.xlu0 %1938
      %1940 = vrot.lane.b32.xlu0 %v1883, 17
      %v1941 = vpop.permute.xlu0 %1940
      %1942 = vrot.lane.b32.xlu0 %v1884, 17
      %v1943 = vpop.permute.xlu0 %1942
      %1944 = vrot.lane.b32.xlu0 %v1885, 17
      %v1945 = vpop.permute.xlu0 %1944
      %1946 = vrot.lane.b32.xlu0 %v1886, 17
      %v1947 = vpop.permute.xlu0 %1946
      %1948 = vrot.lane.b32.xlu0 %v1887, 17
      %v1949 = vpop.permute.xlu0 %1948
      %1950 = vrot.lane.b32.xlu0 %v1888, 17
      %v1951 = vpop.permute.xlu0 %1950
      %v1952 = vsel %vm989, %v1923, %v1925
      %v1953 = vsel %vm989, %v1925, %v1927
      %v1954 = vsel %vm989, %v1929, %v1931
      %v1955 = vsel %vm989, %v1931, %v1933
      %v1956 = vsel %vm989, %v1935, %v1937
      %v1957 = vsel %vm989, %v1937, %v1939
      %v1958 = vsel %vm989, %v1941, %v1943
      %v1959 = vsel %vm989, %v1943, %v1945
      %v1960 = vsel %vm989, %v1947, %v1949
      %v1961 = vsel %vm989, %v1949, %v1951
      %v1973 = vsel %vm1010, %v1906, 0
      %1975 = vmatprep.subr.bf16.mxu0 %v1953
      %1976 = vmatpush1.bf16.msra.mxu0 %v1952
      %1977 = vmatprep.subr.bf16.mxu0 %v1955
      %1978 = vmatpush1.bf16.msra.mxu0 %v1954
      %1979 = vmatprep.subr.bf16.mxu0 %v1957
      %1980 = vmatpush1.bf16.msra.mxu0 %v1956
      %1981 = vmatprep.subr.bf16.mxu0 %v1959
      %1982 = vmatpush1.bf16.msra.mxu0 %v1958
      %1983 = vmatprep.subr.bf16.mxu0 %v1961
      %1984 = vmatpush1.bf16.msra.mxu0 %v1960
      %1985 = vmatprep.subr.bf16.mxu0 0
      %1986 = vmatpush1.bf16.msra.mxu0 0
      %1987 = vmatprep.subr.bf16.mxu0 0
      %1988 = vmatpush1.bf16.msra.mxu0 0
      %1989 = vmatprep.subr.bf16.mxu0 0
      %1990 = vmatpush1.bf16.msra.mxu0 0
      %1991 = vmatprep.subr.bf16.mxu0 0
      %1992 = vmatpush1.bf16.msra.mxu0 0
      %1993 = vmatprep.subr.bf16.mxu0 0
      %1994 = vmatpush1.bf16.msra.mxu0 0
      %1995 = vmatprep.subr.bf16.mxu0 0
      %1996 = vmatpush1.bf16.msra.mxu0 0
      %1997 = vmatprep.subr.bf16.mxu0 0
      %1998 = vmatpush1.bf16.msra.mxu0 0
      %1999 = vmatprep.subr.bf16.mxu0 0
      %2000 = vmatpush1.bf16.msra.mxu0 0
      %2001 = vmatprep.subr.bf16.mxu0 0
      %2002 = vmatpush1.bf16.msra.mxu0 0
      %2003 = vmatprep.subr.bf16.mxu0 0
      %2004 = vmatpush1.bf16.msra.mxu0 0
      %2005 = vmatprep.subr.bf16.mxu0 0
      %2006 = vmatpush1.bf16.msra.mxu0 0
      %2007 = vmatprep.mubr.bf16.mxu0 0
      %2008 = vmatmul.mubr.bf16.gmra.mrb[0].mxu0 %v1973
      %v2009 = vpop.f32.mrb[0].mxu0
      %v2010 = vadd.f32 %v1895, %v2009
      %v2011 = vpop.f32.mrb[0].mxu0
      %v2012 = vadd.f32 %v1895, %v2011
      %v2013 = vpop.f32.mrb[0].mxu0
      %v2014 = vadd.f32 %v1900, %v2013
      %v2015 = vpop.f32.mrb[0].mxu0
      %v2016 = vadd.f32 %v1900, %v2015
      %2017 = vdwg.mxu0
      %v2018 = vmax.f32 %v2010, 0.0
      %v2019 = vmax.f32 %v2012, 0.0
      %v2020 = vmax.f32 %v2014, 0.0
      %v2021 = vmax.f32 %v2016, 0.0
      %s2022 = scalar_lea.vmem %s8, 32
      %v2023 = vld [vmem:[%s2022] sm:$0xf]
      %v2024 = vld [vmem:[%s2022 + $0x4] sm:$0xf]
      %v2025 = vld [vmem:[%s2022 + $0x8] sm:$0xf]
      %v2026 = vld [vmem:[%s2022 + $0xc] sm:$0xf]
      %s2027 = scalar_lea.vmem %s9, 64
      %v2028 = vld [vmem:[%s2027] sm:$0xff]
      %v2029 = vld [vmem:[%s2027 + $0x8] sm:$0xff]
      %v2030 = vld [vmem:[%s2027 + $0x10] sm:$0xff]
      %v2031 = vld [vmem:[%s2027 + $0x18] sm:$0xff]
      %v2032 = vpack.c.bf16 %v2020, %v2018
      %v2033 = vpack.c.bf16 %v2021, %v2019
      %2035 = vset.pattern.permute.xlu0 0
      %2036 = vperm.xlu0 %2035, %v2028
      %v2037 = vpop.permute.xlu0 %2036
      %2040 = vset.pattern.permute.xlu0 0
      %2041 = vperm.xlu0 %2040, %v2029
      %v2042 = vpop.permute.xlu0 %2041
      %2045 = vset.pattern.permute.xlu0 0
      %2046 = vperm.xlu0 %2045, %v2030
      %v2047 = vpop.permute.xlu0 %2046
      %2050 = vset.pattern.permute.xlu0 0
      %2051 = vperm.xlu0 %2050, %v2031
      %v2052 = vpop.permute.xlu0 %2051
      %v2058 = vunpack.c.l.b16 %v2023
      %v2059 = vunpack.c.l.b16 %v2024
      %v2060 = vunpack.c.l.b16 %v2025
      %v2061 = vunpack.c.l.b16 %v2026
      %v2062 = vpack.c.b16 %v2059, %v2058
      %v2063 = vpack.c.b16 %v2061, %v2060
      %v2065 = vsel %vm1101, %v2062, 0
      %v2068 = vsel %vm1101, %v2063, 0
      %2070 = vmatprep.subr.bf16.mxu0 %v2033
      %2071 = vmatpush1.bf16.msra.mxu0 %v2032
      %2072 = vmatprep.subr.bf16.mxu0 0
      %2073 = vmatpush1.bf16.msra.mxu0 0
      %2074 = vmatprep.subr.bf16.mxu0 0
      %2075 = vmatpush1.bf16.msra.mxu0 0
      %2076 = vmatprep.subr.bf16.mxu0 0
      %2077 = vmatpush1.bf16.msra.mxu0 0
      %2078 = vmatprep.subr.bf16.mxu0 0
      %2079 = vmatpush1.bf16.msra.mxu0 0
      %2080 = vmatprep.subr.bf16.mxu0 0
      %2081 = vmatpush1.bf16.msra.mxu0 0
      %2082 = vmatprep.subr.bf16.mxu0 0
      %2083 = vmatpush1.bf16.msra.mxu0 0
      %2084 = vmatprep.subr.bf16.mxu0 0
      %2085 = vmatpush1.bf16.msra.mxu0 0
      %2086 = vmatprep.subr.bf16.mxu0 0
      %2087 = vmatpush1.bf16.msra.mxu0 0
      %2088 = vmatprep.subr.bf16.mxu0 0
      %2089 = vmatpush1.bf16.msra.mxu0 0
      %2090 = vmatprep.subr.bf16.mxu0 0
      %2091 = vmatpush1.bf16.msra.mxu0 0
      %2092 = vmatprep.subr.bf16.mxu0 0
      %2093 = vmatpush1.bf16.msra.mxu0 0
      %2094 = vmatprep.subr.bf16.mxu0 0
      %2095 = vmatpush1.bf16.msra.mxu0 0
      %2096 = vmatprep.subr.bf16.mxu0 0
      %2097 = vmatpush1.bf16.msra.mxu0 0
      %2098 = vmatprep.subr.bf16.mxu0 0
      %2099 = vmatpush1.bf16.msra.mxu0 0
      %2100 = vmatprep.subr.bf16.mxu0 0
      %2101 = vmatpush1.bf16.msra.mxu0 0
      %2102 = vmatprep.mubr.bf16.mxu0 0
      %2103 = vmatmul.mubr.bf16.gmra.mrb[0].mxu0 %v2065
      %v2104 = vpop.f32.mrb[0].mxu0
      %v2105 = vadd.f32 %v2037, %v2104
      %v2106 = vpop.f32.mrb[0].mxu0
      %v2107 = vadd.f32 %v2037, %v2106
      %v2108 = vpop.f32.mrb[0].mxu0
      %v2109 = vadd.f32 %v2042, %v2108
      %v2110 = vpop.f32.mrb[0].mxu0
      %v2111 = vadd.f32 %v2042, %v2110
      %2112 = vmatprep.mubr.bf16.mxu0 0
      %2113 = vmatmul.mubr.bf16.gmra.mrb[0].mxu0 %v2068
      %v2114 = vpop.f32.mrb[0].mxu0
      %v2115 = vadd.f32 %v2047, %v2114
      %v2116 = vpop.f32.mrb[0].mxu0
      %v2117 = vadd.f32 %v2047, %v2116
      %v2118 = vpop.f32.mrb[0].mxu0
      %v2119 = vadd.f32 %v2052, %v2118
      %v2120 = vpop.f32.mrb[0].mxu0
      %v2121 = vadd.f32 %v2052, %v2120
      %2122 = vdwg.mxu0
      %v2123 = vmax.f32 %v2105, 0.0
      %v2124 = vmax.f32 %v2107, 0.0
      %v2125 = vmax.f32 %v2109, 0.0
      %v2126 = vmax.f32 %v2111, 0.0
      %v2127 = vmax.f32 %v2115, 0.0
      %v2128 = vmax.f32 %v2117, 0.0
      %v2129 = vmax.f32 %v2119, 0.0
      %v2130 = vmax.f32 %v2121, 0.0
      %v2131 = vadd.f32 %v1650, %v2123
      %v2132 = vadd.f32 %v1651, %v2124
      %v2133 = vadd.f32 %v1652, %v2125
      %v2134 = vadd.f32 %v1653, %v2126
      %v2135 = vadd.f32 %v1654, %v2127
      %v2136 = vadd.f32 %v1655, %v2128
      %v2137 = vadd.f32 %v1656, %v2129
      %v2138 = vadd.f32 %v1657, %v2130
      %s2139 = scalar_lea.vmem %s4, 24
      %v2140 = vld [vmem:[%s2139] sm:$0xf]
      %v2141 = vld [vmem:[%s2139 + $0x4] sm:$0xf]
      %s2142 = scalar_lea.vmem %s5, 48
      %v2143 = vld [vmem:[%s2142] sm:$0xff]
      %v2144 = vld [vmem:[%s2142 + $0x8] sm:$0xff]
      %v2145 = vpack.c.bf16 %v2133, %v2131
      %v2146 = vpack.c.bf16 %v2134, %v2132
      %v2147 = vpack.c.bf16 %v2137, %v2135
      %v2148 = vpack.c.bf16 %v2138, %v2136
      %2150 = vset.pattern.permute.xlu0 0
      %2151 = vperm.xlu0 %2150, %v2143
      %v2152 = vpop.permute.xlu0 %2151
      %2155 = vset.pattern.permute.xlu0 0
      %2156 = vperm.xlu0 %2155, %v2144
      %v2157 = vpop.permute.xlu0 %2156
      %v2161 = vunpack.c.l.b16 %v2140
      %v2162 = vunpack.c.l.b16 %v2141
      %v2163 = vpack.c.b16 %v2162, %v2161
      %v2165 = vsel %vm648, %v2163, 0
      %2167 = vmatprep.subr.bf16.mxu0 %v2146
      %2168 = vmatpush1.bf16.msra.mxu0 %v2145
      %2169 = vmatprep.subr.bf16.mxu0 %v2148
      %2170 = vmatpush1.bf16.msra.mxu0 %v2147
      %2171 = vmatprep.subr.bf16.mxu0 0
      %2172 = vmatpush1.bf16.msra.mxu0 0
      %2173 = vmatprep.subr.bf16.mxu0 0
      %2174 = vmatpush1.bf16.msra.mxu0 0
      %2175 = vmatprep.subr.bf16.mxu0 0
      %2176 = vmatpush1.bf16.msra.mxu0 0
      %2177 = vmatprep.subr.bf16.mxu0 0
      %2178 = vmatpush1.bf16.msra.mxu0 0
      %2179 = vmatprep.subr.bf16.mxu0 0
      %2180 = vmatpush1.bf16.msra.mxu0 0
      %2181 = vmatprep.subr.bf16.mxu0 0
      %2182 = vmatpush1.bf16.msra.mxu0 0
      %2183 = vmatprep.subr.bf16.mxu0 0
      %2184 = vmatpush1.bf16.msra.mxu0 0
      %2185 = vmatprep.subr.bf16.mxu0 0
      %2186 = vmatpush1.bf16.msra.mxu0 0
      %2187 = vmatprep.subr.bf16.mxu0 0
      %2188 = vmatpush1.bf16.msra.mxu0 0
      %2189 = vmatprep.subr.bf16.mxu0 0
      %2190 = vmatpush1.bf16.msra.mxu0 0
      %2191 = vmatprep.subr.bf16.mxu0 0
      %2192 = vmatpush1.bf16.msra.mxu0 0
      %2193 = vmatprep.subr.bf16.mxu0 0
      %2194 = vmatpush1.bf16.msra.mxu0 0
      %2195 = vmatprep.subr.bf16.mxu0 0
      %2196 = vmatpush1.bf16.msra.mxu0 0
      %2197 = vmatprep.subr.bf16.mxu0 0
      %2198 = vmatpush1.bf16.msra.mxu0 0
      %2199 = vmatprep.mubr.bf16.mxu0 0
      %2200 = vmatmul.mubr.bf16.gmra.mrb[0].mxu0 %v2165
      %v2201 = vpop.f32.mrb[0].mxu0
      %v2202 = vadd.f32 %v2152, %v2201
      %v2203 = vpop.f32.mrb[0].mxu0
      %v2204 = vadd.f32 %v2152, %v2203
      %v2205 = vpop.f32.mrb[0].mxu0
      %v2206 = vadd.f32 %v2157, %v2205
      %v2207 = vpop.f32.mrb[0].mxu0
      %v2208 = vadd.f32 %v2157, %v2207
      %2209 = vdwg.mxu0
      %v2210 = vmax.f32 %v2202, 0.0
      %v2211 = vmax.f32 %v2204, 0.0
      %v2212 = vmax.f32 %v2206, 0.0
      %v2213 = vmax.f32 %v2208, 0.0
      %s2214 = scalar_lea.vmem %s6, 24
      %v2215 = vld [vmem:[%s2214] sm:$0xf]
      %v2216 = vld [vmem:[%s2214 + $0x4] sm:$0xf]
      %2217 = vst [vmem:[#allocation2 + $0x8] sm:$0xff] %v2210
      %2218 = vst [vmem:[#allocation2 + $0x10] sm:$0xff] %v2211
      %2219 = vst [vmem:[#allocation2 + $0x20] sm:$0xff] %v2212
      %2220 = vst [vmem:[#allocation2 + $0x28] sm:$0xff] %v2213
      %v2221 = vld [vmem:[#allocation2] sm:$0xff]
      %v2222 = vld [vmem:[#allocation2 + $0x8] sm:$0xff]
      %v2223 = vld [vmem:[#allocation2 + $0x10] sm:$0xff]
      %v2224 = vld [vmem:[#allocation2 + $0x18] sm:$0xff]
      %v2225 = vld [vmem:[#allocation2 + $0x20] sm:$0xff]
      %v2226 = vld [vmem:[#allocation2 + $0x28] sm:$0xff]
      %v2227 = vmul.f32 %v2221, %v721
      %v2228 = vmul.f32 %v2222, %v725
      %v2229 = vmul.f32 %v2223, %v723
      %v2230 = vmul.f32 %v2224, %v721
      %v2231 = vmul.f32 %v2225, %v725
      %v2232 = vmul.f32 %v2226, %v723
      %v2233 = vmul.f32 %v2221, %v745
      %v2234 = vmul.f32 %v2222, %v749
      %v2235 = vmul.f32 %v2223, %v747
      %v2236 = vmul.f32 %v2224, %v745
      %v2237 = vmul.f32 %v2225, %v749
      %v2238 = vmul.f32 %v2226, %v747
      %v2239 = vmul.f32 %v2221, %v769
      %v2240 = vmul.f32 %v2222, %v773
      %v2241 = vmul.f32 %v2223, %v771
      %v2242 = vmul.f32 %v2224, %v769
      %v2243 = vmul.f32 %v2225, %v773
      %v2244 = vmul.f32 %v2226, %v771
      %v2245 = vmul.f32 %v2221, %v793
      %v2246 = vmul.f32 %v2222, %v797
      %v2247 = vmul.f32 %v2223, %v795
      %v2248 = vmul.f32 %v2224, %v793
      %v2249 = vmul.f32 %v2225, %v797
      %v2250 = vmul.f32 %v2226, %v795
      %2257 = vrot.lane.b32.xlu0 %v2233, 127
      %v2258 = vpop.permute.xlu0 %2257
      %2259 = vrot.lane.b32.xlu0 %v2234, 127
      %v2260 = vpop.permute.xlu0 %2259
      %2261 = vrot.lane.b32.xlu0 %v2235, 127
      %v2262 = vpop.permute.xlu0 %2261
      %2263 = vrot.lane.b32.xlu0 %v2236, 127
      %v2264 = vpop.permute.xlu0 %2263
      %2265 = vrot.lane.b32.xlu0 %v2237, 127
      %v2266 = vpop.permute.xlu0 %2265
      %2267 = vrot.lane.b32.xlu0 %v2238, 127
      %v2268 = vpop.permute.xlu0 %2267
      %v2269 = vsel %vm796, %v2258, %v2260
      %v2270 = vsel %vm796, %v2260, %v2262
      %v2271 = vsel %vm796, %v2264, %v2266
      %v2272 = vsel %vm796, %v2266, %v2268
      %2285 = vrot.lane.b32.xlu0 %v2239, 126
      %v2286 = vpop.permute.xlu0 %2285
      %2287 = vrot.lane.b32.xlu0 %v2240, 126
      %v2288 = vpop.permute.xlu0 %2287
      %2289 = vrot.lane.b32.xlu0 %v2241, 126
      %v2290 = vpop.permute.xlu0 %2289
      %2291 = vrot.lane.b32.xlu0 %v2242, 126
      %v2292 = vpop.permute.xlu0 %2291
      %2293 = vrot.lane.b32.xlu0 %v2243, 126
      %v2294 = vpop.permute.xlu0 %2293
      %2295 = vrot.lane.b32.xlu0 %v2244, 126
      %v2296 = vpop.permute.xlu0 %2295
      %v2297 = vsel %vm853, %v2286, %v2288
      %v2298 = vsel %vm853, %v2288, %v2290
      %v2299 = vsel %vm853, %v2292, %v2294
      %v2300 = vsel %vm853, %v2294, %v2296
      %2313 = vrot.lane.b32.xlu0 %v2245, 112
      %v2314 = vpop.permute.xlu0 %2313
      %2315 = vrot.lane.b32.xlu0 %v2246, 112
      %v2316 = vpop.permute.xlu0 %2315
      %2317 = vrot.lane.b32.xlu0 %v2247, 112
      %v2318 = vpop.permute.xlu0 %2317
      %2319 = vrot.lane.b32.xlu0 %v2248, 112
      %v2320 = vpop.permute.xlu0 %2319
      %2321 = vrot.lane.b32.xlu0 %v2249, 112
      %v2322 = vpop.permute.xlu0 %2321
      %2323 = vrot.lane.b32.xlu0 %v2250, 112
      %v2324 = vpop.permute.xlu0 %2323
      %v2325 = vsel %vm748, %v2314, %v2316
      %v2326 = vsel %vm748, %v2316, %v2318
      %v2327 = vsel %vm748, %v2320, %v2322
      %v2328 = vsel %vm748, %v2322, %v2324
      %2339 = vrot.lane.b32.xlu0 %v2210, 111
      %v2340 = vpop.permute.xlu0 %2339
      %2341 = vrot.lane.b32.xlu0 %v2211, 111
      %v2342 = vpop.permute.xlu0 %2341
      %2343 = vrot.lane.b32.xlu0 %v2212, 111
      %v2344 = vpop.permute.xlu0 %2343
      %2345 = vrot.lane.b32.xlu0 %v2213, 111
      %v2346 = vpop.permute.xlu0 %2345
      %v2347 = vsel %vm724, %v2340, %v2342
      %v2348 = vsel %vm724, %v2344, %v2346
      %v2355 = vpack.c.bf16 %v2230, %v2227
      %v2356 = vpack.c.bf16 %v2231, %v2228
      %v2357 = vpack.c.bf16 %v2232, %v2229
      %v2358 = vpack.c.bf16 %v2271, %v2269
      %v2359 = vpack.c.bf16 %v2272, %v2270
      %v2360 = vpack.c.bf16 %v2268, %v2262
      %v2361 = vpack.c.bf16 %v2299, %v2297
      %v2362 = vpack.c.bf16 %v2300, %v2298
      %v2363 = vpack.c.bf16 %v2296, %v2290
      %v2364 = vpack.c.bf16 %v2327, %v2325
      %v2365 = vpack.c.bf16 %v2328, %v2326
      %v2366 = vpack.c.bf16 %v2324, %v2318
      %v2367 = vpack.c.bf16 %v2344, %v2340
      %v2368 = vpack.c.bf16 %v2348, %v2347
      %v2369 = vpack.c.bf16 %v2346, %v2342
      %s2370 = scalar_lea.vmem %s7, 48
      %v2371 = vld [vmem:[%s2370] sm:$0xff]
      %v2372 = vld [vmem:[%s2370 + $0x8] sm:$0xff]
      %2374 = vset.pattern.permute.xlu0 0
      %2375 = vperm.xlu0 %2374, %v2371
      %v2376 = vpop.permute.xlu0 %2375
      %2379 = vset.pattern.permute.xlu0 0
      %2380 = vperm.xlu0 %2379, %v2372
      %v2381 = vpop.permute.xlu0 %2380
      %v2385 = vunpack.c.l.b16 %v2215
      %v2386 = vunpack.c.l.b16 %v2216
      %v2387 = vpack.c.b16 %v2386, %v2385
      %2403 = vrot.lane.b32.xlu0 %v2355, 17
      %v2404 = vpop.permute.xlu0 %2403
      %2405 = vrot.lane.b32.xlu0 %v2356, 17
      %v2406 = vpop.permute.xlu0 %2405
      %2407 = vrot.lane.b32.xlu0 %v2357, 17
      %v2408 = vpop.permute.xlu0 %2407
      %2409 = vrot.lane.b32.xlu0 %v2358, 17
      %v2410 = vpop.permute.xlu0 %2409
      %2411 = vrot.lane.b32.xlu0 %v2359, 17
      %v2412 = vpop.permute.xlu0 %2411
      %2413 = vrot.lane.b32.xlu0 %v2360, 17
      %v2414 = vpop.permute.xlu0 %2413
      %2415 = vrot.lane.b32.xlu0 %v2361, 17
      %v2416 = vpop.permute.xlu0 %2415
      %2417 = vrot.lane.b32.xlu0 %v2362, 17
      %v2418 = vpop.permute.xlu0 %2417
      %2419 = vrot.lane.b32.xlu0 %v2363, 17
      %v2420 = vpop.permute.xlu0 %2419
      %2421 = vrot.lane.b32.xlu0 %v2364, 17
      %v2422 = vpop.permute.xlu0 %2421
      %2423 = vrot.lane.b32.xlu0 %v2365, 17
      %v2424 = vpop.permute.xlu0 %2423
      %2425 = vrot.lane.b32.xlu0 %v2366, 17
      %v2426 = vpop.permute.xlu0 %2425
      %2427 = vrot.lane.b32.xlu0 %v2367, 17
      %v2428 = vpop.permute.xlu0 %2427
      %2429 = vrot.lane.b32.xlu0 %v2368, 17
      %v2430 = vpop.permute.xlu0 %2429
      %2431 = vrot.lane.b32.xlu0 %v2369, 17
      %v2432 = vpop.permute.xlu0 %2431
      %v2433 = vsel %vm989, %v2404, %v2406
      %v2434 = vsel %vm989, %v2406, %v2408
      %v2435 = vsel %vm989, %v2410, %v2412
      %v2436 = vsel %vm989, %v2412, %v2414
      %v2437 = vsel %vm989, %v2416, %v2418
      %v2438 = vsel %vm989, %v2418, %v2420
      %v2439 = vsel %vm989, %v2422, %v2424
      %v2440 = vsel %vm989, %v2424, %v2426
      %v2441 = vsel %vm989, %v2428, %v2430
      %v2442 = vsel %vm989, %v2430, %v2432
      %v2454 = vsel %vm1010, %v2387, 0
      %2456 = vmatprep.subr.bf16.mxu0 %v2434
      %2457 = vmatpush1.bf16.msra.mxu0 %v2433
      %2458 = vmatprep.subr.bf16.mxu0 %v2436
      %2459 = vmatpush1.bf16.msra.mxu0 %v2435
      %2460 = vmatprep.subr.bf16.mxu0 %v2438
      %2461 = vmatpush1.bf16.msra.mxu0 %v2437
      %2462 = vmatprep.subr.bf16.mxu0 %v2440
      %2463 = vmatpush1.bf16.msra.mxu0 %v2439
      %2464 = vmatprep.subr.bf16.mxu0 %v2442
      %2465 = vmatpush1.bf16.msra.mxu0 %v2441
      %2466 = vmatprep.subr.bf16.mxu0 0
      %2467 = vmatpush1.bf16.msra.mxu0 0
      %2468 = vmatprep.subr.bf16.mxu0 0
      %2469 = vmatpush1.bf16.msra.mxu0 0
      %2470 = vmatprep.subr.bf16.mxu0 0
      %2471 = vmatpush1.bf16.msra.mxu0 0
      %2472 = vmatprep.subr.bf16.mxu0 0
      %2473 = vmatpush1.bf16.msra.mxu0 0
      %2474 = vmatprep.subr.bf16.mxu0 0
      %2475 = vmatpush1.bf16.msra.mxu0 0
      %2476 = vmatprep.subr.bf16.mxu0 0
      %2477 = vmatpush1.bf16.msra.mxu0 0
      %2478 = vmatprep.subr.bf16.mxu0 0
      %2479 = vmatpush1.bf16.msra.mxu0 0
      %2480 = vmatprep.subr.bf16.mxu0 0
      %2481 = vmatpush1.bf16.msra.mxu0 0
      %2482 = vmatprep.subr.bf16.mxu0 0
      %2483 = vmatpush1.bf16.msra.mxu0 0
      %2484 = vmatprep.subr.bf16.mxu0 0
      %2485 = vmatpush1.bf16.msra.mxu0 0
      %2486 = vmatprep.subr.bf16.mxu0 0
      %2487 = vmatpush1.bf16.msra.mxu0 0
      %2488 = vmatprep.mubr.bf16.mxu0 0
      %2489 = vmatmul.mubr.bf16.gmra.mrb[0].mxu0 %v2454
      %v2490 = vpop.f32.mrb[0].mxu0
      %v2491 = vadd.f32 %v2376, %v2490
      %v2492 = vpop.f32.mrb[0].mxu0
      %v2493 = vadd.f32 %v2376, %v2492
      %v2494 = vpop.f32.mrb[0].mxu0
      %v2495 = vadd.f32 %v2381, %v2494
      %v2496 = vpop.f32.mrb[0].mxu0
      %v2497 = vadd.f32 %v2381, %v2496
      %2498 = vdwg.mxu0
      %v2499 = vmax.f32 %v2491, 0.0
      %v2500 = vmax.f32 %v2493, 0.0
      %v2501 = vmax.f32 %v2495, 0.0
      %v2502 = vmax.f32 %v2497, 0.0
      %s2503 = scalar_lea.vmem %s8, 48
      %v2504 = vld [vmem:[%s2503] sm:$0xf]
      %v2505 = vld [vmem:[%s2503 + $0x4] sm:$0xf]
      %v2506 = vld [vmem:[%s2503 + $0x8] sm:$0xf]
      %v2507 = vld [vmem:[%s2503 + $0xc] sm:$0xf]
      %s2508 = scalar_lea.vmem %s9, 96
      %v2509 = vld [vmem:[%s2508] sm:$0xff]
      %v2510 = vld [vmem:[%s2508 + $0x8] sm:$0xff]
      %v2511 = vld [vmem:[%s2508 + $0x10] sm:$0xff]
      %v2512 = vld [vmem:[%s2508 + $0x18] sm:$0xff]
      %v2513 = vpack.c.bf16 %v2501, %v2499
      %v2514 = vpack.c.bf16 %v2502, %v2500
      %2516 = vset.pattern.permute.xlu0 0
      %2517 = vperm.xlu0 %2516, %v2509
      %v2518 = vpop.permute.xlu0 %2517
      %2521 = vset.pattern.permute.xlu0 0
      %2522 = vperm.xlu0 %2521, %v2510
      %v2523 = vpop.permute.xlu0 %2522
      %2526 = vset.pattern.permute.xlu0 0
      %2527 = vperm.xlu0 %2526, %v2511
      %v2528 = vpop.permute.xlu0 %2527
      %2531 = vset.pattern.permute.xlu0 0
      %2532 = vperm.xlu0 %2531, %v2512
      %v2533 = vpop.permute.xlu0 %2532
      %v2539 = vunpack.c.l.b16 %v2504
      %v2540 = vunpack.c.l.b16 %v2505
      %v2541 = vunpack.c.l.b16 %v2506
      %v2542 = vunpack.c.l.b16 %v2507
      %v2543 = vpack.c.b16 %v2540, %v2539
      %v2544 = vpack.c.b16 %v2542, %v2541
      %v2546 = vsel %vm1101, %v2543, 0
      %v2549 = vsel %vm1101, %v2544, 0
      %2551 = vmatprep.subr.bf16.mxu0 %v2514
      %2552 = vmatpush1.bf16.msra.mxu0 %v2513
      %2553 = vmatprep.subr.bf16.mxu0 0
      %2554 = vmatpush1.bf16.msra.mxu0 0
      %2555 = vmatprep.subr.bf16.mxu0 0
      %2556 = vmatpush1.bf16.msra.mxu0 0
      %2557 = vmatprep.subr.bf16.mxu0 0
      %2558 = vmatpush1.bf16.msra.mxu0 0
      %2559 = vmatprep.subr.bf16.mxu0 0
      %2560 = vmatpush1.bf16.msra.mxu0 0
      %2561 = vmatprep.subr.bf16.mxu0 0
      %2562 = vmatpush1.bf16.msra.mxu0 0
      %2563 = vmatprep.subr.bf16.mxu0 0
      %2564 = vmatpush1.bf16.msra.mxu0 0
      %2565 = vmatprep.subr.bf16.mxu0 0
      %2566 = vmatpush1.bf16.msra.mxu0 0
      %2567 = vmatprep.subr.bf16.mxu0 0
      %2568 = vmatpush1.bf16.msra.mxu0 0
      %2569 = vmatprep.subr.bf16.mxu0 0
      %2570 = vmatpush1.bf16.msra.mxu0 0
      %2571 = vmatprep.subr.bf16.mxu0 0
      %2572 = vmatpush1.bf16.msra.mxu0 0
      %2573 = vmatprep.subr.bf16.mxu0 0
      %2574 = vmatpush1.bf16.msra.mxu0 0
      %2575 = vmatprep.subr.bf16.mxu0 0
      %2576 = vmatpush1.bf16.msra.mxu0 0
      %2577 = vmatprep.subr.bf16.mxu0 0
      %2578 = vmatpush1.bf16.msra.mxu0 0
      %2579 = vmatprep.subr.bf16.mxu0 0
      %2580 = vmatpush1.bf16.msra.mxu0 0
      %2581 = vmatprep.subr.bf16.mxu0 0
      %2582 = vmatpush1.bf16.msra.mxu0 0
      %2583 = vmatprep.mubr.bf16.mxu0 0
      %2584 = vmatmul.mubr.bf16.gmra.mrb[0].mxu0 %v2546
      %v2585 = vpop.f32.mrb[0].mxu0
      %v2586 = vadd.f32 %v2518, %v2585
      %v2587 = vpop.f32.mrb[0].mxu0
      %v2588 = vadd.f32 %v2518, %v2587
      %v2589 = vpop.f32.mrb[0].mxu0
      %v2590 = vadd.f32 %v2523, %v2589
      %v2591 = vpop.f32.mrb[0].mxu0
      %v2592 = vadd.f32 %v2523, %v2591
      %2593 = vmatprep.mubr.bf16.mxu0 0
      %2594 = vmatmul.mubr.bf16.gmra.mrb[0].mxu0 %v2549
      %v2595 = vpop.f32.mrb[0].mxu0
      %v2596 = vadd.f32 %v2528, %v2595
      %v2597 = vpop.f32.mrb[0].mxu0
      %v2598 = vadd.f32 %v2528, %v2597
      %v2599 = vpop.f32.mrb[0].mxu0
      %v2600 = vadd.f32 %v2533, %v2599
      %v2601 = vpop.f32.mrb[0].mxu0
      %v2602 = vadd.f32 %v2533, %v2601
      %2603 = vdwg.mxu0
      %v2604 = vmax.f32 %v2586, 0.0
      %v2605 = vmax.f32 %v2588, 0.0
      %v2606 = vmax.f32 %v2590, 0.0
      %v2607 = vmax.f32 %v2592, 0.0
      %v2608 = vmax.f32 %v2596, 0.0
      %v2609 = vmax.f32 %v2598, 0.0
      %v2610 = vmax.f32 %v2600, 0.0
      %v2611 = vmax.f32 %v2602, 0.0
      %v2612 = vadd.f32 %v2131, %v2604
      %v2613 = vadd.f32 %v2132, %v2605
      %v2614 = vadd.f32 %v2133, %v2606
      %v2615 = vadd.f32 %v2134, %v2607
      %v2616 = vadd.f32 %v2135, %v2608
      %v2617 = vadd.f32 %v2136, %v2609
      %v2618 = vadd.f32 %v2137, %v2610
      %v2619 = vadd.f32 %v2138, %v2611
      %v2620 = vadd.f32 %v617, %v2612
      %v2621 = vadd.f32 %v618, %v2613
      %v2622 = vadd.f32 %v619, %v2614
      %v2623 = vadd.f32 %v620, %v2615
      %v2624 = vadd.f32 %v621, %v2616
      %v2625 = vadd.f32 %v622, %v2617
      %v2626 = vadd.f32 %v623, %v2618
      %v2627 = vadd.f32 %v624, %v2619
      %v2628 = vld [vmem:[%s10] sm:$0xf]
      %v2629 = vld [vmem:[%s10 + $0x4] sm:$0xf]
      %v2630 = vld [vmem:[%s10 + $0x8] sm:$0xf]
      %v2631 = vld [vmem:[%s10 + $0xc] sm:$0xf]
      %v2632 = vld [vmem:[%s11] sm:$0xff]
      %v2633 = vld [vmem:[%s11 + $0x8] sm:$0xff]
      %v2634 = vld [vmem:[%s11 + $0x10] sm:$0xff]
      %v2635 = vld [vmem:[%s11 + $0x18] sm:$0xff]
      %v2636 = vpack.c.bf16 %v2622, %v2620
      %v2637 = vpack.c.bf16 %v2623, %v2621
      %v2638 = vpack.c.bf16 %v2626, %v2624
      %v2639 = vpack.c.bf16 %v2627, %v2625
      %2641 = vset.pattern.permute.xlu0 0
      %2642 = vperm.xlu0 %2641, %v2632
      %v2643 = vpop.permute.xlu0 %2642
      %2646 = vset.pattern.permute.xlu0 0
      %2647 = vperm.xlu0 %2646, %v2633
      %v2648 = vpop.permute.xlu0 %2647
      %2651 = vset.pattern.permute.xlu0 0
      %2652 = vperm.xlu0 %2651, %v2634
      %v2653 = vpop.permute.xlu0 %2652
      %2656 = vset.pattern.permute.xlu0 0
      %2657 = vperm.xlu0 %2656, %v2635
      %v2658 = vpop.permute.xlu0 %2657
      %v2664 = vunpack.c.l.b16 %v2628
      %v2665 = vunpack.c.l.b16 %v2629
      %v2666 = vunpack.c.l.b16 %v2630
      %v2667 = vunpack.c.l.b16 %v2631
      %v2668 = vpack.c.b16 %v2665, %v2664
      %v2669 = vpack.c.b16 %v2667, %v2666
      %v2671 = vsel %vm648, %v2668, 0
      %v2674 = vsel %vm648, %v2669, 0
      %2676 = vmatprep.subr.bf16.mxu0 %v2637
      %2677 = vmatpush1.bf16.msra.mxu0 %v2636
      %2678 = vmatprep.subr.bf16.mxu0 %v2639
      %2679 = vmatpush1.bf16.msra.mxu0 %v2638
      %2680 = vmatprep.subr.bf16.mxu0 0
      %2681 = vmatpush1.bf16.msra.mxu0 0
      %2682 = vmatprep.subr.bf16.mxu0 0
      %2683 = vmatpush1.bf16.msra.mxu0 0
      %2684 = vmatprep.subr.bf16.mxu0 0
      %2685 = vmatpush1.bf16.msra.mxu0 0
      %2686 = vmatprep.subr.bf16.mxu0 0
      %2687 = vmatpush1.bf16.msra.mxu0 0
      %2688 = vmatprep.subr.bf16.mxu0 0
      %2689 = vmatpush1.bf16.msra.mxu0 0
      %2690 = vmatprep.subr.bf16.mxu0 0
      %2691 = vmatpush1.bf16.msra.mxu0 0
      %2692 = vmatprep.subr.bf16.mxu0 0
      %2693 = vmatpush1.bf16.msra.mxu0 0
      %2694 = vmatprep.subr.bf16.mxu0 0
      %2695 = vmatpush1.bf16.msra.mxu0 0
      %2696 = vmatprep.subr.bf16.mxu0 0
      %2697 = vmatpush1.bf16.msra.mxu0 0
      %2698 = vmatprep.subr.bf16.mxu0 0
      %2699 = vmatpush1.bf16.msra.mxu0 0
      %2700 = vmatprep.subr.bf16.mxu0 0
      %2701 = vmatpush1.bf16.msra.mxu0 0
      %2702 = vmatprep.subr.bf16.mxu0 0
      %2703 = vmatpush1.bf16.msra.mxu0 0
      %2704 = vmatprep.subr.bf16.mxu0 0
      %2705 = vmatpush1.bf16.msra.mxu0 0
      %2706 = vmatprep.subr.bf16.mxu0 0
      %2707 = vmatpush1.bf16.msra.mxu0 0
      %2708 = vmatprep.mubr.bf16.mxu0 0
      %2709 = vmatmul.mubr.bf16.gmra.mrb[0].mxu0 %v2671
      %v2710 = vpop.f32.mrb[0].mxu0
      %v2711 = vadd.f32 %v2643, %v2710
      %v2712 = vpop.f32.mrb[0].mxu0
      %v2713 = vadd.f32 %v2643, %v2712
      %v2714 = vpop.f32.mrb[0].mxu0
      %v2715 = vadd.f32 %v2648, %v2714
      %v2716 = vpop.f32.mrb[0].mxu0
      %v2717 = vadd.f32 %v2648, %v2716
      %2718 = vmatprep.mubr.bf16.mxu0 0
      %2719 = vmatmul.mubr.bf16.gmra.mrb[0].mxu0 %v2674
      %v2720 = vpop.f32.mrb[0].mxu0
      %v2721 = vadd.f32 %v2653, %v2720
      %v2722 = vpop.f32.mrb[0].mxu0
      %v2723 = vadd.f32 %v2653, %v2722
      %v2724 = vpop.f32.mrb[0].mxu0
      %v2725 = vadd.f32 %v2658, %v2724
      %v2726 = vpop.f32.mrb[0].mxu0
      %v2727 = vadd.f32 %v2658, %v2726
      %2728 = vdwg.mxu0
      %vm2729 = vcmp.ge.f32.partialorder %v2711, 0.0
      %vm2730 = vcmp.ge.f32.partialorder %v2713, 0.0
      %vm2731 = vcmp.ge.f32.partialorder %v2715, 0.0
      %vm2732 = vcmp.ge.f32.partialorder %v2717, 0.0
      %vm2733 = vcmp.ge.f32.partialorder %v2721, 0.0
      %vm2734 = vcmp.ge.f32.partialorder %v2723, 0.0
      %vm2735 = vcmp.ge.f32.partialorder %v2725, 0.0
      %vm2736 = vcmp.ge.f32.partialorder %v2727, 0.0
      %v2737 = vmul.f32 %v2711, 0.1
      %v2738 = vmul.f32 %v2713, 0.1
      %v2739 = vmul.f32 %v2715, 0.1
      %v2740 = vmul.f32 %v2717, 0.1
      %v2741 = vmul.f32 %v2721, 0.1
      %v2742 = vmul.f32 %v2723, 0.1
      %v2743 = vmul.f32 %v2725, 0.1
      %v2744 = vmul.f32 %v2727, 0.1
      %v2745 = vsel %vm2729, %v2711, %v2737
      %v2746 = vsel %vm2730, %v2713, %v2738
      %v2747 = vsel %vm2731, %v2715, %v2739
      %v2748 = vsel %vm2732, %v2717, %v2740
      %v2749 = vsel %vm2733, %v2721, %v2741
      %v2750 = vsel %vm2734, %v2723, %v2742
      %v2751 = vsel %vm2735, %v2725, %v2743
      %v2752 = vsel %vm2736, %v2727, %v2744
      %v2753 = vld [vmem:[%s12] sm:$0x1]
      %v2754 = vld [vmem:[#allocation3] sm:$0x1]
      %v2755 = vpack.c.bf16 %v2747, %v2745
      %v2756 = vpack.c.bf16 %v2748, %v2746
      %v2757 = vpack.c.bf16 %v2751, %v2749
      %v2758 = vpack.c.bf16 %v2752, %v2750
      %2760 = vset.pattern.permute.xlu0 0
      %2761 = vperm.xlu0 %2760, %v2754
      %v2762 = vpop.permute.xlu0 %2761
      %v2764 = vlaneseq
      %v2765 = vshrl.u32 %v2764, 7
      %v2766 = vsub.s32 0, %v2765
      %v2767 = vrot.slane %v2762, %v2766
      %v2769 = vsel %vm648, %v2753, 0
      %2771 = vmatprep.subr.bf16.mxu0 %v2756
      %2772 = vmatpush1.bf16.msra.mxu0 %v2755
      %2773 = vmatprep.subr.bf16.mxu0 %v2758
      %2774 = vmatpush1.bf16.msra.mxu0 %v2757
      %2775 = vmatprep.subr.bf16.mxu0 0
      %2776 = vmatpush1.bf16.msra.mxu0 0
      %2777 = vmatprep.subr.bf16.mxu0 0
      %2778 = vmatpush1.bf16.msra.mxu0 0
      %2779 = vmatprep.subr.bf16.mxu0 0
      %2780 = vmatpush1.bf16.msra.mxu0 0
      %2781 = vmatprep.subr.bf16.mxu0 0
      %2782 = vmatpush1.bf16.msra.mxu0 0
      %2783 = vmatprep.subr.bf16.mxu0 0
      %2784 = vmatpush1.bf16.msra.mxu0 0
      %2785 = vmatprep.subr.bf16.mxu0 0
      %2786 = vmatpush1.bf16.msra.mxu0 0
      %2787 = vmatprep.subr.bf16.mxu0 0
      %2788 = vmatpush1.bf16.msra.mxu0 0
      %2789 = vmatprep.subr.bf16.mxu0 0
      %2790 = vmatpush1.bf16.msra.mxu0 0
      %2791 = vmatprep.subr.bf16.mxu0 0
      %2792 = vmatpush1.bf16.msra.mxu0 0
      %2793 = vmatprep.subr.bf16.mxu0 0
      %2794 = vmatpush1.bf16.msra.mxu0 0
      %2795 = vmatprep.subr.bf16.mxu0 0
      %2796 = vmatpush1.bf16.msra.mxu0 0
      %2797 = vmatprep.subr.bf16.mxu0 0
      %2798 = vmatpush1.bf16.msra.mxu0 0
      %2799 = vmatprep.subr.bf16.mxu0 0
      %2800 = vmatpush1.bf16.msra.mxu0 0
      %2801 = vmatprep.subr.bf16.mxu0 0
      %2802 = vmatpush1.bf16.msra.mxu0 0
      %2803 = vmatprep.mubr.bf16.mxu0 0
      %2804 = vmatmul.mubr.bf16.gmra.mrb[0].mxu0 %v2769
      %v2805 = vpop.f32.mrb[0].mxu0
      %v2806 = vadd.f32 %v2767, %v2805
      %v2807 = vpop.f32.mrb[0].mxu0
      %v2808 = vadd.f32 %v2767, %v2807
      %v2809 = vpop.f32.mrb[0].mxu0
      %v2810 = vpop.f32.mrb[0].mxu0
      %2811 = vdwg.mxu0
      %v2812 = vxor.u32 %v2806, 2147483648
      %v2813 = vxor.u32 %v2808, 2147483648
      %v2814 = vmul.f32 %v2812, 1.442695
      %v2815 = vpow.pop %v2814
      %v2816 = vmul.f32 %v2813, 1.442695
      %v2817 = vpow.pop %v2816
      %v2818 = vadd.f32 %v2815, 1.0
      %v2819 = vadd.f32 %v2817, 1.0
      %v2820 = vrcp.pop %v2818
      %v2821 = vmul.f32 1.0, %v2820
      %v2822 = vrcp.pop %v2819
      %v2823 = vmul.f32 1.0, %v2822
      %v2826 = vcombine.low %v2821, %v2823
      %v2828 = vunpack.c.l.s4 1966171168
      %v2829 = vunpack.c.0.s8 %v2828
      %v2830 = vlaneseq
      %v2831 = vshrl.u32 %v2830, 7
      %v2832 = vsub.s32 %v2829, %v2831
      %v2833 = vrot.slane %v2826, %v2832
      %v2835 = vunpack.c.l.s4 1966171168
      %v2836 = vunpack.c.0.s8 %v2835
      %v2837 = vlaneseq
      %v2838 = vshrl.u32 %v2837, 7
      %v2839 = vsub.s32 %v2836, %v2838
      %v2840 = vrot.slane %v2833, %v2839
      %v2842 = vlaneseq
      %vm2843 = vcmp.ge.s32.totalorder %v2842, 0
      %vm2844 = vcmp.lt.s32.totalorder %v2842, 256
      %vm2845 = vmand %vm2843, %vm2844
      %2846 = vst.msk [vmem:[%s467] sm:$0x3] %vm2845, %v2840
      %p2847 = scmp.lt.s32.totalorder %s27, 1
      %s2848 = scalar_select %p2847, %s27, 1
      %s2849 = smul.addr %s2848, 2
      %s2850 = scalar_lea.vmem %s14, %s2849
      // Predicated region
      $region77: #{pixelcnn_forward.1} parent=75 // pred_check
        %p2851 = pneg %p344
      $region78: #{pixelcnn_forward.1} parent=75 // pred_check_branch
        %2853 = sbr.rel (%p2851) target = $region80
      $region79: #{pixelcnn_forward.1} parent=75 // pred_region
        _
      $region80: #{pixelcnn_forward.1} parent=75 // pred_fallthru
        _
    $region76: #{pixelcnn_forward.1} parent=5 // pred_fallthru
      _
    %p2854 = scmp.le.s32.totalorder 2, %s22
    // Predicated region
    $region81: #{pixelcnn_forward.1} parent=5 // pred_check
      %p2855 = pneg %p2854
    $region82: #{pixelcnn_forward.1} parent=5 // pred_check_branch
      %2857 = sbr.rel (%p2855) target = $region84
    $region83: #{pixelcnn_forward.1} parent=5 // pred_region
      %s2858 = ssub.s32 %s22, 2
      // Predicated region
      $region85: #{pixelcnn_forward.1} parent=83 // pred_check
        %p2859 = pneg %p350
      $region86: #{pixelcnn_forward.1} parent=83 // pred_check_branch
        %2861 = sbr.rel (%p2859) target = $region88
      $region87: #{pixelcnn_forward.1} parent=83 // pred_region
        %p2862 = scmp.lt.s32.totalorder %s28, 1
        %s2863 = scalar_select %p2862, %s28, 1
        %s2864 = smul.addr %s2863, 2
        %s2865 = scalar_lea.vmem %s14, %s2864
      $region88: #{pixelcnn_forward.1} parent=83 // pred_fallthru
        _
    $region84: #{pixelcnn_forward.1} parent=5 // pred_fallthru
      _
  $region6: #{pixelcnn_forward.1} parent=0 // loop_footer
    %s26 = sadd.s32 1, %s22
  $region7: #{pixelcnn_forward.1} parent=0 // loop_footer_branch
    %21 = sbr.rel target = $region3
  $region8: #{pixelcnn_forward.1} parent=0 // loop_exit
    _

</llo_original>
